<compile_context>
chip_gen: v5e
topology: v5e:2x2
jax: 0.10.0
libtpu: 0.0.40
codegen_flags: <defaults>
</compile_context>

<pallas_src>
import jax
import jax.numpy as jnp
from jax.experimental import pallas as pl
from jax.experimental.pallas import tpu as pltpu

# config.channels / config.recognize_length chosen so output length == 10,
# matching the module's declared output_size (1, 32, 10):
#   640 --conv(41,s4)--> 150 --conv(31,s3)--> 40 --conv(21,s2)--> 10
CHANNELS = 1
RECOGNIZE_LENGTH = 640
BN_EPS = 1e-5

# Layer geometry
L0 = RECOGNIZE_LENGTH
K1, S1, C1 = 41, 4, 8
L1 = (L0 - K1) // S1 + 1            # 150
K2, S2, C2 = 31, 3, 16
L2 = (L1 - K2) // S2 + 1            # 40
K3, S3, C3 = 21, 2, 32
L3 = (L2 - K3) // S3 + 1            # 10
OUT_WIDTH = C3 * L3                 # 320
OUT_PAD = 384                       # 3*128 lane-dense output (wrapper slices back)

# Activation widths (position-major, channel-minor columns), lane-padded
W1_RAW = L1 * C1                    # 1200
W1_PAD = 1280                       # 10*128
W2_RAW = L2 * C2                    # 640  (already 5*128)

# Conv group tiling: one translation-invariant compact weight slab per layer,
# reused for every group of G consecutive output positions.
G1 = 30                             # 5 groups of 30 outputs
NG1 = L1 // G1                      # 5
SPAN1 = S1 * (G1 - 1) + K1          # 157 input positions per group
G2 = 10                             # 4 groups of 10 outputs
NG2 = L2 // G2                      # 4
SPAN2 = S2 * (G2 - 1) + K2          # 58 input positions per group


# ---------------------------------------------------------------------------
# Fused Pallas kernel: conv1+bn1+relu -> conv2+bn2+relu -> conv3+tanh
# ---------------------------------------------------------------------------
def _encoder_kernel(x_ref, w1_ref, w2_ref, w3_ref, pp_ref, o_ref):
    f32, bf16 = jnp.float32, jnp.bfloat16

    x = x_ref[...]                              # (B, 640)  f32
    pp = pp_ref[...]                            # (8, 384)  f32 packed params
    bsz = x.shape[0]

    def make_rt(cout, width, valid):
        # rt[c, col] = 1.0 iff (col % cout == c) and col < valid.
        # Built in-kernel from iota compares: no HBM traffic, values exact.
        c = jax.lax.broadcasted_iota(jnp.int32, (cout, width), 0)
        col = jax.lax.broadcasted_iota(jnp.int32, (cout, width), 1)
        return jnp.where((col % cout == c) & (col < valid), 1.0, 0.0).astype(f32)

    def conv_grouped(h, w_ref, n_groups, in_step, in_span, out_step, pad_to):
        # Translation-invariant conv: the SAME (in_span, out_step) weight slab
        # maps a contiguous lane-slice of the input activation to a contiguous
        # block of output columns, for every group of output positions.
        w = w_ref[...]                                                # bf16
        blocks = [
            jnp.dot(h[:, g * in_step: g * in_step + in_span].astype(bf16), w,
                    preferred_element_type=f32)
            for g in range(n_groups)
        ]
        if pad_to > n_groups * out_step:                              # lane pad
            blocks.append(jnp.zeros((bsz, pad_to - n_groups * out_step), f32))
        return jnp.concatenate(blocks, axis=1)

    def bn_relu(h, rt, cout, lout, g_row, b_row):
        # Training-mode BatchNorm1d (biased variance, eps=1e-5) + ReLU, with
        # stacked stat/expansion matmuls and the bf16 downcast fused in.
        inv_n = 1.0 / float(bsz * lout)
        stats = jnp.concatenate(
            [jnp.sum(h, axis=0, keepdims=True),
             jnp.sum(h * h, axis=0, keepdims=True)], axis=0)          # (2, W)
        stats_c = jax.lax.dot_general(                                # NT matmul
            stats, rt, (((1,), (1,)), ((), ())),
            preferred_element_type=f32) * inv_n                        # (2, cout)
        mean_c = stats_c[0:1]
        # clamp guards E[x^2]-m^2 cancellation from going negative before eps
        var_c = jnp.maximum(stats_c[1:2] - mean_c * mean_c, 0.0)
        inv_c = jax.lax.rsqrt(var_c + BN_EPS)
        scale_c = pp[g_row:g_row + 1, :cout] * inv_c
        shift_c = pp[b_row:b_row + 1, :cout] - mean_c * scale_c
        ssw = jnp.dot(jnp.concatenate([scale_c, shift_c], axis=0), rt,
                      preferred_element_type=f32)                      # (2, W)
        return jnp.maximum(h * ssw[0:1] + ssw[1:2], 0.0).astype(bf16)

    rt1 = make_rt(C1, W1_PAD, W1_RAW)           # (8, 1280)
    rt2 = make_rt(C2, W2_RAW, W2_RAW)           # (16, 640)

    # ---- layer 1: Conv1d(1->8, k=41, s=4) [bias cancels in BN] + BN + ReLU --
    h = conv_grouped(x, w1_ref, NG1, S1 * G1 * CHANNELS,
                     SPAN1 * CHANNELS, G1 * C1, W1_PAD)                # (B,1280)
    h = bn_relu(h, rt1, C1, L1, 0, 1)

    # ---- layer 2: Conv1d(8->16, k=31, s=3) [bias cancels in BN] + BN + ReLU -
    h = conv_grouped(h, w2_ref, NG2, S2 * G2 * C1,
                     SPAN2 * C1, G2 * C2, W2_RAW)                      # (B, 640)
    h = bn_relu(h, rt2, C2, L2, 2, 3)

    # ---- layer 3: Conv1d(16->32, k=21, s=2) + bias + Tanh -------------------
    # Banded W3 emits columns directly in PyTorch channel-major flatten order
    # (cols 320..383 are zero padding, sliced off in the wrapper).
    h = jnp.dot(h, w3_ref[...], preferred_element_type=f32) + pp[4:5, :]
    o_ref[...] = jnp.tanh(h).astype(o_ref.dtype)                       # (B, 384)


def _full_spec(shape):
    nd = len(shape)
    return pl.BlockSpec(shape, lambda i, _nd=nd: (0,) * _nd)


# ---------------------------------------------------------------------------
# Parameter preparation (layout transforms only; done once, outside the jit)
# ---------------------------------------------------------------------------
def _conv_group_weight(w, stride, group):
    """Compact translation-invariant group weight for a valid strided Conv1d.

    Returns (span*cin, group*cout) with
      Wg[r*cin + ci, u*cout + co] = w[co, ci, r - stride*u]  (0 if tap invalid)
    so that  out[:, g*group + u, co] = in_slice_g @ Wg  for every group g,
    where in_slice_g covers input positions [stride*g*group, +span).
    """
    cout, cin, k = w.shape
    span = stride * (group - 1) + k
    taps = jnp.arange(span)[:, None] - stride * jnp.arange(group)[None, :]
    valid = (taps >= 0) & (taps < k)
    wt = jnp.transpose(w.astype(jnp.float32), (2, 1, 0))       # (k, cin, cout)
    gathered = wt[jnp.clip(taps, 0, k - 1)]                    # (span, group, cin, cout)
    gathered = jnp.where(valid[:, :, None, None], gathered, 0.0)
    full = jnp.transpose(gathered, (0, 2, 1, 3))               # (span, cin, group, cout)
    return full.reshape(span * cin, group * cout)


def _conv_as_dense_chmajor(w, lin, stride):
    """Conv1d as a dense (lin*cin, cout*lout) matmul, channel-major output cols."""
    cout, cin, k = w.shape
    lout = (lin - k) // stride + 1
    t_in = jnp.arange(lin)
    t_out = jnp.arange(lout)
    taps = jnp.arange(k)
    mask = (t_in[None, :, None] ==
            stride * t_out[None, None, :] + taps[:, None, None]).astype(jnp.float32)
    full = jnp.einsum('kio,cak->iaco', mask, w.astype(jnp.float32))
    return full.reshape(lin * cin, cout * lout)                # col = co*lout + t


def init_params(key):
    # Deterministic synthetic init, PyTorch-conv-like uniform bounds.
    def u(k, shape, fan_in):
        bound = 1.0 / jnp.sqrt(jnp.float32(fan_in))
        return jax.random.uniform(k, shape, jnp.float32, -bound, bound)

    ks = jax.random.split(key, 10)
    p = {}
    p["w1"] = u(ks[0], (C1, CHANNELS, K1), CHANNELS * K1)
    p["b1"] = u(ks[1], (C1,), CHANNELS * K1)
    p["g1"] = 1.0 + 0.1 * jax.random.normal(ks[2], (C1,), jnp.float32)
    p["be1"] = 0.1 * jax.random.normal(ks[3], (C1,), jnp.float32)
    p["w2"] = u(ks[4], (C2, C1, K2), C1 * K2)
    p["b2"] = u(ks[5], (C2,), C1 * K2)
    p["g2"] = 1.0 + 0.1 * jax.random.normal(ks[6], (C2,), jnp.float32)
    p["be2"] = 0.1 * jax.random.normal(ks[7], (C2,), jnp.float32)
    p["w3"] = u(ks[8], (C3, C2, K3), C2 * K3)
    p["b3"] = u(ks[9], (C3,), C2 * K3)
    return p


def prepare_params(p):
    w1g = _conv_group_weight(p["w1"], S1, G1)                  # (157, 240)
    w2g = _conv_group_weight(p["w2"], S2, G2)                  # (464, 160)
    w3f = _conv_as_dense_chmajor(p["w3"], L2, S3)              # (640, 320)
    w3f = jnp.pad(w3f, ((0, 0), (0, OUT_PAD - OUT_WIDTH)))     # (640, 384)

    # NOTE: conv biases b1/b2 are intentionally NOT packed: training-mode BN's
    # mean subtraction cancels any additive pre-BN bias exactly.
    b3_full = jnp.pad(jnp.repeat(p["b3"], L3), (0, OUT_PAD - OUT_WIDTH))
    pp = jnp.zeros((8, OUT_PAD), jnp.float32)
    pp = pp.at[0, :C1].set(p["g1"]).at[1, :C1].set(p["be1"])
    pp = pp.at[2, :C2].set(p["g2"]).at[3, :C2].set(p["be2"])
    pp = pp.at[4, :].set(b3_full)

    return {"w1g": w1g.astype(jnp.bfloat16),
            "w2g": w2g.astype(jnp.bfloat16),
            "w3": w3f.astype(jnp.bfloat16),
            "pp": pp}


# ---------------------------------------------------------------------------
# Forward pass == KikitoriEncoder.forward (single fused pallas_call)
# ---------------------------------------------------------------------------
def kikitori_encoder_forward(x, prep):
    x = x.reshape(-1, CHANNELS, RECOGNIZE_LENGTH)              # x.view(insize)
    bsz = x.shape[0]
    # position-major / channel-minor flattening (trivial for CHANNELS == 1)
    x2 = jnp.transpose(x, (0, 2, 1)).reshape(bsz, RECOGNIZE_LENGTH * CHANNELS)
    x2 = x2.astype(jnp.float32)

    operands = (x2, prep["w1g"], prep["w2g"], prep["w3"], prep["pp"])

    out = pl.pallas_call(
        _encoder_kernel,
        grid=(1,),
        in_specs=[_full_spec(a.shape) for a in operands],
        out_specs=_full_spec((bsz, OUT_PAD)),
        out_shape=jax.ShapeDtypeStruct((bsz, OUT_PAD), jnp.float32),
        compiler_params=pltpu.CompilerParams(
            dimension_semantics=("arbitrary",),
            vmem_limit_bytes=32 * 1024 * 1024),
    )(*operands)
    return out[:, :OUT_WIDTH]                                  # == x.view(xlen, -1)


# ---------------------------------------------------------------------------
# Pure-JAX reference (f32 throughout, uses the biases that the kernel drops)
# ---------------------------------------------------------------------------
def _reference_forward(x, p):
    x = x.reshape(-1, CHANNELS, RECOGNIZE_LENGTH).astype(jnp.float32)

    def conv1d(h, w, b, stride):
        out = jax.lax.conv_general_dilated(
            h, w, window_strides=(stride,), padding="VALID",
            dimension_numbers=("NCH", "OIH", "NCH"))
        return out + b[None, :, None]

    def bn(h, g, b):
        mean = jnp.mean(h, axis=(0, 2), keepdims=True)
        var = jnp.mean((h - mean) ** 2, axis=(0, 2), keepdims=True)  # biased
        return (h - mean) * jax.lax.rsqrt(var + BN_EPS) * g[None, :, None] + b[None, :, None]

    h = jnp.maximum(bn(conv1d(x, p["w1"], p["b1"], S1), p["g1"], p["be1"]), 0.0)
    h = jnp.maximum(bn(conv1d(h, p["w2"], p["b2"], S2), p["g2"], p["be2"]), 0.0)
    h = jnp.tanh(conv1d(h, p["w3"], p["b3"], S3))
    return h.reshape(h.shape[0], -1)


if __name__ == "__main__":
    key = jax.random.PRNGKey(0)
    pkey, xkey = jax.random.split(key)
    raw_params = init_params(pkey)
    prep = prepare_params(raw_params)

    x = jax.random.normal(xkey, (2, CHANNELS, RECOGNIZE_LENGTH), jnp.float32)

    fwd = jax.jit(kikitori_encoder_forward)
    out = jax.block_until_ready(fwd(x, prep))

    assert out.shape == (2, OUT_WIDTH), out.shape
    assert bool(jnp.all(jnp.isfinite(out)))

    ref = jax.block_until_ready(_reference_forward(x, raw_params))
    err = float(jnp.max(jnp.abs(out - ref)))
    assert err < 0.08, f"max|out-ref| = {err}"     # bf16 weights/activations
    print("KERNEL_OK")
</pallas_src>

<mosaic_0001>
module attributes {stable_mosaic.version = 11 : i64} {
  func.func @_encoder_kernel(%arg0: i32, %arg1: memref<2x640xf32, #tpu.memory_space<vmem>>, %arg2: memref<157x240xbf16, #tpu.memory_space<vmem>>, %arg3: memref<464x160xbf16, #tpu.memory_space<vmem>>, %arg4: memref<640x384xbf16, #tpu.memory_space<vmem>>, %arg5: memref<8x384xf32, #tpu.memory_space<vmem>>, %arg6: memref<2x384xf32, #tpu.memory_space<vmem>>) attributes {dimension_semantics = [#tpu.dimension_semantics<arbitrary>], iteration_bounds = array<i64: 1>, scalar_prefetch = 0 : i64, scratch_operands = 0 : i64, tpu.core_type = #tpu.core_type<tc>, window_params = [{pipeline_mode = #tpu.pipeline_mode<synchronous>, transform_indices = @transform_0, window_bounds = array<i64: 2, 640>}, {pipeline_mode = #tpu.pipeline_mode<synchronous>, transform_indices = @transform_1, window_bounds = array<i64: 157, 240>}, {pipeline_mode = #tpu.pipeline_mode<synchronous>, transform_indices = @transform_2, window_bounds = array<i64: 464, 160>}, {pipeline_mode = #tpu.pipeline_mode<synchronous>, transform_indices = @transform_3, window_bounds = array<i64: 640, 384>}, {pipeline_mode = #tpu.pipeline_mode<synchronous>, transform_indices = @transform_4, window_bounds = array<i64: 8, 384>}, {pipeline_mode = #tpu.pipeline_mode<synchronous>, transform_indices = @transform_5, window_bounds = array<i64: 2, 384>}]} {
    %c0 = arith.constant 0 : index
    %c0_0 = arith.constant 0 : index
    %0 = vector.load %arg1[%c0, %c0_0] : memref<2x640xf32, #tpu.memory_space<vmem>>, vector<2x640xf32>
    %c0_1 = arith.constant 0 : index
    %c0_2 = arith.constant 0 : index
    %1 = vector.load %arg5[%c0_1, %c0_2] : memref<8x384xf32, #tpu.memory_space<vmem>>, vector<8x384xf32>
    %2 = tpu.iota {dimensions = array<i32: 0>} : vector<8x1280xi32>
    %3 = tpu.iota {dimensions = array<i32: 1>} : vector<8x1280xi32>
    %c8_i32 = arith.constant 8 : i32
    %c0_i32 = arith.constant 0 : i32
    %4 = arith.cmpi eq, %c8_i32, %c0_i32 : i32
    %c1_i32 = arith.constant 1 : i32
    %5 = arith.select %4, %c1_i32, %c8_i32 : i32
    %6 = vector.broadcast %5 : i32 to vector<8x1280xi32>
    %7 = arith.remsi %3, %6 : vector<8x1280xi32>
    %c0_i32_3 = arith.constant 0 : i32
    %8 = vector.broadcast %c0_i32_3 : i32 to vector<8x1280xi32>
    %9 = arith.cmpi ne, %7, %8 : vector<8x1280xi32>
    %c0_i32_4 = arith.constant 0 : i32
    %10 = vector.broadcast %c0_i32_4 : i32 to vector<8x1280xi32>
    %11 = arith.cmpi slt, %7, %10 : vector<8x1280xi32>
    %c0_i32_5 = arith.constant 0 : i32
    %12 = arith.cmpi slt, %5, %c0_i32_5 : i32
    %13 = vector.broadcast %12 : i1 to vector<8x1280xi1>
    %14 = vector.broadcast %13 : vector<8x1280xi1> to vector<8x1280xi1>
    %15 = arith.xori %11, %14 : vector<8x1280xi1>
    %16 = arith.andi %15, %9 : vector<8x1280xi1>
    %17 = vector.broadcast %5 : i32 to vector<8x1280xi32>
    %18 = arith.addi %7, %17 : vector<8x1280xi32>
    %19 = arith.select %16, %18, %7 : vector<8x1280xi1>, vector<8x1280xi32>
    %20 = arith.cmpi eq, %19, %2 : vector<8x1280xi32>
    %c1200_i32 = arith.constant 1200 : i32
    %21 = vector.broadcast %c1200_i32 : i32 to vector<8x1280xi32>
    %22 = arith.cmpi slt, %3, %21 : vector<8x1280xi32>
    %23 = arith.andi %20, %22 : vector<8x1280xi1>
    %cst = arith.constant 1.000000e+00 : f32
    %cst_6 = arith.constant 0.000000e+00 : f32
    %24 = vector.broadcast %cst : f32 to vector<8x1280xf32>
    %25 = vector.broadcast %cst_6 : f32 to vector<8x1280xf32>
    %26 = arith.select %23, %24, %25 : vector<8x1280xi1>, vector<8x1280xf32>
    %27 = tpu.iota {dimensions = array<i32: 0>} : vector<16x640xi32>
    %28 = tpu.iota {dimensions = array<i32: 1>} : vector<16x640xi32>
    %c16_i32 = arith.constant 16 : i32
    %c0_i32_7 = arith.constant 0 : i32
    %29 = arith.cmpi eq, %c16_i32, %c0_i32_7 : i32
    %c1_i32_8 = arith.constant 1 : i32
    %30 = arith.select %29, %c1_i32_8, %c16_i32 : i32
    %31 = vector.broadcast %30 : i32 to vector<16x640xi32>
    %32 = arith.remsi %28, %31 : vector<16x640xi32>
    %c0_i32_9 = arith.constant 0 : i32
    %33 = vector.broadcast %c0_i32_9 : i32 to vector<16x640xi32>
    %34 = arith.cmpi ne, %32, %33 : vector<16x640xi32>
    %c0_i32_10 = arith.constant 0 : i32
    %35 = vector.broadcast %c0_i32_10 : i32 to vector<16x640xi32>
    %36 = arith.cmpi slt, %32, %35 : vector<16x640xi32>
    %c0_i32_11 = arith.constant 0 : i32
    %37 = arith.cmpi slt, %30, %c0_i32_11 : i32
    %38 = vector.broadcast %37 : i1 to vector<16x640xi1>
    %39 = vector.broadcast %38 : vector<16x640xi1> to vector<16x640xi1>
    %40 = arith.xori %36, %39 : vector<16x640xi1>
    %41 = arith.andi %40, %34 : vector<16x640xi1>
    %42 = vector.broadcast %30 : i32 to vector<16x640xi32>
    %43 = arith.addi %32, %42 : vector<16x640xi32>
    %44 = arith.select %41, %43, %32 : vector<16x640xi1>, vector<16x640xi32>
    %45 = arith.cmpi eq, %44, %27 : vector<16x640xi32>
    %c640_i32 = arith.constant 640 : i32
    %46 = vector.broadcast %c640_i32 : i32 to vector<16x640xi32>
    %47 = arith.cmpi slt, %28, %46 : vector<16x640xi32>
    %48 = arith.andi %45, %47 : vector<16x640xi1>
    %cst_12 = arith.constant 1.000000e+00 : f32
    %cst_13 = arith.constant 0.000000e+00 : f32
    %49 = vector.broadcast %cst_12 : f32 to vector<16x640xf32>
    %50 = vector.broadcast %cst_13 : f32 to vector<16x640xf32>
    %51 = arith.select %48, %49, %50 : vector<16x640xi1>, vector<16x640xf32>
    %c0_14 = arith.constant 0 : index
    %c0_15 = arith.constant 0 : index
    %52 = vector.load %arg2[%c0_14, %c0_15] : memref<157x240xbf16, #tpu.memory_space<vmem>>, vector<157x240xbf16>
    %53 = vector.extract_strided_slice %0 {offsets = [0, 0], sizes = [2, 157], strides = [1, 1]} : vector<2x640xf32> to vector<2x157xf32>
    %54 = arith.truncf %53 : vector<2x157xf32> to vector<2x157xbf16>
    %cst_16 = arith.constant dense<0.000000e+00> : vector<2x240xf32>
    %55 = tpu.matmul %54, %52, %cst_16 {dimension_numbers = #tpu.dot_dimension_numbers<[1], [0], [0], [1], [0, 0, 1, 1], [], []>} : vector<2x157xbf16>, vector<157x240xbf16>, vector<2x240xf32> -> vector<2x240xf32>
    %56 = vector.extract_strided_slice %0 {offsets = [0, 120], sizes = [2, 157], strides = [1, 1]} : vector<2x640xf32> to vector<2x157xf32>
    %57 = arith.truncf %56 : vector<2x157xf32> to vector<2x157xbf16>
    %cst_17 = arith.constant dense<0.000000e+00> : vector<2x240xf32>
    %58 = tpu.matmul %57, %52, %cst_17 {dimension_numbers = #tpu.dot_dimension_numbers<[1], [0], [0], [1], [0, 0, 1, 1], [], []>} : vector<2x157xbf16>, vector<157x240xbf16>, vector<2x240xf32> -> vector<2x240xf32>
    %59 = vector.extract_strided_slice %0 {offsets = [0, 240], sizes = [2, 157], strides = [1, 1]} : vector<2x640xf32> to vector<2x157xf32>
    %60 = arith.truncf %59 : vector<2x157xf32> to vector<2x157xbf16>
    %cst_18 = arith.constant dense<0.000000e+00> : vector<2x240xf32>
    %61 = tpu.matmul %60, %52, %cst_18 {dimension_numbers = #tpu.dot_dimension_numbers<[1], [0], [0], [1], [0, 0, 1, 1], [], []>} : vector<2x157xbf16>, vector<157x240xbf16>, vector<2x240xf32> -> vector<2x240xf32>
    %62 = vector.extract_strided_slice %0 {offsets = [0, 360], sizes = [2, 157], strides = [1, 1]} : vector<2x640xf32> to vector<2x157xf32>
    %63 = arith.truncf %62 : vector<2x157xf32> to vector<2x157xbf16>
    %cst_19 = arith.constant dense<0.000000e+00> : vector<2x240xf32>
    %64 = tpu.matmul %63, %52, %cst_19 {dimension_numbers = #tpu.dot_dimension_numbers<[1], [0], [0], [1], [0, 0, 1, 1], [], []>} : vector<2x157xbf16>, vector<157x240xbf16>, vector<2x240xf32> -> vector<2x240xf32>
    %65 = vector.extract_strided_slice %0 {offsets = [0, 480], sizes = [2, 157], strides = [1, 1]} : vector<2x640xf32> to vector<2x157xf32>
    %66 = arith.truncf %65 : vector<2x157xf32> to vector<2x157xbf16>
    %cst_20 = arith.constant dense<0.000000e+00> : vector<2x240xf32>
    %67 = tpu.matmul %66, %52, %cst_20 {dimension_numbers = #tpu.dot_dimension_numbers<[1], [0], [0], [1], [0, 0, 1, 1], [], []>} : vector<2x157xbf16>, vector<157x240xbf16>, vector<2x240xf32> -> vector<2x240xf32>
    %cst_21 = arith.constant 0.000000e+00 : f32
    %68 = vector.broadcast %cst_21 : f32 to vector<2x80xf32>
    %69 = tpu.concatenate %55, %58, %61, %64, %67, %68 in 1 : vector<2x240xf32>, vector<2x240xf32>, vector<2x240xf32>, vector<2x240xf32>, vector<2x240xf32>, vector<2x80xf32> -> vector<2x1280xf32>
    %cst_22 = arith.constant dense<0.000000e+00> : vector<1280xf32>
    %70 = vector.multi_reduction <add>, %69, %cst_22 [0] : vector<2x1280xf32> to vector<1280xf32>
    %71 = vector.shape_cast %70 : vector<1280xf32> to vector<1x1280xf32>
    %72 = arith.mulf %69, %69 : vector<2x1280xf32>
    %cst_23 = arith.constant dense<0.000000e+00> : vector<1280xf32>
    %73 = vector.multi_reduction <add>, %72, %cst_23 [0] : vector<2x1280xf32> to vector<1280xf32>
    %74 = vector.shape_cast %73 : vector<1280xf32> to vector<1x1280xf32>
    %75 = tpu.concatenate %71, %74 in 0 : vector<1x1280xf32>, vector<1x1280xf32> -> vector<2x1280xf32>
    %cst_24 = arith.constant dense<0.000000e+00> : vector<2x8xf32>
    %76 = tpu.matmul %75, %26, %cst_24 {dimension_numbers = #tpu.dot_dimension_numbers<[1], [1], [0], [0], [0, 0, 1, 0], [], []>} : vector<2x1280xf32>, vector<8x1280xf32>, vector<2x8xf32> -> vector<2x8xf32>
    %cst_25 = arith.constant 0.00333333341 : f32
    %77 = vector.broadcast %cst_25 : f32 to vector<2x8xf32>
    %78 = arith.mulf %76, %77 : vector<2x8xf32>
    %79 = vector.extract_strided_slice %78 {offsets = [0, 0], sizes = [1, 8], strides = [1, 1]} : vector<2x8xf32> to vector<1x8xf32>
    %80 = vector.extract_strided_slice %78 {offsets = [1, 0], sizes = [1, 8], strides = [1, 1]} : vector<2x8xf32> to vector<1x8xf32>
    %81 = arith.mulf %79, %79 : vector<1x8xf32>
    %82 = arith.subf %80, %81 : vector<1x8xf32>
    %cst_26 = arith.constant 0.000000e+00 : f32
    %83 = vector.broadcast %cst_26 : f32 to vector<1x8xf32>
    %84 = arith.maximumf %82, %83 : vector<1x8xf32>
    %cst_27 = arith.constant 9.99999974E-6 : f32
    %85 = vector.broadcast %cst_27 : f32 to vector<1x8xf32>
    %86 = arith.addf %84, %85 : vector<1x8xf32>
    %87 = math.rsqrt %86 : vector<1x8xf32>
    %88 = vector.extract_strided_slice %1 {offsets = [0, 0], sizes = [1, 8], strides = [1, 1]} : vector<8x384xf32> to vector<1x8xf32>
    %89 = arith.mulf %88, %87 : vector<1x8xf32>
    %90 = vector.extract_strided_slice %1 {offsets = [1, 0], sizes = [1, 8], strides = [1, 1]} : vector<8x384xf32> to vector<1x8xf32>
    %91 = arith.mulf %79, %89 : vector<1x8xf32>
    %92 = arith.subf %90, %91 : vector<1x8xf32>
    %93 = tpu.concatenate %89, %92 in 0 : vector<1x8xf32>, vector<1x8xf32> -> vector<2x8xf32>
    %cst_28 = arith.constant dense<0.000000e+00> : vector<2x1280xf32>
    %94 = tpu.matmul %93, %26, %cst_28 {dimension_numbers = #tpu.dot_dimension_numbers<[1], [0], [0], [1], [0, 0, 1, 1], [], []>} : vector<2x8xf32>, vector<8x1280xf32>, vector<2x1280xf32> -> vector<2x1280xf32>
    %95 = vector.extract_strided_slice %94 {offsets = [0, 0], sizes = [1, 1280], strides = [1, 1]} : vector<2x1280xf32> to vector<1x1280xf32>
    %96 = vector.broadcast %95 : vector<1x1280xf32> to vector<2x1280xf32>
    %97 = arith.mulf %69, %96 : vector<2x1280xf32>
    %98 = vector.extract_strided_slice %94 {offsets = [1, 0], sizes = [1, 1280], strides = [1, 1]} : vector<2x1280xf32> to vector<1x1280xf32>
    %99 = vector.broadcast %98 : vector<1x1280xf32> to vector<2x1280xf32>
    %100 = arith.addf %97, %99 : vector<2x1280xf32>
    %cst_29 = arith.constant 0.000000e+00 : f32
    %101 = vector.broadcast %cst_29 : f32 to vector<2x1280xf32>
    %102 = arith.maximumf %100, %101 : vector<2x1280xf32>
    %103 = arith.truncf %102 : vector<2x1280xf32> to vector<2x1280xbf16>
    %c0_30 = arith.constant 0 : index
    %c0_31 = arith.constant 0 : index
    %104 = vector.load %arg3[%c0_30, %c0_31] : memref<464x160xbf16, #tpu.memory_space<vmem>>, vector<464x160xbf16>
    %105 = vector.extract_strided_slice %103 {offsets = [0, 0], sizes = [2, 464], strides = [1, 1]} : vector<2x1280xbf16> to vector<2x464xbf16>
    %cst_32 = arith.constant dense<0.000000e+00> : vector<2x160xf32>
    %106 = tpu.matmul %105, %104, %cst_32 {dimension_numbers = #tpu.dot_dimension_numbers<[1], [0], [0], [1], [0, 0, 1, 1], [], []>} : vector<2x464xbf16>, vector<464x160xbf16>, vector<2x160xf32> -> vector<2x160xf32>
    %107 = vector.extract_strided_slice %103 {offsets = [0, 240], sizes = [2, 464], strides = [1, 1]} : vector<2x1280xbf16> to vector<2x464xbf16>
    %cst_33 = arith.constant dense<0.000000e+00> : vector<2x160xf32>
    %108 = tpu.matmul %107, %104, %cst_33 {dimension_numbers = #tpu.dot_dimension_numbers<[1], [0], [0], [1], [0, 0, 1, 1], [], []>} : vector<2x464xbf16>, vector<464x160xbf16>, vector<2x160xf32> -> vector<2x160xf32>
    %109 = vector.extract_strided_slice %103 {offsets = [0, 480], sizes = [2, 464], strides = [1, 1]} : vector<2x1280xbf16> to vector<2x464xbf16>
    %cst_34 = arith.constant dense<0.000000e+00> : vector<2x160xf32>
    %110 = tpu.matmul %109, %104, %cst_34 {dimension_numbers = #tpu.dot_dimension_numbers<[1], [0], [0], [1], [0, 0, 1, 1], [], []>} : vector<2x464xbf16>, vector<464x160xbf16>, vector<2x160xf32> -> vector<2x160xf32>
    %111 = vector.extract_strided_slice %103 {offsets = [0, 720], sizes = [2, 464], strides = [1, 1]} : vector<2x1280xbf16> to vector<2x464xbf16>
    %cst_35 = arith.constant dense<0.000000e+00> : vector<2x160xf32>
    %112 = tpu.matmul %111, %104, %cst_35 {dimension_numbers = #tpu.dot_dimension_numbers<[1], [0], [0], [1], [0, 0, 1, 1], [], []>} : vector<2x464xbf16>, vector<464x160xbf16>, vector<2x160xf32> -> vector<2x160xf32>
    %113 = tpu.concatenate %106, %108, %110, %112 in 1 : vector<2x160xf32>, vector<2x160xf32>, vector<2x160xf32>, vector<2x160xf32> -> vector<2x640xf32>
    %cst_36 = arith.constant dense<0.000000e+00> : vector<640xf32>
    %114 = vector.multi_reduction <add>, %113, %cst_36 [0] : vector<2x640xf32> to vector<640xf32>
    %115 = vector.shape_cast %114 : vector<640xf32> to vector<1x640xf32>
    %116 = arith.mulf %113, %113 : vector<2x640xf32>
    %cst_37 = arith.constant dense<0.000000e+00> : vector<640xf32>
    %117 = vector.multi_reduction <add>, %116, %cst_37 [0] : vector<2x640xf32> to vector<640xf32>
    %118 = vector.shape_cast %117 : vector<640xf32> to vector<1x640xf32>
    %119 = tpu.concatenate %115, %118 in 0 : vector<1x640xf32>, vector<1x640xf32> -> vector<2x640xf32>
    %cst_38 = arith.constant dense<0.000000e+00> : vector<2x16xf32>
    %120 = tpu.matmul %119, %51, %cst_38 {dimension_numbers = #tpu.dot_dimension_numbers<[1], [1], [0], [0], [0, 0, 1, 0], [], []>} : vector<2x640xf32>, vector<16x640xf32>, vector<2x16xf32> -> vector<2x16xf32>
    %cst_39 = arith.constant 1.250000e-02 : f32
    %121 = vector.broadcast %cst_39 : f32 to vector<2x16xf32>
    %122 = arith.mulf %120, %121 : vector<2x16xf32>
    %123 = vector.extract_strided_slice %122 {offsets = [0, 0], sizes = [1, 16], strides = [1, 1]} : vector<2x16xf32> to vector<1x16xf32>
    %124 = vector.extract_strided_slice %122 {offsets = [1, 0], sizes = [1, 16], strides = [1, 1]} : vector<2x16xf32> to vector<1x16xf32>
    %125 = arith.mulf %123, %123 : vector<1x16xf32>
    %126 = arith.subf %124, %125 : vector<1x16xf32>
    %cst_40 = arith.constant 0.000000e+00 : f32
    %127 = vector.broadcast %cst_40 : f32 to vector<1x16xf32>
    %128 = arith.maximumf %126, %127 : vector<1x16xf32>
    %cst_41 = arith.constant 9.99999974E-6 : f32
    %129 = vector.broadcast %cst_41 : f32 to vector<1x16xf32>
    %130 = arith.addf %128, %129 : vector<1x16xf32>
    %131 = math.rsqrt %130 : vector<1x16xf32>
    %132 = vector.extract_strided_slice %1 {offsets = [2, 0], sizes = [1, 16], strides = [1, 1]} : vector<8x384xf32> to vector<1x16xf32>
    %133 = arith.mulf %132, %131 : vector<1x16xf32>
    %134 = vector.extract_strided_slice %1 {offsets = [3, 0], sizes = [1, 16], strides = [1, 1]} : vector<8x384xf32> to vector<1x16xf32>
    %135 = arith.mulf %123, %133 : vector<1x16xf32>
    %136 = arith.subf %134, %135 : vector<1x16xf32>
    %137 = tpu.concatenate %133, %136 in 0 : vector<1x16xf32>, vector<1x16xf32> -> vector<2x16xf32>
    %cst_42 = arith.constant dense<0.000000e+00> : vector<2x640xf32>
    %138 = tpu.matmul %137, %51, %cst_42 {dimension_numbers = #tpu.dot_dimension_numbers<[1], [0], [0], [1], [0, 0, 1, 1], [], []>} : vector<2x16xf32>, vector<16x640xf32>, vector<2x640xf32> -> vector<2x640xf32>
    %139 = vector.extract_strided_slice %138 {offsets = [0, 0], sizes = [1, 640], strides = [1, 1]} : vector<2x640xf32> to vector<1x640xf32>
    %140 = vector.broadcast %139 : vector<1x640xf32> to vector<2x640xf32>
    %141 = arith.mulf %113, %140 : vector<2x640xf32>
    %142 = vector.extract_strided_slice %138 {offsets = [1, 0], sizes = [1, 640], strides = [1, 1]} : vector<2x640xf32> to vector<1x640xf32>
    %143 = vector.broadcast %142 : vector<1x640xf32> to vector<2x640xf32>
    %144 = arith.addf %141, %143 : vector<2x640xf32>
    %cst_43 = arith.constant 0.000000e+00 : f32
    %145 = vector.broadcast %cst_43 : f32 to vector<2x640xf32>
    %146 = arith.maximumf %144, %145 : vector<2x640xf32>
    %147 = arith.truncf %146 : vector<2x640xf32> to vector<2x640xbf16>
    %c0_44 = arith.constant 0 : index
    %c0_45 = arith.constant 0 : index
    %148 = vector.load %arg4[%c0_44, %c0_45] : memref<640x384xbf16, #tpu.memory_space<vmem>>, vector<640x384xbf16>
    %cst_46 = arith.constant dense<0.000000e+00> : vector<2x384xf32>
    %149 = tpu.matmul %147, %148, %cst_46 {dimension_numbers = #tpu.dot_dimension_numbers<[1], [0], [0], [1], [0, 0, 1, 1], [], []>} : vector<2x640xbf16>, vector<640x384xbf16>, vector<2x384xf32> -> vector<2x384xf32>
    %150 = vector.extract_strided_slice %1 {offsets = [4, 0], sizes = [1, 384], strides = [1, 1]} : vector<8x384xf32> to vector<1x384xf32>
    %151 = vector.broadcast %150 : vector<1x384xf32> to vector<2x384xf32>
    %152 = arith.addf %149, %151 : vector<2x384xf32>
    %153 = math.tanh %152 : vector<2x384xf32>
    %c0_47 = arith.constant 0 : index
    %c0_48 = arith.constant 0 : index
    %154 = vector.load %arg6[%c0_47, %c0_48] : memref<2x384xf32, #tpu.memory_space<vmem>>, vector<2x384xf32>
    tpu.vector_store %arg6[%c0_47, %c0_48], %153 {strides = array<i32>} : memref<2x384xf32, #tpu.memory_space<vmem>>, vector<2x384xf32>,
    return
  }
  func.func @transform_0(%arg0: i32) -> (i32, i32) {
    %c0_i32 = arith.constant 0 : i32
    %c0_i32_0 = arith.constant 0 : i32
    %c0_i32_1 = arith.constant 0 : i32
    return %c0_i32, %c0_i32_0 : i32, i32
  }
  func.func @transform_1(%arg0: i32) -> (i32, i32) {
    %c0_i32 = arith.constant 0 : i32
    %c0_i32_0 = arith.constant 0 : i32
    %c0_i32_1 = arith.constant 0 : i32
    return %c0_i32, %c0_i32_0 : i32, i32
  }
  func.func @transform_2(%arg0: i32) -> (i32, i32) {
    %c0_i32 = arith.constant 0 : i32
    %c0_i32_0 = arith.constant 0 : i32
    %c0_i32_1 = arith.constant 0 : i32
    return %c0_i32, %c0_i32_0 : i32, i32
  }
  func.func @transform_3(%arg0: i32) -> (i32, i32) {
    %c0_i32 = arith.constant 0 : i32
    %c0_i32_0 = arith.constant 0 : i32
    %c0_i32_1 = arith.constant 0 : i32
    return %c0_i32, %c0_i32_0 : i32, i32
  }
  func.func @transform_4(%arg0: i32) -> (i32, i32) {
    %c0_i32 = arith.constant 0 : i32
    %c0_i32_0 = arith.constant 0 : i32
    %c0_i32_1 = arith.constant 0 : i32
    return %c0_i32, %c0_i32_0 : i32, i32
  }
  func.func @transform_5(%arg0: i32) -> (i32, i32) {
    %c0_i32 = arith.constant 0 : i32
    %c0_i32_0 = arith.constant 0 : i32
    %c0_i32_1 = arith.constant 0 : i32
    return %c0_i32, %c0_i32_0 : i32, i32
  }
}

</mosaic_0001>

<llo_original>
// kernel: kikitori_encoder_forward.1
$region0: #{kikitori_encoder_forward.1}
  #allocation0 [shape = 'u32[]', space=smem, size = 0x4, offset = 0x4, fixed_abs, tag = 'smem constant byte address 0x4 - core index']
  #allocation1 [shape = 'u32[72,128]{1,0:T(1,128)}', space=vmem, size = 0x9000, scoped, tag = 'internal scratch']
  %s0 = inlined_call_operand.vmem [shape: f32[2,640], index: 0, kind: input, shape index: {}]
  %s1 = inlined_call_operand.vmem [shape: bf16[157,240], index: 1, kind: input, shape index: {}]
  %s2 = inlined_call_operand.vmem [shape: bf16[464,160], index: 2, kind: input, shape index: {}]
  %s3 = inlined_call_operand.hbm [shape: bf16[640,384], index: 3, kind: input, shape index: {}]
  %s4 = inlined_call_operand.vmem [shape: f32[8,384], index: 4, kind: input, shape index: {}]
  %s5 = inlined_call_operand.hbm [shape: f32[2,384], index: 5, kind: output, shape index: {}]
  %s6 = sld [smem:[#allocation0]]
  $region34: #{kikitori_encoder_forward.1} parent=0
    _
  %s8 = ssub.s32 1, %s6
  %s9 = scalar_select 0, %s8, %s6
  $region1: #{kikitori_encoder_forward.1} parent=0
    #allocation2 [shape = 'u8[491520]{0}', space=vmem, size = 0x78000, scoped, tag = 'input window, operand 3, single buffered']
    #allocation3 [shape = 's32[1]{0}', space=sflag, size = 0x4, scoped, tag = 'scoped memory for kikitori_encoder_forward.1']
    #allocation4 [shape = 's32[1]{0}', space=sflag, size = 0x4, scoped, tag = 'scoped memory for kikitori_encoder_forward.1']
    #allocation5 [shape = 'u8[3072]{0}', space=vmem, size = 0xc00, scoped, tag = 'output window, operand 0, single buffered']
    %10 = vsyncpa [#allocation3], 0
    %11 = vsyncpa [#allocation4], 0
    // Predicated region
    $region2: #{kikitori_encoder_forward.1} parent=1 // pred_check
      _
    $region3: #{kikitori_encoder_forward.1} parent=1 // pred_check_branch
      %13 = sbr.rel (0) target = $region5
    $region4: #{kikitori_encoder_forward.1} parent=1 // pred_region
      _
    $region5: #{kikitori_encoder_forward.1} parent=1 // pred_fallthru
      _
    // Predicated region
    $region6: #{kikitori_encoder_forward.1} parent=1 // pred_check
      _
    $region7: #{kikitori_encoder_forward.1} parent=1 // pred_check_branch
      %15 = sbr.rel (0) target = $region9
    $region8: #{kikitori_encoder_forward.1} parent=1 // pred_region
      _
    $region9: #{kikitori_encoder_forward.1} parent=1 // pred_fallthru
      _
    // Predicated region
    $region10: #{kikitori_encoder_forward.1} parent=1 // pred_check
      _
    $region11: #{kikitori_encoder_forward.1} parent=1 // pred_check_branch
      %17 = sbr.rel (0) target = $region13
    $region12: #{kikitori_encoder_forward.1} parent=1 // pred_region
      _
    $region13: #{kikitori_encoder_forward.1} parent=1 // pred_fallthru
      _
    // Predicated region
    $region14: #{kikitori_encoder_forward.1} parent=1 // pred_check
      _
    $region15: #{kikitori_encoder_forward.1} parent=1 // pred_check_branch
      %19 = sbr.rel (0) target = $region17
    $region16: #{kikitori_encoder_forward.1} parent=1 // pred_region
      %21 = vsyncadd [#allocation3], 0
      %s22 = sshll.u32 %s3, 4
      %s23 = int_to_ptr.hbm [resolvable:$true] %s22
      %s24 = sshll.u32 [#allocation2], 4
      %s25 = int_to_ptr.vmem [resolvable:$true] %s24
      %30 = dma.hbm_to_vmem [thread:$0]  %s23, 15360, %s25, [#allocation3], 192, 192, 12
    $region17: #{kikitori_encoder_forward.1} parent=1 // pred_fallthru
      _
    // Predicated region
    $region18: #{kikitori_encoder_forward.1} parent=1 // pred_check
      _
    $region19: #{kikitori_encoder_forward.1} parent=1 // pred_check_branch
      %32 = sbr.rel (0) target = $region21
    $region20: #{kikitori_encoder_forward.1} parent=1 // pred_region
      _
    $region21: #{kikitori_encoder_forward.1} parent=1 // pred_fallthru
      _
    // Predicated region
    $region22: #{kikitori_encoder_forward.1} parent=1 // pred_check
      _
    $region23: #{kikitori_encoder_forward.1} parent=1 // pred_check_branch
      %34 = sbr.rel (0) target = $region25
    $region24: #{kikitori_encoder_forward.1} parent=1 // pred_region
      %36 = dma.done [#allocation3], 15360
    $region25: #{kikitori_encoder_forward.1} parent=1 // pred_fallthru
      _
    %v38 = vld [vmem:[%s0] sm:$0xff]
    %v39 = vld [vmem:[%s0 + $0x8] sm:$0x3]
    %v40 = vld [vmem:[%s4] sm:$0xff]
    %v41 = vld [vmem:[%s4 + $0x8] sm:$0xff]
    %v42 = vld [vmem:[%s4 + $0x10] sm:$0xff]
    %v43 = vlaneseq
    %v44 = vshrl.u32 %v43, 7
    %v45 = vlaneseq
    %v46 = vand.u32 %v45, 127
    %v47 = vadd.s32 %v46, 128
    %v48 = vadd.s32 %v46, 256
    %v49 = vadd.s32 %v46, 384
    %v50 = vadd.s32 %v46, 512
    %v51 = vadd.s32 %v46, 640
    %v52 = vadd.s32 %v46, 768
    %v53 = vadd.s32 %v46, 896
    %v54 = vadd.s32 %v46, 1024
    %v55 = vadd.s32 %v46, 1152
    %vm56 = vcmp.lt.s32.totalorder %v46, 0
    %v57 = vsub.s32 0, %v46
    %v58 = vsel %vm56, %v57, %v46
    %v59 = vshrl.u32 %v58, 3
    %v60 = vand.u32 %v58, 7
    %v61 = vsub.s32 0, %v60
    %v62 = vsel %vm56, %v61, %v60
    %vm63 = vcmp.lt.s32.totalorder %v47, 0
    %v64 = vsub.s32 0, %v47
    %v65 = vsel %vm63, %v64, %v47
    %v66 = vshrl.u32 %v65, 3
    %v67 = vand.u32 %v65, 7
    %v68 = vsub.s32 0, %v67
    %v69 = vsel %vm63, %v68, %v67
    %vm70 = vcmp.lt.s32.totalorder %v48, 0
    %v71 = vsub.s32 0, %v48
    %v72 = vsel %vm70, %v71, %v48
    %v73 = vshrl.u32 %v72, 3
    %v74 = vand.u32 %v72, 7
    %v75 = vsub.s32 0, %v74
    %v76 = vsel %vm70, %v75, %v74
    %vm77 = vcmp.lt.s32.totalorder %v49, 0
    %v78 = vsub.s32 0, %v49
    %v79 = vsel %vm77, %v78, %v49
    %v80 = vshrl.u32 %v79, 3
    %v81 = vand.u32 %v79, 7
    %v82 = vsub.s32 0, %v81
    %v83 = vsel %vm77, %v82, %v81
    %vm84 = vcmp.lt.s32.totalorder %v50, 0
    %v85 = vsub.s32 0, %v50
    %v86 = vsel %vm84, %v85, %v50
    %v87 = vshrl.u32 %v86, 3
    %v88 = vand.u32 %v86, 7
    %v89 = vsub.s32 0, %v88
    %v90 = vsel %vm84, %v89, %v88
    %vm91 = vcmp.lt.s32.totalorder %v51, 0
    %v92 = vsub.s32 0, %v51
    %v93 = vsel %vm91, %v92, %v51
    %v94 = vshrl.u32 %v93, 3
    %v95 = vand.u32 %v93, 7
    %v96 = vsub.s32 0, %v95
    %v97 = vsel %vm91, %v96, %v95
    %vm98 = vcmp.lt.s32.totalorder %v52, 0
    %v99 = vsub.s32 0, %v52
    %v100 = vsel %vm98, %v99, %v52
    %v101 = vshrl.u32 %v100, 3
    %v102 = vand.u32 %v100, 7
    %v103 = vsub.s32 0, %v102
    %v104 = vsel %vm98, %v103, %v102
    %vm105 = vcmp.lt.s32.totalorder %v53, 0
    %v106 = vsub.s32 0, %v53
    %v107 = vsel %vm105, %v106, %v53
    %v108 = vshrl.u32 %v107, 3
    %v109 = vand.u32 %v107, 7
    %v110 = vsub.s32 0, %v109
    %v111 = vsel %vm105, %v110, %v109
    %vm112 = vcmp.lt.s32.totalorder %v54, 0
    %v113 = vsub.s32 0, %v54
    %v114 = vsel %vm112, %v113, %v54
    %v115 = vshrl.u32 %v114, 3
    %v116 = vand.u32 %v114, 7
    %v117 = vsub.s32 0, %v116
    %v118 = vsel %vm112, %v117, %v116
    %vm119 = vcmp.lt.s32.totalorder %v55, 0
    %v120 = vsub.s32 0, %v55
    %v121 = vsel %vm119, %v120, %v55
    %v122 = vshrl.u32 %v121, 3
    %v123 = vand.u32 %v121, 7
    %v124 = vsub.s32 0, %v123
    %v125 = vsel %vm119, %v124, %v123
    %vm126 = vcmp.ne.s32.totalorder %v62, 0
    %vm127 = vcmp.ne.s32.totalorder %v69, 0
    %vm128 = vcmp.ne.s32.totalorder %v76, 0
    %vm129 = vcmp.ne.s32.totalorder %v83, 0
    %vm130 = vcmp.ne.s32.totalorder %v90, 0
    %vm131 = vcmp.ne.s32.totalorder %v97, 0
    %vm132 = vcmp.ne.s32.totalorder %v104, 0
    %vm133 = vcmp.ne.s32.totalorder %v111, 0
    %vm134 = vcmp.ne.s32.totalorder %v118, 0
    %vm135 = vcmp.ne.s32.totalorder %v125, 0
    %vm136 = vcmp.lt.s32.totalorder %v62, 0
    %vm137 = vcmp.lt.s32.totalorder %v69, 0
    %vm138 = vcmp.lt.s32.totalorder %v76, 0
    %vm139 = vcmp.lt.s32.totalorder %v83, 0
    %vm140 = vcmp.lt.s32.totalorder %v90, 0
    %vm141 = vcmp.lt.s32.totalorder %v97, 0
    %vm142 = vcmp.lt.s32.totalorder %v104, 0
    %vm143 = vcmp.lt.s32.totalorder %v111, 0
    %vm144 = vcmp.lt.s32.totalorder %v118, 0
    %vm145 = vcmp.lt.s32.totalorder %v125, 0
    %vm146 = vmand %vm136, %vm126
    %vm147 = vmand %vm137, %vm127
    %vm148 = vmand %vm138, %vm128
    %vm149 = vmand %vm139, %vm129
    %vm150 = vmand %vm140, %vm130
    %vm151 = vmand %vm141, %vm131
    %vm152 = vmand %vm142, %vm132
    %vm153 = vmand %vm143, %vm133
    %vm154 = vmand %vm144, %vm134
    %vm155 = vmand %vm145, %vm135
    %v156 = vadd.s32 %v62, 8
    %v157 = vadd.s32 %v69, 8
    %v158 = vadd.s32 %v76, 8
    %v159 = vadd.s32 %v83, 8
    %v160 = vadd.s32 %v90, 8
    %v161 = vadd.s32 %v97, 8
    %v162 = vadd.s32 %v104, 8
    %v163 = vadd.s32 %v111, 8
    %v164 = vadd.s32 %v118, 8
    %v165 = vadd.s32 %v125, 8
    %v166 = vsel %vm146, %v156, %v62
    %v167 = vsel %vm147, %v157, %v69
    %v168 = vsel %vm148, %v158, %v76
    %v169 = vsel %vm149, %v159, %v83
    %v170 = vsel %vm150, %v160, %v90
    %v171 = vsel %vm151, %v161, %v97
    %v172 = vsel %vm152, %v162, %v104
    %v173 = vsel %vm153, %v163, %v111
    %v174 = vsel %vm154, %v164, %v118
    %v175 = vsel %vm155, %v165, %v125
    %vm176 = vcmp.eq.s32.totalorder %v166, %v44
    %vm177 = vcmp.eq.s32.totalorder %v167, %v44
    %vm178 = vcmp.eq.s32.totalorder %v168, %v44
    %vm179 = vcmp.eq.s32.totalorder %v169, %v44
    %vm180 = vcmp.eq.s32.totalorder %v170, %v44
    %vm181 = vcmp.eq.s32.totalorder %v171, %v44
    %vm182 = vcmp.eq.s32.totalorder %v172, %v44
    %vm183 = vcmp.eq.s32.totalorder %v173, %v44
    %vm184 = vcmp.eq.s32.totalorder %v174, %v44
    %vm185 = vcmp.eq.s32.totalorder %v175, %v44
    %vm186 = vcmp.lt.s32.totalorder %v46, 1200
    %vm187 = vcmp.lt.s32.totalorder %v47, 1200
    %vm188 = vcmp.lt.s32.totalorder %v48, 1200
    %vm189 = vcmp.lt.s32.totalorder %v49, 1200
    %vm190 = vcmp.lt.s32.totalorder %v50, 1200
    %vm191 = vcmp.lt.s32.totalorder %v51, 1200
    %vm192 = vcmp.lt.s32.totalorder %v52, 1200
    %vm193 = vcmp.lt.s32.totalorder %v53, 1200
    %vm194 = vcmp.lt.s32.totalorder %v54, 1200
    %vm195 = vcmp.lt.s32.totalorder %v55, 1200
    %vm196 = vmand %vm176, %vm186
    %vm197 = vmand %vm177, %vm187
    %vm198 = vmand %vm178, %vm188
    %vm199 = vmand %vm179, %vm189
    %vm200 = vmand %vm180, %vm190
    %vm201 = vmand %vm181, %vm191
    %vm202 = vmand %vm182, %vm192
    %vm203 = vmand %vm183, %vm193
    %vm204 = vmand %vm184, %vm194
    %vm205 = vmand %vm185, %vm195
    %v206 = vsel %vm196, 1.0, 0.0
    %v207 = vsel %vm197, 1.0, 0.0
    %v208 = vsel %vm198, 1.0, 0.0
    %v209 = vsel %vm199, 1.0, 0.0
    %v210 = vsel %vm200, 1.0, 0.0
    %v211 = vsel %vm201, 1.0, 0.0
    %v212 = vsel %vm202, 1.0, 0.0
    %v213 = vsel %vm203, 1.0, 0.0
    %v214 = vsel %vm204, 1.0, 0.0
    %v215 = vsel %vm205, 1.0, 0.0
    %v216 = vadd.s32 %v44, 8
    %vm217 = vcmp.lt.s32.totalorder %v46, 0
    %v218 = vsub.s32 0, %v46
    %v219 = vsel %vm217, %v218, %v46
    %v220 = vshrl.u32 %v219, 4
    %v221 = vand.u32 %v219, 15
    %v222 = vsub.s32 0, %v221
    %v223 = vsel %vm217, %v222, %v221
    %vm224 = vcmp.lt.s32.totalorder %v47, 0
    %v225 = vsub.s32 0, %v47
    %v226 = vsel %vm224, %v225, %v47
    %v227 = vshrl.u32 %v226, 4
    %v228 = vand.u32 %v226, 15
    %v229 = vsub.s32 0, %v228
    %v230 = vsel %vm224, %v229, %v228
    %vm231 = vcmp.lt.s32.totalorder %v48, 0
    %v232 = vsub.s32 0, %v48
    %v233 = vsel %vm231, %v232, %v48
    %v234 = vshrl.u32 %v233, 4
    %v235 = vand.u32 %v233, 15
    %v236 = vsub.s32 0, %v235
    %v237 = vsel %vm231, %v236, %v235
    %vm238 = vcmp.lt.s32.totalorder %v49, 0
    %v239 = vsub.s32 0, %v49
    %v240 = vsel %vm238, %v239, %v49
    %v241 = vshrl.u32 %v240, 4
    %v242 = vand.u32 %v240, 15
    %v243 = vsub.s32 0, %v242
    %v244 = vsel %vm238, %v243, %v242
    %vm245 = vcmp.lt.s32.totalorder %v50, 0
    %v246 = vsub.s32 0, %v50
    %v247 = vsel %vm245, %v246, %v50
    %v248 = vshrl.u32 %v247, 4
    %v249 = vand.u32 %v247, 15
    %v250 = vsub.s32 0, %v249
    %v251 = vsel %vm245, %v250, %v249
    %vm252 = vcmp.ne.s32.totalorder %v223, 0
    %vm253 = vcmp.ne.s32.totalorder %v230, 0
    %vm254 = vcmp.ne.s32.totalorder %v237, 0
    %vm255 = vcmp.ne.s32.totalorder %v244, 0
    %vm256 = vcmp.ne.s32.totalorder %v251, 0
    %vm257 = vcmp.lt.s32.totalorder %v223, 0
    %vm258 = vcmp.lt.s32.totalorder %v230, 0
    %vm259 = vcmp.lt.s32.totalorder %v237, 0
    %vm260 = vcmp.lt.s32.totalorder %v244, 0
    %vm261 = vcmp.lt.s32.totalorder %v251, 0
    %vm262 = vmand %vm257, %vm252
    %vm263 = vmand %vm258, %vm253
    %vm264 = vmand %vm259, %vm254
    %vm265 = vmand %vm260, %vm255
    %vm266 = vmand %vm261, %vm256
    %v267 = vadd.s32 %v223, 16
    %v268 = vadd.s32 %v230, 16
    %v269 = vadd.s32 %v237, 16
    %v270 = vadd.s32 %v244, 16
    %v271 = vadd.s32 %v251, 16
    %v272 = vsel %vm262, %v267, %v223
    %v273 = vsel %vm263, %v268, %v230
    %v274 = vsel %vm264, %v269, %v237
    %v275 = vsel %vm265, %v270, %v244
    %v276 = vsel %vm266, %v271, %v251
    %vm277 = vcmp.eq.s32.totalorder %v272, %v44
    %vm278 = vcmp.eq.s32.totalorder %v273, %v44
    %vm279 = vcmp.eq.s32.totalorder %v274, %v44
    %vm280 = vcmp.eq.s32.totalorder %v275, %v44
    %vm281 = vcmp.eq.s32.totalorder %v276, %v44
    %vm282 = vcmp.eq.s32.totalorder %v272, %v216
    %vm283 = vcmp.eq.s32.totalorder %v273, %v216
    %vm284 = vcmp.eq.s32.totalorder %v274, %v216
    %vm285 = vcmp.eq.s32.totalorder %v275, %v216
    %vm286 = vcmp.eq.s32.totalorder %v276, %v216
    %vm287 = vcmp.lt.s32.totalorder %v46, 640
    %vm288 = vcmp.lt.s32.totalorder %v47, 640
    %vm289 = vcmp.lt.s32.totalorder %v48, 640
    %vm290 = vcmp.lt.s32.totalorder %v49, 640
    %vm291 = vcmp.lt.s32.totalorder %v50, 640
    %vm292 = vmand %vm277, %vm287
    %vm293 = vmand %vm278, %vm288
    %vm294 = vmand %vm279, %vm289
    %vm295 = vmand %vm280, %vm290
    %vm296 = vmand %vm281, %vm291
    %vm297 = vmand %vm282, %vm287
    %vm298 = vmand %vm283, %vm288
    %vm299 = vmand %vm284, %vm289
    %vm300 = vmand %vm285, %vm290
    %vm301 = vmand %vm286, %vm291
    %v302 = vsel %vm292, 1.0, 0.0
    %v303 = vsel %vm293, 1.0, 0.0
    %v304 = vsel %vm294, 1.0, 0.0
    %v305 = vsel %vm295, 1.0, 0.0
    %v306 = vsel %vm296, 1.0, 0.0
    %v307 = vsel %vm297, 1.0, 0.0
    %v308 = vsel %vm298, 1.0, 0.0
    %v309 = vsel %vm299, 1.0, 0.0
    %v310 = vsel %vm300, 1.0, 0.0
    %v311 = vsel %vm301, 1.0, 0.0
    %v312 = vld [vmem:[%s1] sm:$0xff]
    %v313 = vld [vmem:[%s1 + $0x8] sm:$0xff]
    %v314 = vld [vmem:[%s1 + $0x10] sm:$0xff]
    %v315 = vld [vmem:[%s1 + $0x18] sm:$0xff]
    %v316 = vld [vmem:[%s1 + $0x20] sm:$0xff]
    %v317 = vld [vmem:[%s1 + $0x28] sm:$0xff]
    %v318 = vld [vmem:[%s1 + $0x30] sm:$0xff]
    %v319 = vld [vmem:[%s1 + $0x38] sm:$0xff]
    %v320 = vld [vmem:[%s1 + $0x40] sm:$0xff]
    %v321 = vld [vmem:[%s1 + $0x48] sm:$0xff]
    %v322 = vld [vmem:[%s1 + $0x50] sm:$0xff]
    %v323 = vld [vmem:[%s1 + $0x58] sm:$0xff]
    %v324 = vld [vmem:[%s1 + $0x60] sm:$0xff]
    %v325 = vld [vmem:[%s1 + $0x68] sm:$0xff]
    %v326 = vld [vmem:[%s1 + $0x70] sm:$0xff]
    %v327 = vld [vmem:[%s1 + $0x78] sm:$0xff]
    %v328 = vld [vmem:[%s1 + $0x80] sm:$0xff]
    %v329 = vld [vmem:[%s1 + $0x88] sm:$0xff]
    %v330 = vld [vmem:[%s1 + $0x90] sm:$0xff]
    %v331 = vld [vmem:[%s1 + $0x98] sm:$0x77]
    %333 = vst [vmem:[#allocation1] ss:$4 sm:$0xff] %v38
    %v334 = vld.sshfl [vmem:[#allocation1] sm:$0xff pattern:$0x73625140]
    %v335 = vld.sshfl [vmem:[#allocation1 + $0x8] sm:$0xff pattern:$0x73625140]
    %v338 = vpack.c.bf16 %v334, %v334
    %v339 = vpack.c.bf16 %v335, %v335
    %v360 = vunpack.c.l.b16 %v312
    %v361 = vunpack.c.h.b16 %v312
    %v362 = vunpack.c.l.b16 %v313
    %v363 = vunpack.c.h.b16 %v313
    %v364 = vunpack.c.l.b16 %v314
    %v365 = vunpack.c.h.b16 %v314
    %v366 = vunpack.c.l.b16 %v315
    %v367 = vunpack.c.h.b16 %v315
    %v368 = vunpack.c.l.b16 %v316
    %v369 = vunpack.c.h.b16 %v316
    %v370 = vunpack.c.l.b16 %v317
    %v371 = vunpack.c.h.b16 %v317
    %v372 = vunpack.c.l.b16 %v318
    %v373 = vunpack.c.h.b16 %v318
    %v374 = vunpack.c.l.b16 %v319
    %v375 = vunpack.c.h.b16 %v319
    %v376 = vunpack.c.l.b16 %v320
    %v377 = vunpack.c.h.b16 %v320
    %v378 = vunpack.c.l.b16 %v321
    %v379 = vunpack.c.h.b16 %v321
    %v380 = vunpack.c.l.b16 %v322
    %v381 = vunpack.c.h.b16 %v322
    %v382 = vunpack.c.l.b16 %v323
    %v383 = vunpack.c.h.b16 %v323
    %v384 = vunpack.c.l.b16 %v324
    %v385 = vunpack.c.h.b16 %v324
    %v386 = vunpack.c.l.b16 %v325
    %v387 = vunpack.c.h.b16 %v325
    %v388 = vunpack.c.l.b16 %v326
    %v389 = vunpack.c.h.b16 %v326
    %v390 = vunpack.c.l.b16 %v327
    %v391 = vunpack.c.h.b16 %v327
    %v392 = vunpack.c.l.b16 %v328
    %v393 = vunpack.c.h.b16 %v328
    %v394 = vunpack.c.l.b16 %v329
    %v395 = vunpack.c.h.b16 %v329
    %v396 = vunpack.c.l.b16 %v330
    %v397 = vunpack.c.h.b16 %v330
    %v398 = vunpack.c.l.b16 %v331
    %v399 = vunpack.c.h.b16 %v331
    %v400 = vpack.c.b16 %v362, %v360
    %v401 = vpack.c.b16 %v363, %v361
    %v402 = vpack.c.b16 %v366, %v364
    %v403 = vpack.c.b16 %v367, %v365
    %v404 = vpack.c.b16 %v370, %v368
    %v405 = vpack.c.b16 %v371, %v369
    %v406 = vpack.c.b16 %v374, %v372
    %v407 = vpack.c.b16 %v375, %v373
    %v408 = vpack.c.b16 %v378, %v376
    %v409 = vpack.c.b16 %v379, %v377
    %v410 = vpack.c.b16 %v382, %v380
    %v411 = vpack.c.b16 %v383, %v381
    %v412 = vpack.c.b16 %v386, %v384
    %v413 = vpack.c.b16 %v387, %v385
    %v414 = vpack.c.b16 %v390, %v388
    %v415 = vpack.c.b16 %v391, %v389
    %v416 = vpack.c.b16 %v394, %v392
    %v417 = vpack.c.b16 %v395, %v393
    %v418 = vpack.c.b16 %v398, %v396
    %v419 = vpack.c.b16 %v399, %v397
    %vm438 = vcmask 236544
    %v440 = vsel %vm438, %v339, 0
    %vm442 = vcmask 1045504
    %vm443 = vcmask 1046528
    %v444 = vsel %vm442, 4294967295, 65535
    %v445 = vsel %vm443, %v444, 0
    %v447 = vand.u32 %v418, %v445
    %v450 = vand.u32 %v419, %v445
    %452 = vmatpush.bf16.msra.mxu0 %v414
    %453 = vmatpush.bf16.msra.mxu0 %v412
    %454 = vmatpush.bf16.msra.mxu0 %v410
    %455 = vmatpush.bf16.msra.mxu0 %v408
    %456 = vmatpush.bf16.msra.mxu0 %v406
    %457 = vmatpush.bf16.msra.mxu0 %v404
    %458 = vmatpush.bf16.msra.mxu0 %v402
    %459 = vmatpush.bf16.msra.mxu0 %v400
    %460 = vmatmul.bf16.gmra.mxu0 %v338
    %v461 = vpop.f32.mrf.mxu0
    %v462 = vadd.f32 0.0, %v461
    %v463 = vpop.f32.mrf.mxu0
    %464 = vdwg.mxu0
    %465 = vmatpush.bf16.msra.mxu0 0
    %466 = vmatpush.bf16.msra.mxu0 0
    %467 = vmatpush.bf16.msra.mxu0 0
    %468 = vmatpush.bf16.msra.mxu0 0
    %469 = vmatpush.bf16.msra.mxu0 0
    %470 = vmatpush.bf16.msra.mxu0 0
    %471 = vmatpush.bf16.msra.mxu0 %v447
    %472 = vmatpush.bf16.msra.mxu0 %v416
    %473 = vmatmul.bf16.gmra.mxu0 %v440
    %v474 = vpop.f32.mrf.mxu0
    %v475 = vadd.f32 %v462, %v474
    %v476 = vpop.f32.mrf.mxu0
    %477 = vdwg.mxu0
    %478 = vmatpush.bf16.msra.mxu0 %v415
    %479 = vmatpush.bf16.msra.mxu0 %v413
    %480 = vmatpush.bf16.msra.mxu0 %v411
    %481 = vmatpush.bf16.msra.mxu0 %v409
    %482 = vmatpush.bf16.msra.mxu0 %v407
    %483 = vmatpush.bf16.msra.mxu0 %v405
    %484 = vmatpush.bf16.msra.mxu0 %v403
    %485 = vmatpush.bf16.msra.mxu0 %v401
    %486 = vmatmul.bf16.gmra.mxu0 %v338
    %v487 = vpop.f32.mrf.mxu0
    %v488 = vadd.f32 0.0, %v487
    %v489 = vpop.f32.mrf.mxu0
    %490 = vdwg.mxu0
    %491 = vmatpush.bf16.msra.mxu0 0
    %492 = vmatpush.bf16.msra.mxu0 0
    %493 = vmatpush.bf16.msra.mxu0 0
    %494 = vmatpush.bf16.msra.mxu0 0
    %495 = vmatpush.bf16.msra.mxu0 0
    %496 = vmatpush.bf16.msra.mxu0 0
    %497 = vmatpush.bf16.msra.mxu0 %v450
    %498 = vmatpush.bf16.msra.mxu0 %v417
    %499 = vmatmul.bf16.gmra.mxu0 %v440
    %v500 = vpop.f32.mrf.mxu0
    %v501 = vadd.f32 %v488, %v500
    %v502 = vpop.f32.mrf.mxu0
    %503 = vdwg.mxu0
    %504 = vst [vmem:[#allocation1] ss:$4 sm:$0xff] %v38
    %v505 = vld.sshfl [vmem:[#allocation1] sm:$0xff pattern:$0x73625140]
    %v506 = vld.sshfl [vmem:[#allocation1 + $0x8] sm:$0xff pattern:$0x73625140]
    %v507 = vld.sshfl [vmem:[#allocation1 + $0x10] sm:$0xff pattern:$0x73625140]
    %v511 = vpack.c.bf16 %v505, %v505
    %v512 = vpack.c.bf16 %v506, %v506
    %v513 = vpack.c.bf16 %v507, %v507
    %517 = vrot.lane.b32.xlu0 %v511, 8
    %v518 = vpop.permute.xlu0 %517
    %519 = vrot.lane.b32.xlu0 %v512, 8
    %v520 = vpop.permute.xlu0 %519
    %521 = vrot.lane.b32.xlu0 %v513, 8
    %v522 = vpop.permute.xlu0 %521
    %vm523 = vcmask 64512
    %v524 = vsel %vm523, %v518, %v520
    %v525 = vsel %vm523, %v520, %v522
    %v528 = vsel %vm438, %v525, 0
    %530 = vmatpush.bf16.msra.mxu0 %v414
    %531 = vmatpush.bf16.msra.mxu0 %v412
    %532 = vmatpush.bf16.msra.mxu0 %v410
    %533 = vmatpush.bf16.msra.mxu0 %v408
    %534 = vmatpush.bf16.msra.mxu0 %v406
    %535 = vmatpush.bf16.msra.mxu0 %v404
    %536 = vmatpush.bf16.msra.mxu0 %v402
    %537 = vmatpush.bf16.msra.mxu0 %v400
    %538 = vmatmul.bf16.gmra.mxu0 %v524
    %v539 = vpop.f32.mrf.mxu0
    %v540 = vadd.f32 0.0, %v539
    %v541 = vpop.f32.mrf.mxu0
    %542 = vdwg.mxu0
    %543 = vmatpush.bf16.msra.mxu0 0
    %544 = vmatpush.bf16.msra.mxu0 0
    %545 = vmatpush.bf16.msra.mxu0 0
    %546 = vmatpush.bf16.msra.mxu0 0
    %547 = vmatpush.bf16.msra.mxu0 0
    %548 = vmatpush.bf16.msra.mxu0 0
    %549 = vmatpush.bf16.msra.mxu0 %v447
    %550 = vmatpush.bf16.msra.mxu0 %v416
    %551 = vmatmul.bf16.gmra.mxu0 %v528
    %v552 = vpop.f32.mrf.mxu0
    %v553 = vadd.f32 %v540, %v552
    %v554 = vpop.f32.mrf.mxu0
    %555 = vdwg.mxu0
    %556 = vmatpush.bf16.msra.mxu0 %v415
    %557 = vmatpush.bf16.msra.mxu0 %v413
    %558 = vmatpush.bf16.msra.mxu0 %v411
    %559 = vmatpush.bf16.msra.mxu0 %v409
    %560 = vmatpush.bf16.msra.mxu0 %v407
    %561 = vmatpush.bf16.msra.mxu0 %v405
    %562 = vmatpush.bf16.msra.mxu0 %v403
    %563 = vmatpush.bf16.msra.mxu0 %v401
    %564 = vmatmul.bf16.gmra.mxu0 %v524
    %v565 = vpop.f32.mrf.mxu0
    %v566 = vadd.f32 0.0, %v565
    %v567 = vpop.f32.mrf.mxu0
    %568 = vdwg.mxu0
    %569 = vmatpush.bf16.msra.mxu0 0
    %570 = vmatpush.bf16.msra.mxu0 0
    %571 = vmatpush.bf16.msra.mxu0 0
    %572 = vmatpush.bf16.msra.mxu0 0
    %573 = vmatpush.bf16.msra.mxu0 0
    %574 = vmatpush.bf16.msra.mxu0 0
    %575 = vmatpush.bf16.msra.mxu0 %v450
    %576 = vmatpush.bf16.msra.mxu0 %v417
    %577 = vmatmul.bf16.gmra.mxu0 %v528
    %v578 = vpop.f32.mrf.mxu0
    %v579 = vadd.f32 %v566, %v578
    %v580 = vpop.f32.mrf.mxu0
    %581 = vdwg.mxu0
    %582 = vst [vmem:[#allocation1] ss:$4 sm:$0xff] %v38
    %v583 = vld.sshfl [vmem:[#allocation1 + $0x8] sm:$0xff pattern:$0x73625140]
    %v584 = vld.sshfl [vmem:[#allocation1 + $0x10] sm:$0xff pattern:$0x73625140]
    %v585 = vld.sshfl [vmem:[#allocation1 + $0x18] sm:$0xff pattern:$0x73625140]
    %586 = vrot.lane.b32.xlu0 %v583, 16
    %v587 = vpop.permute.xlu0 %586
    %588 = vrot.lane.b32.xlu0 %v584, 16
    %v589 = vpop.permute.xlu0 %588
    %590 = vrot.lane.b32.xlu0 %v585, 16
    %v591 = vpop.permute.xlu0 %590
    %vm592 = vcmask 130048
    %v593 = vsel %vm592, %v587, %v589
    %v594 = vsel %vm592, %v589, %v591
    %v597 = vpack.c.bf16 %v593, %v593
    %v598 = vpack.c.bf16 %v594, %v594
    %v600 = vsel %vm438, %v598, 0
    %602 = vmatpush.bf16.msra.mxu0 %v414
    %603 = vmatpush.bf16.msra.mxu0 %v412
    %604 = vmatpush.bf16.msra.mxu0 %v410
    %605 = vmatpush.bf16.msra.mxu0 %v408
    %606 = vmatpush.bf16.msra.mxu0 %v406
    %607 = vmatpush.bf16.msra.mxu0 %v404
    %608 = vmatpush.bf16.msra.mxu0 %v402
    %609 = vmatpush.bf16.msra.mxu0 %v400
    %610 = vmatmul.bf16.gmra.mxu0 %v597
    %v611 = vpop.f32.mrf.mxu0
    %v612 = vadd.f32 0.0, %v611
    %v613 = vpop.f32.mrf.mxu0
    %614 = vdwg.mxu0
    %615 = vmatpush.bf16.msra.mxu0 0
    %616 = vmatpush.bf16.msra.mxu0 0
    %617 = vmatpush.bf16.msra.mxu0 0
    %618 = vmatpush.bf16.msra.mxu0 0
    %619 = vmatpush.bf16.msra.mxu0 0
    %620 = vmatpush.bf16.msra.mxu0 0
    %621 = vmatpush.bf16.msra.mxu0 %v447
    %622 = vmatpush.bf16.msra.mxu0 %v416
    %623 = vmatmul.bf16.gmra.mxu0 %v600
    %v624 = vpop.f32.mrf.mxu0
    %v625 = vadd.f32 %v612, %v624
    %v626 = vpop.f32.mrf.mxu0
    %627 = vdwg.mxu0
    %628 = vmatpush.bf16.msra.mxu0 %v415
    %629 = vmatpush.bf16.msra.mxu0 %v413
    %630 = vmatpush.bf16.msra.mxu0 %v411
    %631 = vmatpush.bf16.msra.mxu0 %v409
    %632 = vmatpush.bf16.msra.mxu0 %v407
    %633 = vmatpush.bf16.msra.mxu0 %v405
    %634 = vmatpush.bf16.msra.mxu0 %v403
    %635 = vmatpush.bf16.msra.mxu0 %v401
    %636 = vmatmul.bf16.gmra.mxu0 %v597
    %v637 = vpop.f32.mrf.mxu0
    %v638 = vadd.f32 0.0, %v637
    %v639 = vpop.f32.mrf.mxu0
    %640 = vdwg.mxu0
    %641 = vmatpush.bf16.msra.mxu0 0
    %642 = vmatpush.bf16.msra.mxu0 0
    %643 = vmatpush.bf16.msra.mxu0 0
    %644 = vmatpush.bf16.msra.mxu0 0
    %645 = vmatpush.bf16.msra.mxu0 0
    %646 = vmatpush.bf16.msra.mxu0 0
    %647 = vmatpush.bf16.msra.mxu0 %v450
    %648 = vmatpush.bf16.msra.mxu0 %v417
    %649 = vmatmul.bf16.gmra.mxu0 %v600
    %v650 = vpop.f32.mrf.mxu0
    %v651 = vadd.f32 %v638, %v650
    %v652 = vpop.f32.mrf.mxu0
    %653 = vdwg.mxu0
    %655 = vst [vmem:[#allocation1] ss:$4 sm:$0xff] %v38
    %s656 = scalar_lea.vmem [#allocation1], 32
    %657 = vst [vmem:[%s656] ss:$4 sm:$0xff] %v39
    %v658 = vld.sshfl [vmem:[#allocation1 + $0x10] sm:$0xff pattern:$0x73625140]
    %v659 = vld.sshfl [vmem:[#allocation1 + $0x18] sm:$0xff pattern:$0x73625140]
    %v660 = vld.sshfl [vmem:[#allocation1 + $0x20] sm:$0xff pattern:$0x73625140]
    %661 = vrot.lane.b32.xlu0 %v658, 24
    %v662 = vpop.permute.xlu0 %661
    %663 = vrot.lane.b32.xlu0 %v659, 24
    %v664 = vpop.permute.xlu0 %663
    %665 = vrot.lane.b32.xlu0 %v660, 24
    %v666 = vpop.permute.xlu0 %665
    %vm667 = vcmask 195584
    %v668 = vsel %vm667, %v662, %v664
    %v669 = vsel %vm667, %v664, %v666
    %v672 = vpack.c.bf16 %v668, %v668
    %v673 = vpack.c.bf16 %v669, %v669
    %v675 = vsel %vm438, %v673, 0
    %677 = vmatpush.bf16.msra.mxu0 %v414
    %678 = vmatpush.bf16.msra.mxu0 %v412
    %679 = vmatpush.bf16.msra.mxu0 %v410
    %680 = vmatpush.bf16.msra.mxu0 %v408
    %681 = vmatpush.bf16.msra.mxu0 %v406
    %682 = vmatpush.bf16.msra.mxu0 %v404
    %683 = vmatpush.bf16.msra.mxu0 %v402
    %684 = vmatpush.bf16.msra.mxu0 %v400
    %685 = vmatmul.bf16.gmra.mxu0 %v672
    %v686 = vpop.f32.mrf.mxu0
    %v687 = vadd.f32 0.0, %v686
    %v688 = vpop.f32.mrf.mxu0
    %689 = vdwg.mxu0
    %690 = vmatpush.bf16.msra.mxu0 0
    %691 = vmatpush.bf16.msra.mxu0 0
    %692 = vmatpush.bf16.msra.mxu0 0
    %693 = vmatpush.bf16.msra.mxu0 0
    %694 = vmatpush.bf16.msra.mxu0 0
    %695 = vmatpush.bf16.msra.mxu0 0
    %696 = vmatpush.bf16.msra.mxu0 %v447
    %697 = vmatpush.bf16.msra.mxu0 %v416
    %698 = vmatmul.bf16.gmra.mxu0 %v675
    %v699 = vpop.f32.mrf.mxu0
    %v700 = vadd.f32 %v687, %v699
    %v701 = vpop.f32.mrf.mxu0
    %702 = vdwg.mxu0
    %703 = vmatpush.bf16.msra.mxu0 %v415
    %704 = vmatpush.bf16.msra.mxu0 %v413
    %705 = vmatpush.bf16.msra.mxu0 %v411
    %706 = vmatpush.bf16.msra.mxu0 %v409
    %707 = vmatpush.bf16.msra.mxu0 %v407
    %708 = vmatpush.bf16.msra.mxu0 %v405
    %709 = vmatpush.bf16.msra.mxu0 %v403
    %710 = vmatpush.bf16.msra.mxu0 %v401
    %711 = vmatmul.bf16.gmra.mxu0 %v672
    %v712 = vpop.f32.mrf.mxu0
    %v713 = vadd.f32 0.0, %v712
    %v714 = vpop.f32.mrf.mxu0
    %715 = vdwg.mxu0
    %716 = vmatpush.bf16.msra.mxu0 0
    %717 = vmatpush.bf16.msra.mxu0 0
    %718 = vmatpush.bf16.msra.mxu0 0
    %719 = vmatpush.bf16.msra.mxu0 0
    %720 = vmatpush.bf16.msra.mxu0 0
    %721 = vmatpush.bf16.msra.mxu0 0
    %722 = vmatpush.bf16.msra.mxu0 %v450
    %723 = vmatpush.bf16.msra.mxu0 %v417
    %724 = vmatmul.bf16.gmra.mxu0 %v675
    %v725 = vpop.f32.mrf.mxu0
    %v726 = vadd.f32 %v713, %v725
    %v727 = vpop.f32.mrf.mxu0
    %728 = vdwg.mxu0
    %729 = vst [vmem:[#allocation1] ss:$4 sm:$0xff] %v38
    %s730 = scalar_lea.vmem [#allocation1], 32
    %731 = vst [vmem:[%s730] ss:$4 sm:$0xff] %v39
    %v732 = vld.sshfl [vmem:[#allocation1 + $0x18] sm:$0xff pattern:$0x73625140]
    %v733 = vld.sshfl [vmem:[#allocation1 + $0x20] sm:$0xff pattern:$0x73625140]
    %734 = vrot.lane.b32.xlu0 %v732, 32
    %v735 = vpop.permute.xlu0 %734
    %736 = vrot.lane.b32.xlu0 %v733, 32
    %v737 = vpop.permute.xlu0 %736
    %vm738 = vcmask 261120
    %v739 = vsel %vm738, %v735, %v737
    %v742 = vpack.c.bf16 %v739, %v739
    %v743 = vpack.c.bf16 %v737, %v737
    %v745 = vsel %vm438, %v743, 0
    %747 = vmatpush.bf16.msra.mxu0 %v414
    %748 = vmatpush.bf16.msra.mxu0 %v412
    %749 = vmatpush.bf16.msra.mxu0 %v410
    %750 = vmatpush.bf16.msra.mxu0 %v408
    %751 = vmatpush.bf16.msra.mxu0 %v406
    %752 = vmatpush.bf16.msra.mxu0 %v404
    %753 = vmatpush.bf16.msra.mxu0 %v402
    %754 = vmatpush.bf16.msra.mxu0 %v400
    %755 = vmatmul.bf16.gmra.mxu0 %v742
    %v756 = vpop.f32.mrf.mxu0
    %v757 = vadd.f32 0.0, %v756
    %v758 = vpop.f32.mrf.mxu0
    %759 = vdwg.mxu0
    %760 = vmatpush.bf16.msra.mxu0 0
    %761 = vmatpush.bf16.msra.mxu0 0
    %762 = vmatpush.bf16.msra.mxu0 0
    %763 = vmatpush.bf16.msra.mxu0 0
    %764 = vmatpush.bf16.msra.mxu0 0
    %765 = vmatpush.bf16.msra.mxu0 0
    %766 = vmatpush.bf16.msra.mxu0 %v447
    %767 = vmatpush.bf16.msra.mxu0 %v416
    %768 = vmatmul.bf16.gmra.mxu0 %v745
    %v769 = vpop.f32.mrf.mxu0
    %v770 = vadd.f32 %v757, %v769
    %v771 = vpop.f32.mrf.mxu0
    %772 = vdwg.mxu0
    %773 = vmatpush.bf16.msra.mxu0 %v415
    %774 = vmatpush.bf16.msra.mxu0 %v413
    %775 = vmatpush.bf16.msra.mxu0 %v411
    %776 = vmatpush.bf16.msra.mxu0 %v409
    %777 = vmatpush.bf16.msra.mxu0 %v407
    %778 = vmatpush.bf16.msra.mxu0 %v405
    %779 = vmatpush.bf16.msra.mxu0 %v403
    %780 = vmatpush.bf16.msra.mxu0 %v401
    %781 = vmatmul.bf16.gmra.mxu0 %v742
    %v782 = vpop.f32.mrf.mxu0
    %v783 = vadd.f32 0.0, %v782
    %v784 = vpop.f32.mrf.mxu0
    %785 = vdwg.mxu0
    %786 = vmatpush.bf16.msra.mxu0 0
    %787 = vmatpush.bf16.msra.mxu0 0
    %788 = vmatpush.bf16.msra.mxu0 0
    %789 = vmatpush.bf16.msra.mxu0 0
    %790 = vmatpush.bf16.msra.mxu0 0
    %791 = vmatpush.bf16.msra.mxu0 0
    %792 = vmatpush.bf16.msra.mxu0 %v450
    %793 = vmatpush.bf16.msra.mxu0 %v417
    %794 = vmatmul.bf16.gmra.mxu0 %v745
    %v795 = vpop.f32.mrf.mxu0
    %v796 = vadd.f32 %v783, %v795
    %v797 = vpop.f32.mrf.mxu0
    %798 = vdwg.mxu0
    %801 = vrot.lane.b32.xlu0 %v553, 112
    %v802 = vpop.permute.xlu0 %801
    %803 = vrot.lane.b32.xlu0 %v579, 112
    %v804 = vpop.permute.xlu0 %803
    %vm805 = vcmask 916480
    %v806 = vsel %vm805, %v802, %v804
    %812 = vrot.lane.b32.xlu0 %v625, 96
    %v813 = vpop.permute.xlu0 %812
    %814 = vrot.lane.b32.xlu0 %v651, 96
    %v815 = vpop.permute.xlu0 %814
    %vm816 = vcmask 785408
    %v817 = vsel %vm816, %v813, %v815
    %823 = vrot.lane.b32.xlu0 %v700, 80
    %v824 = vpop.permute.xlu0 %823
    %825 = vrot.lane.b32.xlu0 %v726, 80
    %v826 = vpop.permute.xlu0 %825
    %vm827 = vcmask 654336
    %v828 = vsel %vm827, %v824, %v826
    %834 = vrot.lane.b32.xlu0 %v770, 64
    %v835 = vpop.permute.xlu0 %834
    %836 = vrot.lane.b32.xlu0 %v796, 64
    %v837 = vpop.permute.xlu0 %836
    %vm838 = vcmask 523264
    %v839 = vsel %vm838, %v835, %v837
    %v843 = vsel %vm805, %v501, %v802
    %v844 = vsel %vm816, %v804, %v813
    %v845 = vsel %vm827, %v815, %v824
    %v846 = vsel %vm838, %v826, %v835
    %vm847 = vcmask 392192
    %v848 = vsel %vm847, %v837, 0.0
    %vm849 = vcmask 1041408
    %v850 = vsel %vm849, %v475, 0.0
    %v851 = vrot.slane %v850, 4
    %v852 = vadd.f32 %v850, %v851
    %v853 = vrot.slane %v852, 2
    %v854 = vadd.f32 %v852, %v853
    %v855 = vrot.slane %v854, 1
    %v856 = vadd.f32 %v854, %v855
    %v857 = vsel %vm849, %v843, 0.0
    %v858 = vrot.slane %v857, 4
    %v859 = vadd.f32 %v857, %v858
    %v860 = vrot.slane %v859, 2
    %v861 = vadd.f32 %v859, %v860
    %v862 = vrot.slane %v861, 1
    %v863 = vadd.f32 %v861, %v862
    %v864 = vsel %vm849, %v806, 0.0
    %v865 = vrot.slane %v864, 4
    %v866 = vadd.f32 %v864, %v865
    %v867 = vrot.slane %v866, 2
    %v868 = vadd.f32 %v866, %v867
    %v869 = vrot.slane %v868, 1
    %v870 = vadd.f32 %v868, %v869
    %v871 = vsel %vm849, %v844, 0.0
    %v872 = vrot.slane %v871, 4
    %v873 = vadd.f32 %v871, %v872
    %v874 = vrot.slane %v873, 2
    %v875 = vadd.f32 %v873, %v874
    %v876 = vrot.slane %v875, 1
    %v877 = vadd.f32 %v875, %v876
    %v878 = vsel %vm849, %v817, 0.0
    %v879 = vrot.slane %v878, 4
    %v880 = vadd.f32 %v878, %v879
    %v881 = vrot.slane %v880, 2
    %v882 = vadd.f32 %v880, %v881
    %v883 = vrot.slane %v882, 1
    %v884 = vadd.f32 %v882, %v883
    %v885 = vsel %vm849, %v845, 0.0
    %v886 = vrot.slane %v885, 4
    %v887 = vadd.f32 %v885, %v886
    %v888 = vrot.slane %v887, 2
    %v889 = vadd.f32 %v887, %v888
    %v890 = vrot.slane %v889, 1
    %v891 = vadd.f32 %v889, %v890
    %v892 = vsel %vm849, %v828, 0.0
    %v893 = vrot.slane %v892, 4
    %v894 = vadd.f32 %v892, %v893
    %v895 = vrot.slane %v894, 2
    %v896 = vadd.f32 %v894, %v895
    %v897 = vrot.slane %v896, 1
    %v898 = vadd.f32 %v896, %v897
    %v899 = vsel %vm849, %v846, 0.0
    %v900 = vrot.slane %v899, 4
    %v901 = vadd.f32 %v899, %v900
    %v902 = vrot.slane %v901, 2
    %v903 = vadd.f32 %v901, %v902
    %v904 = vrot.slane %v903, 1
    %v905 = vadd.f32 %v903, %v904
    %v906 = vsel %vm849, %v839, 0.0
    %v907 = vrot.slane %v906, 4
    %v908 = vadd.f32 %v906, %v907
    %v909 = vrot.slane %v908, 2
    %v910 = vadd.f32 %v908, %v909
    %v911 = vrot.slane %v910, 1
    %v912 = vadd.f32 %v910, %v911
    %v913 = vsel %vm849, %v848, 0.0
    %v914 = vrot.slane %v913, 4
    %v915 = vadd.f32 %v913, %v914
    %v916 = vrot.slane %v915, 2
    %v917 = vadd.f32 %v915, %v916
    %v918 = vrot.slane %v917, 1
    %v919 = vadd.f32 %v917, %v918
    %v920 = vmul.f32 %v475, %v475
    %v921 = vmul.f32 %v843, %v843
    %v922 = vmul.f32 %v806, %v806
    %v923 = vmul.f32 %v844, %v844
    %v924 = vmul.f32 %v817, %v817
    %v925 = vmul.f32 %v845, %v845
    %v926 = vmul.f32 %v828, %v828
    %v927 = vmul.f32 %v846, %v846
    %v928 = vmul.f32 %v839, %v839
    %v929 = vmul.f32 %v848, %v848
    %v930 = vsel %vm849, %v920, 0.0
    %v931 = vrot.slane %v930, 4
    %v932 = vadd.f32 %v930, %v931
    %v933 = vrot.slane %v932, 2
    %v934 = vadd.f32 %v932, %v933
    %v935 = vrot.slane %v934, 1
    %v936 = vadd.f32 %v934, %v935
    %v937 = vsel %vm849, %v921, 0.0
    %v938 = vrot.slane %v937, 4
    %v939 = vadd.f32 %v937, %v938
    %v940 = vrot.slane %v939, 2
    %v941 = vadd.f32 %v939, %v940
    %v942 = vrot.slane %v941, 1
    %v943 = vadd.f32 %v941, %v942
    %v944 = vsel %vm849, %v922, 0.0
    %v945 = vrot.slane %v944, 4
    %v946 = vadd.f32 %v944, %v945
    %v947 = vrot.slane %v946, 2
    %v948 = vadd.f32 %v946, %v947
    %v949 = vrot.slane %v948, 1
    %v950 = vadd.f32 %v948, %v949
    %v951 = vsel %vm849, %v923, 0.0
    %v952 = vrot.slane %v951, 4
    %v953 = vadd.f32 %v951, %v952
    %v954 = vrot.slane %v953, 2
    %v955 = vadd.f32 %v953, %v954
    %v956 = vrot.slane %v955, 1
    %v957 = vadd.f32 %v955, %v956
    %v958 = vsel %vm849, %v924, 0.0
    %v959 = vrot.slane %v958, 4
    %v960 = vadd.f32 %v958, %v959
    %v961 = vrot.slane %v960, 2
    %v962 = vadd.f32 %v960, %v961
    %v963 = vrot.slane %v962, 1
    %v964 = vadd.f32 %v962, %v963
    %v965 = vsel %vm849, %v925, 0.0
    %v966 = vrot.slane %v965, 4
    %v967 = vadd.f32 %v965, %v966
    %v968 = vrot.slane %v967, 2
    %v969 = vadd.f32 %v967, %v968
    %v970 = vrot.slane %v969, 1
    %v971 = vadd.f32 %v969, %v970
    %v972 = vsel %vm849, %v926, 0.0
    %v973 = vrot.slane %v972, 4
    %v974 = vadd.f32 %v972, %v973
    %v975 = vrot.slane %v974, 2
    %v976 = vadd.f32 %v974, %v975
    %v977 = vrot.slane %v976, 1
    %v978 = vadd.f32 %v976, %v977
    %v979 = vsel %vm849, %v927, 0.0
    %v980 = vrot.slane %v979, 4
    %v981 = vadd.f32 %v979, %v980
    %v982 = vrot.slane %v981, 2
    %v983 = vadd.f32 %v981, %v982
    %v984 = vrot.slane %v983, 1
    %v985 = vadd.f32 %v983, %v984
    %v986 = vsel %vm849, %v928, 0.0
    %v987 = vrot.slane %v986, 4
    %v988 = vadd.f32 %v986, %v987
    %v989 = vrot.slane %v988, 2
    %v990 = vadd.f32 %v988, %v989
    %v991 = vrot.slane %v990, 1
    %v992 = vadd.f32 %v990, %v991
    %v993 = vsel %vm849, %v929, 0.0
    %v994 = vrot.slane %v993, 4
    %v995 = vadd.f32 %v993, %v994
    %v996 = vrot.slane %v995, 2
    %v997 = vadd.f32 %v995, %v996
    %v998 = vrot.slane %v997, 1
    %v999 = vadd.f32 %v997, %v998
    %vm1000 = vcmask 1040384
    %v1001 = vsel %vm1000, %v856, %v936
    %v1002 = vsel %vm1000, %v863, %v943
    %v1003 = vsel %vm1000, %v870, %v950
    %v1004 = vsel %vm1000, %v877, %v957
    %v1005 = vsel %vm1000, %v884, %v964
    %v1006 = vsel %vm1000, %v891, %v971
    %v1007 = vsel %vm1000, %v898, %v978
    %v1008 = vsel %vm1000, %v905, %v985
    %v1009 = vsel %vm1000, %v912, %v992
    %v1010 = vsel %vm1000, %v919, %v999
    %1011 = vmatpush.xpose.msra.mxu0 0.0
    %1012 = vmatpush.xpose.msra.mxu0 0.0
    %1013 = vmatpush.xpose.msra.mxu0 0.0
    %1014 = vmatpush.xpose.msra.mxu0 0.0
    %1015 = vmatpush.xpose.msra.mxu0 0.0
    %1016 = vmatpush.xpose.msra.mxu0 0.0
    %1017 = vmatpush.xpose.msra.mxu0 0.0
    %1018 = vmatpush.xpose.msra.mxu0 0.0
    %1019 = vmatpush.xpose.msra.mxu0 0.0
    %1020 = vmatpush.xpose.msra.mxu0 0.0
    %1021 = vmatpush.xpose.msra.mxu0 0.0
    %1022 = vmatpush.xpose.msra.mxu0 0.0
    %1023 = vmatpush.xpose.msra.mxu0 0.0
    %1024 = vmatpush.xpose.msra.mxu0 0.0
    %1025 = vmatpush.xpose.msra.mxu0 0.0
    %1026 = vmatpush.xpose.msra.mxu0 %v206
    %1027 = vmatmul.f32.gmra.mxu0 %v1001
    %v1028 = vpop.f32.mrf.mxu0
    %v1029 = vadd.f32 0.0, %v1028
    %1030 = vdwg.mxu0
    %1031 = vmatpush.xpose.msra.mxu0 0.0
    %1032 = vmatpush.xpose.msra.mxu0 0.0
    %1033 = vmatpush.xpose.msra.mxu0 0.0
    %1034 = vmatpush.xpose.msra.mxu0 0.0
    %1035 = vmatpush.xpose.msra.mxu0 0.0
    %1036 = vmatpush.xpose.msra.mxu0 0.0
    %1037 = vmatpush.xpose.msra.mxu0 0.0
    %1038 = vmatpush.xpose.msra.mxu0 0.0
    %1039 = vmatpush.xpose.msra.mxu0 0.0
    %1040 = vmatpush.xpose.msra.mxu0 0.0
    %1041 = vmatpush.xpose.msra.mxu0 0.0
    %1042 = vmatpush.xpose.msra.mxu0 0.0
    %1043 = vmatpush.xpose.msra.mxu0 0.0
    %1044 = vmatpush.xpose.msra.mxu0 0.0
    %1045 = vmatpush.xpose.msra.mxu0 0.0
    %1046 = vmatpush.xpose.msra.mxu0 %v207
    %1047 = vmatmul.f32.gmra.mxu0 %v1002
    %v1048 = vpop.f32.mrf.mxu0
    %v1049 = vadd.f32 %v1029, %v1048
    %1050 = vdwg.mxu0
    %1051 = vmatpush.xpose.msra.mxu0 0.0
    %1052 = vmatpush.xpose.msra.mxu0 0.0
    %1053 = vmatpush.xpose.msra.mxu0 0.0
    %1054 = vmatpush.xpose.msra.mxu0 0.0
    %1055 = vmatpush.xpose.msra.mxu0 0.0
    %1056 = vmatpush.xpose.msra.mxu0 0.0
    %1057 = vmatpush.xpose.msra.mxu0 0.0
    %1058 = vmatpush.xpose.msra.mxu0 0.0
    %1059 = vmatpush.xpose.msra.mxu0 0.0
    %1060 = vmatpush.xpose.msra.mxu0 0.0
    %1061 = vmatpush.xpose.msra.mxu0 0.0
    %1062 = vmatpush.xpose.msra.mxu0 0.0
    %1063 = vmatpush.xpose.msra.mxu0 0.0
    %1064 = vmatpush.xpose.msra.mxu0 0.0
    %1065 = vmatpush.xpose.msra.mxu0 0.0
    %1066 = vmatpush.xpose.msra.mxu0 %v208
    %1067 = vmatmul.f32.gmra.mxu0 %v1003
    %v1068 = vpop.f32.mrf.mxu0
    %v1069 = vadd.f32 %v1049, %v1068
    %1070 = vdwg.mxu0
    %1071 = vmatpush.xpose.msra.mxu0 0.0
    %1072 = vmatpush.xpose.msra.mxu0 0.0
    %1073 = vmatpush.xpose.msra.mxu0 0.0
    %1074 = vmatpush.xpose.msra.mxu0 0.0
    %1075 = vmatpush.xpose.msra.mxu0 0.0
    %1076 = vmatpush.xpose.msra.mxu0 0.0
    %1077 = vmatpush.xpose.msra.mxu0 0.0
    %1078 = vmatpush.xpose.msra.mxu0 0.0
    %1079 = vmatpush.xpose.msra.mxu0 0.0
    %1080 = vmatpush.xpose.msra.mxu0 0.0
    %1081 = vmatpush.xpose.msra.mxu0 0.0
    %1082 = vmatpush.xpose.msra.mxu0 0.0
    %1083 = vmatpush.xpose.msra.mxu0 0.0
    %1084 = vmatpush.xpose.msra.mxu0 0.0
    %1085 = vmatpush.xpose.msra.mxu0 0.0
    %1086 = vmatpush.xpose.msra.mxu0 %v209
    %1087 = vmatmul.f32.gmra.mxu0 %v1004
    %v1088 = vpop.f32.mrf.mxu0
    %v1089 = vadd.f32 %v1069, %v1088
    %1090 = vdwg.mxu0
    %1091 = vmatpush.xpose.msra.mxu0 0.0
    %1092 = vmatpush.xpose.msra.mxu0 0.0
    %1093 = vmatpush.xpose.msra.mxu0 0.0
    %1094 = vmatpush.xpose.msra.mxu0 0.0
    %1095 = vmatpush.xpose.msra.mxu0 0.0
    %1096 = vmatpush.xpose.msra.mxu0 0.0
    %1097 = vmatpush.xpose.msra.mxu0 0.0
    %1098 = vmatpush.xpose.msra.mxu0 0.0
    %1099 = vmatpush.xpose.msra.mxu0 0.0
    %1100 = vmatpush.xpose.msra.mxu0 0.0
    %1101 = vmatpush.xpose.msra.mxu0 0.0
    %1102 = vmatpush.xpose.msra.mxu0 0.0
    %1103 = vmatpush.xpose.msra.mxu0 0.0
    %1104 = vmatpush.xpose.msra.mxu0 0.0
    %1105 = vmatpush.xpose.msra.mxu0 0.0
    %1106 = vmatpush.xpose.msra.mxu0 %v210
    %1107 = vmatmul.f32.gmra.mxu0 %v1005
    %v1108 = vpop.f32.mrf.mxu0
    %v1109 = vadd.f32 %v1089, %v1108
    %1110 = vdwg.mxu0
    %1111 = vmatpush.xpose.msra.mxu0 0.0
    %1112 = vmatpush.xpose.msra.mxu0 0.0
    %1113 = vmatpush.xpose.msra.mxu0 0.0
    %1114 = vmatpush.xpose.msra.mxu0 0.0
    %1115 = vmatpush.xpose.msra.mxu0 0.0
    %1116 = vmatpush.xpose.msra.mxu0 0.0
    %1117 = vmatpush.xpose.msra.mxu0 0.0
    %1118 = vmatpush.xpose.msra.mxu0 0.0
    %1119 = vmatpush.xpose.msra.mxu0 0.0
    %1120 = vmatpush.xpose.msra.mxu0 0.0
    %1121 = vmatpush.xpose.msra.mxu0 0.0
    %1122 = vmatpush.xpose.msra.mxu0 0.0
    %1123 = vmatpush.xpose.msra.mxu0 0.0
    %1124 = vmatpush.xpose.msra.mxu0 0.0
    %1125 = vmatpush.xpose.msra.mxu0 0.0
    %1126 = vmatpush.xpose.msra.mxu0 %v211
    %1127 = vmatmul.f32.gmra.mxu0 %v1006
    %v1128 = vpop.f32.mrf.mxu0
    %v1129 = vadd.f32 %v1109, %v1128
    %1130 = vdwg.mxu0
    %1131 = vmatpush.xpose.msra.mxu0 0.0
    %1132 = vmatpush.xpose.msra.mxu0 0.0
    %1133 = vmatpush.xpose.msra.mxu0 0.0
    %1134 = vmatpush.xpose.msra.mxu0 0.0
    %1135 = vmatpush.xpose.msra.mxu0 0.0
    %1136 = vmatpush.xpose.msra.mxu0 0.0
    %1137 = vmatpush.xpose.msra.mxu0 0.0
    %1138 = vmatpush.xpose.msra.mxu0 0.0
    %1139 = vmatpush.xpose.msra.mxu0 0.0
    %1140 = vmatpush.xpose.msra.mxu0 0.0
    %1141 = vmatpush.xpose.msra.mxu0 0.0
    %1142 = vmatpush.xpose.msra.mxu0 0.0
    %1143 = vmatpush.xpose.msra.mxu0 0.0
    %1144 = vmatpush.xpose.msra.mxu0 0.0
    %1145 = vmatpush.xpose.msra.mxu0 0.0
    %1146 = vmatpush.xpose.msra.mxu0 %v212
    %1147 = vmatmul.f32.gmra.mxu0 %v1007
    %v1148 = vpop.f32.mrf.mxu0
    %v1149 = vadd.f32 %v1129, %v1148
    %1150 = vdwg.mxu0
    %1151 = vmatpush.xpose.msra.mxu0 0.0
    %1152 = vmatpush.xpose.msra.mxu0 0.0
    %1153 = vmatpush.xpose.msra.mxu0 0.0
    %1154 = vmatpush.xpose.msra.mxu0 0.0
    %1155 = vmatpush.xpose.msra.mxu0 0.0
    %1156 = vmatpush.xpose.msra.mxu0 0.0
    %1157 = vmatpush.xpose.msra.mxu0 0.0
    %1158 = vmatpush.xpose.msra.mxu0 0.0
    %1159 = vmatpush.xpose.msra.mxu0 0.0
    %1160 = vmatpush.xpose.msra.mxu0 0.0
    %1161 = vmatpush.xpose.msra.mxu0 0.0
    %1162 = vmatpush.xpose.msra.mxu0 0.0
    %1163 = vmatpush.xpose.msra.mxu0 0.0
    %1164 = vmatpush.xpose.msra.mxu0 0.0
    %1165 = vmatpush.xpose.msra.mxu0 0.0
    %1166 = vmatpush.xpose.msra.mxu0 %v213
    %1167 = vmatmul.f32.gmra.mxu0 %v1008
    %v1168 = vpop.f32.mrf.mxu0
    %v1169 = vadd.f32 %v1149, %v1168
    %1170 = vdwg.mxu0
    %1171 = vmatpush.xpose.msra.mxu0 0.0
    %1172 = vmatpush.xpose.msra.mxu0 0.0
    %1173 = vmatpush.xpose.msra.mxu0 0.0
    %1174 = vmatpush.xpose.msra.mxu0 0.0
    %1175 = vmatpush.xpose.msra.mxu0 0.0
    %1176 = vmatpush.xpose.msra.mxu0 0.0
    %1177 = vmatpush.xpose.msra.mxu0 0.0
    %1178 = vmatpush.xpose.msra.mxu0 0.0
    %1179 = vmatpush.xpose.msra.mxu0 0.0
    %1180 = vmatpush.xpose.msra.mxu0 0.0
    %1181 = vmatpush.xpose.msra.mxu0 0.0
    %1182 = vmatpush.xpose.msra.mxu0 0.0
    %1183 = vmatpush.xpose.msra.mxu0 0.0
    %1184 = vmatpush.xpose.msra.mxu0 0.0
    %1185 = vmatpush.xpose.msra.mxu0 0.0
    %1186 = vmatpush.xpose.msra.mxu0 %v214
    %1187 = vmatmul.f32.gmra.mxu0 %v1009
    %v1188 = vpop.f32.mrf.mxu0
    %v1189 = vadd.f32 %v1169, %v1188
    %1190 = vdwg.mxu0
    %1191 = vmatpush.xpose.msra.mxu0 0.0
    %1192 = vmatpush.xpose.msra.mxu0 0.0
    %1193 = vmatpush.xpose.msra.mxu0 0.0
    %1194 = vmatpush.xpose.msra.mxu0 0.0
    %1195 = vmatpush.xpose.msra.mxu0 0.0
    %1196 = vmatpush.xpose.msra.mxu0 0.0
    %1197 = vmatpush.xpose.msra.mxu0 0.0
    %1198 = vmatpush.xpose.msra.mxu0 0.0
    %1199 = vmatpush.xpose.msra.mxu0 0.0
    %1200 = vmatpush.xpose.msra.mxu0 0.0
    %1201 = vmatpush.xpose.msra.mxu0 0.0
    %1202 = vmatpush.xpose.msra.mxu0 0.0
    %1203 = vmatpush.xpose.msra.mxu0 0.0
    %1204 = vmatpush.xpose.msra.mxu0 0.0
    %1205 = vmatpush.xpose.msra.mxu0 0.0
    %1206 = vmatpush.xpose.msra.mxu0 %v215
    %1207 = vmatmul.f32.gmra.mxu0 %v1010
    %v1208 = vpop.f32.mrf.mxu0
    %v1209 = vadd.f32 %v1189, %v1208
    %1210 = vdwg.mxu0
    %v1211 = vmul.f32 %v1209, 0.0033333334
    %v1212 = vmul.f32 %v1211, %v1211
    %v1214 = vrot.slane %v1212, 7
    %v1216 = vsub.f32 %v1211, %v1214
    %v1217 = vmax.f32 %v1216, 0.0
    %v1218 = vadd.f32 %v1217, 1e-05
    %v1219 = vrsqrt.pop %v1218
    %v1220 = vmul.f32 %v1219, %v1218
    %v1221 = vmul.f32 %v1220, %v1219
    %v1222 = vmul.f32 0.5, %v1221
    %v1223 = vsub.f32 1.5, %v1222
    %v1224 = vmul.f32 %v1219, %v1223
    %vm1225 = vweird.f32 %v1218
    %vm1226 = vweird.f32 %v1219
    %vm1227 = vmor %vm1225, %vm1226
    %v1228 = vsel %vm1227, %v1219, %v1224
    %v1230 = vrot.slane %v1228, 1
    %v1232 = vmul.f32 %v40, %v1230
    %v1233 = vmul.f32 %v1211, %v1232
    %v1235 = vrot.slane %v1233, 7
    %v1237 = vsub.f32 %v40, %v1235
    %v1238 = vsel %vm1000, %v1232, %v1237
    %vm1239 = vcmask 64512
    %v1241 = vsel %vm1239, %v1238, 0
    %1243 = vmatpush.msra.mxu0 0.0
    %1244 = vmatpush.msra.mxu0 0.0
    %1245 = vmatpush.msra.mxu0 0.0
    %1246 = vmatpush.msra.mxu0 0.0
    %1247 = vmatpush.msra.mxu0 0.0
    %1248 = vmatpush.msra.mxu0 0.0
    %1249 = vmatpush.msra.mxu0 0.0
    %1250 = vmatpush.msra.mxu0 0.0
    %1251 = vmatpush.msra.mxu0 0.0
    %1252 = vmatpush.msra.mxu0 0.0
    %1253 = vmatpush.msra.mxu0 0.0
    %1254 = vmatpush.msra.mxu0 0.0
    %1255 = vmatpush.msra.mxu0 0.0
    %1256 = vmatpush.msra.mxu0 0.0
    %1257 = vmatpush.msra.mxu0 0.0
    %1258 = vmatpush.msra.mxu0 %v206
    %1259 = vmatmul.f32.gmra.mxu0 %v1241
    %v1260 = vpop.f32.mrf.mxu0
    %v1261 = vadd.f32 0.0, %v1260
    %1262 = vdwg.mxu0
    %1263 = vmatpush.msra.mxu0 0.0
    %1264 = vmatpush.msra.mxu0 0.0
    %1265 = vmatpush.msra.mxu0 0.0
    %1266 = vmatpush.msra.mxu0 0.0
    %1267 = vmatpush.msra.mxu0 0.0
    %1268 = vmatpush.msra.mxu0 0.0
    %1269 = vmatpush.msra.mxu0 0.0
    %1270 = vmatpush.msra.mxu0 0.0
    %1271 = vmatpush.msra.mxu0 0.0
    %1272 = vmatpush.msra.mxu0 0.0
    %1273 = vmatpush.msra.mxu0 0.0
    %1274 = vmatpush.msra.mxu0 0.0
    %1275 = vmatpush.msra.mxu0 0.0
    %1276 = vmatpush.msra.mxu0 0.0
    %1277 = vmatpush.msra.mxu0 0.0
    %1278 = vmatpush.msra.mxu0 %v207
    %1279 = vmatmul.f32.gmra.mxu0 %v1241
    %v1280 = vpop.f32.mrf.mxu0
    %v1281 = vadd.f32 0.0, %v1280
    %1282 = vdwg.mxu0
    %1283 = vmatpush.msra.mxu0 0.0
    %1284 = vmatpush.msra.mxu0 0.0
    %1285 = vmatpush.msra.mxu0 0.0
    %1286 = vmatpush.msra.mxu0 0.0
    %1287 = vmatpush.msra.mxu0 0.0
    %1288 = vmatpush.msra.mxu0 0.0
    %1289 = vmatpush.msra.mxu0 0.0
    %1290 = vmatpush.msra.mxu0 0.0
    %1291 = vmatpush.msra.mxu0 0.0
    %1292 = vmatpush.msra.mxu0 0.0
    %1293 = vmatpush.msra.mxu0 0.0
    %1294 = vmatpush.msra.mxu0 0.0
    %1295 = vmatpush.msra.mxu0 0.0
    %1296 = vmatpush.msra.mxu0 0.0
    %1297 = vmatpush.msra.mxu0 0.0
    %1298 = vmatpush.msra.mxu0 %v208
    %1299 = vmatmul.f32.gmra.mxu0 %v1241
    %v1300 = vpop.f32.mrf.mxu0
    %v1301 = vadd.f32 0.0, %v1300
    %1302 = vdwg.mxu0
    %1303 = vmatpush.msra.mxu0 0.0
    %1304 = vmatpush.msra.mxu0 0.0
    %1305 = vmatpush.msra.mxu0 0.0
    %1306 = vmatpush.msra.mxu0 0.0
    %1307 = vmatpush.msra.mxu0 0.0
    %1308 = vmatpush.msra.mxu0 0.0
    %1309 = vmatpush.msra.mxu0 0.0
    %1310 = vmatpush.msra.mxu0 0.0
    %1311 = vmatpush.msra.mxu0 0.0
    %1312 = vmatpush.msra.mxu0 0.0
    %1313 = vmatpush.msra.mxu0 0.0
    %1314 = vmatpush.msra.mxu0 0.0
    %1315 = vmatpush.msra.mxu0 0.0
    %1316 = vmatpush.msra.mxu0 0.0
    %1317 = vmatpush.msra.mxu0 0.0
    %1318 = vmatpush.msra.mxu0 %v209
    %1319 = vmatmul.f32.gmra.mxu0 %v1241
    %v1320 = vpop.f32.mrf.mxu0
    %v1321 = vadd.f32 0.0, %v1320
    %1322 = vdwg.mxu0
    %1323 = vmatpush.msra.mxu0 0.0
    %1324 = vmatpush.msra.mxu0 0.0
    %1325 = vmatpush.msra.mxu0 0.0
    %1326 = vmatpush.msra.mxu0 0.0
    %1327 = vmatpush.msra.mxu0 0.0
    %1328 = vmatpush.msra.mxu0 0.0
    %1329 = vmatpush.msra.mxu0 0.0
    %1330 = vmatpush.msra.mxu0 0.0
    %1331 = vmatpush.msra.mxu0 0.0
    %1332 = vmatpush.msra.mxu0 0.0
    %1333 = vmatpush.msra.mxu0 0.0
    %1334 = vmatpush.msra.mxu0 0.0
    %1335 = vmatpush.msra.mxu0 0.0
    %1336 = vmatpush.msra.mxu0 0.0
    %1337 = vmatpush.msra.mxu0 0.0
    %1338 = vmatpush.msra.mxu0 %v210
    %1339 = vmatmul.f32.gmra.mxu0 %v1241
    %v1340 = vpop.f32.mrf.mxu0
    %v1341 = vadd.f32 0.0, %v1340
    %1342 = vdwg.mxu0
    %1343 = vmatpush.msra.mxu0 0.0
    %1344 = vmatpush.msra.mxu0 0.0
    %1345 = vmatpush.msra.mxu0 0.0
    %1346 = vmatpush.msra.mxu0 0.0
    %1347 = vmatpush.msra.mxu0 0.0
    %1348 = vmatpush.msra.mxu0 0.0
    %1349 = vmatpush.msra.mxu0 0.0
    %1350 = vmatpush.msra.mxu0 0.0
    %1351 = vmatpush.msra.mxu0 0.0
    %1352 = vmatpush.msra.mxu0 0.0
    %1353 = vmatpush.msra.mxu0 0.0
    %1354 = vmatpush.msra.mxu0 0.0
    %1355 = vmatpush.msra.mxu0 0.0
    %1356 = vmatpush.msra.mxu0 0.0
    %1357 = vmatpush.msra.mxu0 0.0
    %1358 = vmatpush.msra.mxu0 %v211
    %1359 = vmatmul.f32.gmra.mxu0 %v1241
    %v1360 = vpop.f32.mrf.mxu0
    %v1361 = vadd.f32 0.0, %v1360
    %1362 = vdwg.mxu0
    %1363 = vmatpush.msra.mxu0 0.0
    %1364 = vmatpush.msra.mxu0 0.0
    %1365 = vmatpush.msra.mxu0 0.0
    %1366 = vmatpush.msra.mxu0 0.0
    %1367 = vmatpush.msra.mxu0 0.0
    %1368 = vmatpush.msra.mxu0 0.0
    %1369 = vmatpush.msra.mxu0 0.0
    %1370 = vmatpush.msra.mxu0 0.0
    %1371 = vmatpush.msra.mxu0 0.0
    %1372 = vmatpush.msra.mxu0 0.0
    %1373 = vmatpush.msra.mxu0 0.0
    %1374 = vmatpush.msra.mxu0 0.0
    %1375 = vmatpush.msra.mxu0 0.0
    %1376 = vmatpush.msra.mxu0 0.0
    %1377 = vmatpush.msra.mxu0 0.0
    %1378 = vmatpush.msra.mxu0 %v212
    %1379 = vmatmul.f32.gmra.mxu0 %v1241
    %v1380 = vpop.f32.mrf.mxu0
    %v1381 = vadd.f32 0.0, %v1380
    %1382 = vdwg.mxu0
    %1383 = vmatpush.msra.mxu0 0.0
    %1384 = vmatpush.msra.mxu0 0.0
    %1385 = vmatpush.msra.mxu0 0.0
    %1386 = vmatpush.msra.mxu0 0.0
    %1387 = vmatpush.msra.mxu0 0.0
    %1388 = vmatpush.msra.mxu0 0.0
    %1389 = vmatpush.msra.mxu0 0.0
    %1390 = vmatpush.msra.mxu0 0.0
    %1391 = vmatpush.msra.mxu0 0.0
    %1392 = vmatpush.msra.mxu0 0.0
    %1393 = vmatpush.msra.mxu0 0.0
    %1394 = vmatpush.msra.mxu0 0.0
    %1395 = vmatpush.msra.mxu0 0.0
    %1396 = vmatpush.msra.mxu0 0.0
    %1397 = vmatpush.msra.mxu0 0.0
    %1398 = vmatpush.msra.mxu0 %v213
    %1399 = vmatmul.f32.gmra.mxu0 %v1241
    %v1400 = vpop.f32.mrf.mxu0
    %v1401 = vadd.f32 0.0, %v1400
    %1402 = vdwg.mxu0
    %1403 = vmatpush.msra.mxu0 0.0
    %1404 = vmatpush.msra.mxu0 0.0
    %1405 = vmatpush.msra.mxu0 0.0
    %1406 = vmatpush.msra.mxu0 0.0
    %1407 = vmatpush.msra.mxu0 0.0
    %1408 = vmatpush.msra.mxu0 0.0
    %1409 = vmatpush.msra.mxu0 0.0
    %1410 = vmatpush.msra.mxu0 0.0
    %1411 = vmatpush.msra.mxu0 0.0
    %1412 = vmatpush.msra.mxu0 0.0
    %1413 = vmatpush.msra.mxu0 0.0
    %1414 = vmatpush.msra.mxu0 0.0
    %1415 = vmatpush.msra.mxu0 0.0
    %1416 = vmatpush.msra.mxu0 0.0
    %1417 = vmatpush.msra.mxu0 0.0
    %1418 = vmatpush.msra.mxu0 %v214
    %1419 = vmatmul.f32.gmra.mxu0 %v1241
    %v1420 = vpop.f32.mrf.mxu0
    %v1421 = vadd.f32 0.0, %v1420
    %1422 = vdwg.mxu0
    %1423 = vmatpush.msra.mxu0 0.0
    %1424 = vmatpush.msra.mxu0 0.0
    %1425 = vmatpush.msra.mxu0 0.0
    %1426 = vmatpush.msra.mxu0 0.0
    %1427 = vmatpush.msra.mxu0 0.0
    %1428 = vmatpush.msra.mxu0 0.0
    %1429 = vmatpush.msra.mxu0 0.0
    %1430 = vmatpush.msra.mxu0 0.0
    %1431 = vmatpush.msra.mxu0 0.0
    %1432 = vmatpush.msra.mxu0 0.0
    %1433 = vmatpush.msra.mxu0 0.0
    %1434 = vmatpush.msra.mxu0 0.0
    %1435 = vmatpush.msra.mxu0 0.0
    %1436 = vmatpush.msra.mxu0 0.0
    %1437 = vmatpush.msra.mxu0 0.0
    %1438 = vmatpush.msra.mxu0 %v215
    %1439 = vmatmul.f32.gmra.mxu0 %v1241
    %v1440 = vpop.f32.mrf.mxu0
    %v1441 = vadd.f32 0.0, %v1440
    %1442 = vdwg.mxu0
    %v1443 = vperm.slane %v1261, 0
    %v1444 = vperm.slane %v1281, 0
    %v1445 = vperm.slane %v1301, 0
    %v1446 = vperm.slane %v1321, 0
    %v1447 = vperm.slane %v1341, 0
    %v1448 = vperm.slane %v1361, 0
    %v1449 = vperm.slane %v1381, 0
    %v1450 = vperm.slane %v1401, 0
    %v1451 = vperm.slane %v1421, 0
    %v1452 = vperm.slane %v1441, 0
    %v1453 = vmul.f32 %v475, %v1443
    %v1454 = vmul.f32 %v843, %v1444
    %v1455 = vmul.f32 %v806, %v1445
    %v1456 = vmul.f32 %v844, %v1446
    %v1457 = vmul.f32 %v817, %v1447
    %v1458 = vmul.f32 %v845, %v1448
    %v1459 = vmul.f32 %v828, %v1449
    %v1460 = vmul.f32 %v846, %v1450
    %v1461 = vmul.f32 %v839, %v1451
    %v1462 = vmul.f32 %v848, %v1452
    %v1463 = vperm.slane %v1261, 1
    %v1464 = vperm.slane %v1281, 1
    %v1465 = vperm.slane %v1301, 1
    %v1466 = vperm.slane %v1321, 1
    %v1467 = vperm.slane %v1341, 1
    %v1468 = vperm.slane %v1361, 1
    %v1469 = vperm.slane %v1381, 1
    %v1470 = vperm.slane %v1401, 1
    %v1471 = vperm.slane %v1421, 1
    %v1472 = vperm.slane %v1441, 1
    %v1473 = vadd.f32 %v1453, %v1463
    %v1474 = vadd.f32 %v1454, %v1464
    %v1475 = vadd.f32 %v1455, %v1465
    %v1476 = vadd.f32 %v1456, %v1466
    %v1477 = vadd.f32 %v1457, %v1467
    %v1478 = vadd.f32 %v1458, %v1468
    %v1479 = vadd.f32 %v1459, %v1469
    %v1480 = vadd.f32 %v1460, %v1470
    %v1481 = vadd.f32 %v1461, %v1471
    %v1482 = vadd.f32 %v1462, %v1472
    %v1483 = vmax.f32 %v1473, 0.0
    %v1484 = vmax.f32 %v1474, 0.0
    %v1485 = vmax.f32 %v1475, 0.0
    %v1486 = vmax.f32 %v1476, 0.0
    %v1487 = vmax.f32 %v1477, 0.0
    %v1488 = vmax.f32 %v1478, 0.0
    %v1489 = vmax.f32 %v1479, 0.0
    %v1490 = vmax.f32 %v1480, 0.0
    %v1491 = vmax.f32 %v1481, 0.0
    %v1492 = vmax.f32 %v1482, 0.0
    %v1493 = vpack.c.bf16 %v1484, %v1483
    %v1494 = vpack.c.bf16 %v1486, %v1485
    %v1495 = vpack.c.bf16 %v1488, %v1487
    %v1496 = vpack.c.bf16 %v1490, %v1489
    %v1497 = vpack.c.bf16 %v1492, %v1491
    %v1498 = vld [vmem:[%s2] sm:$0xff]
    %v1499 = vld [vmem:[%s2 + $0x8] sm:$0xff]
    %v1500 = vld [vmem:[%s2 + $0x10] sm:$0xff]
    %v1501 = vld [vmem:[%s2 + $0x18] sm:$0xff]
    %v1502 = vld [vmem:[%s2 + $0x20] sm:$0xff]
    %v1503 = vld [vmem:[%s2 + $0x28] sm:$0xff]
    %v1504 = vld [vmem:[%s2 + $0x30] sm:$0xff]
    %v1505 = vld [vmem:[%s2 + $0x38] sm:$0xff]
    %v1506 = vld [vmem:[%s2 + $0x40] sm:$0xff]
    %v1507 = vld [vmem:[%s2 + $0x48] sm:$0xff]
    %v1508 = vld [vmem:[%s2 + $0x50] sm:$0xff]
    %v1509 = vld [vmem:[%s2 + $0x58] sm:$0xff]
    %v1510 = vld [vmem:[%s2 + $0x60] sm:$0xff]
    %v1511 = vld [vmem:[%s2 + $0x68] sm:$0xff]
    %v1512 = vld [vmem:[%s2 + $0x70] sm:$0xff]
    %v1513 = vld [vmem:[%s2 + $0x78] sm:$0xff]
    %v1514 = vld [vmem:[%s2 + $0x80] sm:$0xff]
    %v1515 = vld [vmem:[%s2 + $0x88] sm:$0xff]
    %v1516 = vld [vmem:[%s2 + $0x90] sm:$0xff]
    %v1517 = vld [vmem:[%s2 + $0x98] sm:$0xff]
    %v1518 = vld [vmem:[%s2 + $0xa0] sm:$0xff]
    %v1519 = vld [vmem:[%s2 + $0xa8] sm:$0xff]
    %v1520 = vld [vmem:[%s2 + $0xb0] sm:$0xff]
    %v1521 = vld [vmem:[%s2 + $0xb8] sm:$0xff]
    %v1522 = vld [vmem:[%s2 + $0xc0] sm:$0xff]
    %v1523 = vld [vmem:[%s2 + $0xc8] sm:$0xff]
    %v1524 = vld [vmem:[%s2 + $0xd0] sm:$0xff]
    %v1525 = vld [vmem:[%s2 + $0xd8] sm:$0xff]
    %v1526 = vld [vmem:[%s2 + $0xe0] sm:$0xff]
    %v1527 = vld [vmem:[%s2 + $0xe8] sm:$0xff]
    %v1528 = vld [vmem:[%s2 + $0xf0] sm:$0xff]
    %v1529 = vld [vmem:[%s2 + $0xf8] sm:$0xff]
    %v1530 = vld [vmem:[%s2 + $0x100] sm:$0xff]
    %v1531 = vld [vmem:[%s2 + $0x108] sm:$0xff]
    %v1532 = vld [vmem:[%s2 + $0x110] sm:$0xff]
    %v1533 = vld [vmem:[%s2 + $0x118] sm:$0xff]
    %v1534 = vld [vmem:[%s2 + $0x120] sm:$0xff]
    %v1535 = vld [vmem:[%s2 + $0x128] sm:$0xff]
    %v1536 = vld [vmem:[%s2 + $0x130] sm:$0xff]
    %v1537 = vld [vmem:[%s2 + $0x138] sm:$0xff]
    %v1538 = vld [vmem:[%s2 + $0x140] sm:$0xff]
    %v1539 = vld [vmem:[%s2 + $0x148] sm:$0xff]
    %v1540 = vld [vmem:[%s2 + $0x150] sm:$0xff]
    %v1541 = vld [vmem:[%s2 + $0x158] sm:$0xff]
    %v1542 = vld [vmem:[%s2 + $0x160] sm:$0xff]
    %v1543 = vld [vmem:[%s2 + $0x168] sm:$0xff]
    %v1544 = vld [vmem:[%s2 + $0x170] sm:$0xff]
    %v1545 = vld [vmem:[%s2 + $0x178] sm:$0xff]
    %v1546 = vld [vmem:[%s2 + $0x180] sm:$0xff]
    %v1547 = vld [vmem:[%s2 + $0x188] sm:$0xff]
    %v1548 = vld [vmem:[%s2 + $0x190] sm:$0xff]
    %v1549 = vld [vmem:[%s2 + $0x198] sm:$0xff]
    %v1550 = vld [vmem:[%s2 + $0x1a0] sm:$0xff]
    %v1551 = vld [vmem:[%s2 + $0x1a8] sm:$0xff]
    %v1552 = vld [vmem:[%s2 + $0x1b0] sm:$0xff]
    %v1553 = vld [vmem:[%s2 + $0x1b8] sm:$0xff]
    %v1554 = vld [vmem:[%s2 + $0x1c0] sm:$0xff]
    %v1555 = vld [vmem:[%s2 + $0x1c8] sm:$0xff]
    %v1558 = vunpack.c.l.b16 %v1493
    %v1559 = vunpack.c.h.b16 %v1493
    %v1560 = vunpack.c.l.b16 %v1494
    %v1561 = vunpack.c.h.b16 %v1494
    %v1562 = vpack.c.b16 %v1558, %v1558
    %v1563 = vpack.c.b16 %v1559, %v1559
    %v1564 = vpack.c.b16 %v1560, %v1560
    %v1565 = vpack.c.b16 %v1561, %v1561
    %v1627 = vunpack.c.l.b16 %v1498
    %v1628 = vunpack.c.h.b16 %v1498
    %v1629 = vunpack.c.l.b16 %v1499
    %v1630 = vunpack.c.h.b16 %v1499
    %v1631 = vunpack.c.l.b16 %v1500
    %v1632 = vunpack.c.h.b16 %v1500
    %v1633 = vunpack.c.l.b16 %v1501
    %v1634 = vunpack.c.h.b16 %v1501
    %v1635 = vunpack.c.l.b16 %v1502
    %v1636 = vunpack.c.h.b16 %v1502
    %v1637 = vunpack.c.l.b16 %v1503
    %v1638 = vunpack.c.h.b16 %v1503
    %v1639 = vunpack.c.l.b16 %v1504
    %v1640 = vunpack.c.h.b16 %v1504
    %v1641 = vunpack.c.l.b16 %v1505
    %v1642 = vunpack.c.h.b16 %v1505
    %v1643 = vunpack.c.l.b16 %v1506
    %v1644 = vunpack.c.h.b16 %v1506
    %v1645 = vunpack.c.l.b16 %v1507
    %v1646 = vunpack.c.h.b16 %v1507
    %v1647 = vunpack.c.l.b16 %v1508
    %v1648 = vunpack.c.h.b16 %v1508
    %v1649 = vunpack.c.l.b16 %v1509
    %v1650 = vunpack.c.h.b16 %v1509
    %v1651 = vunpack.c.l.b16 %v1510
    %v1652 = vunpack.c.h.b16 %v1510
    %v1653 = vunpack.c.l.b16 %v1511
    %v1654 = vunpack.c.h.b16 %v1511
    %v1655 = vunpack.c.l.b16 %v1512
    %v1656 = vunpack.c.h.b16 %v1512
    %v1657 = vunpack.c.l.b16 %v1513
    %v1658 = vunpack.c.h.b16 %v1513
    %v1659 = vunpack.c.l.b16 %v1514
    %v1660 = vunpack.c.h.b16 %v1514
    %v1661 = vunpack.c.l.b16 %v1515
    %v1662 = vunpack.c.h.b16 %v1515
    %v1663 = vunpack.c.l.b16 %v1516
    %v1664 = vunpack.c.h.b16 %v1516
    %v1665 = vunpack.c.l.b16 %v1517
    %v1666 = vunpack.c.h.b16 %v1517
    %v1667 = vunpack.c.l.b16 %v1518
    %v1668 = vunpack.c.h.b16 %v1518
    %v1669 = vunpack.c.l.b16 %v1519
    %v1670 = vunpack.c.h.b16 %v1519
    %v1671 = vunpack.c.l.b16 %v1520
    %v1672 = vunpack.c.h.b16 %v1520
    %v1673 = vunpack.c.l.b16 %v1521
    %v1674 = vunpack.c.h.b16 %v1521
    %v1675 = vunpack.c.l.b16 %v1522
    %v1676 = vunpack.c.h.b16 %v1522
    %v1677 = vunpack.c.l.b16 %v1523
    %v1678 = vunpack.c.h.b16 %v1523
    %v1679 = vunpack.c.l.b16 %v1524
    %v1680 = vunpack.c.h.b16 %v1524
    %v1681 = vunpack.c.l.b16 %v1525
    %v1682 = vunpack.c.h.b16 %v1525
    %v1683 = vunpack.c.l.b16 %v1526
    %v1684 = vunpack.c.h.b16 %v1526
    %v1685 = vunpack.c.l.b16 %v1527
    %v1686 = vunpack.c.h.b16 %v1527
    %v1687 = vunpack.c.l.b16 %v1528
    %v1688 = vunpack.c.h.b16 %v1528
    %v1689 = vunpack.c.l.b16 %v1529
    %v1690 = vunpack.c.h.b16 %v1529
    %v1691 = vunpack.c.l.b16 %v1530
    %v1692 = vunpack.c.h.b16 %v1530
    %v1693 = vunpack.c.l.b16 %v1531
    %v1694 = vunpack.c.h.b16 %v1531
    %v1695 = vunpack.c.l.b16 %v1532
    %v1696 = vunpack.c.h.b16 %v1532
    %v1697 = vunpack.c.l.b16 %v1533
    %v1698 = vunpack.c.h.b16 %v1533
    %v1699 = vunpack.c.l.b16 %v1534
    %v1700 = vunpack.c.h.b16 %v1534
    %v1701 = vunpack.c.l.b16 %v1535
    %v1702 = vunpack.c.h.b16 %v1535
    %v1703 = vunpack.c.l.b16 %v1536
    %v1704 = vunpack.c.h.b16 %v1536
    %v1705 = vunpack.c.l.b16 %v1537
    %v1706 = vunpack.c.h.b16 %v1537
    %v1707 = vunpack.c.l.b16 %v1538
    %v1708 = vunpack.c.h.b16 %v1538
    %v1709 = vunpack.c.l.b16 %v1539
    %v1710 = vunpack.c.h.b16 %v1539
    %v1711 = vunpack.c.l.b16 %v1540
    %v1712 = vunpack.c.h.b16 %v1540
    %v1713 = vunpack.c.l.b16 %v1541
    %v1714 = vunpack.c.h.b16 %v1541
    %v1715 = vunpack.c.l.b16 %v1542
    %v1716 = vunpack.c.h.b16 %v1542
    %v1717 = vunpack.c.l.b16 %v1543
    %v1718 = vunpack.c.h.b16 %v1543
    %v1719 = vunpack.c.l.b16 %v1544
    %v1720 = vunpack.c.h.b16 %v1544
    %v1721 = vunpack.c.l.b16 %v1545
    %v1722 = vunpack.c.h.b16 %v1545
    %v1723 = vunpack.c.l.b16 %v1546
    %v1724 = vunpack.c.h.b16 %v1546
    %v1725 = vunpack.c.l.b16 %v1547
    %v1726 = vunpack.c.h.b16 %v1547
    %v1727 = vunpack.c.l.b16 %v1548
    %v1728 = vunpack.c.h.b16 %v1548
    %v1729 = vunpack.c.l.b16 %v1549
    %v1730 = vunpack.c.h.b16 %v1549
    %v1731 = vunpack.c.l.b16 %v1550
    %v1732 = vunpack.c.h.b16 %v1550
    %v1733 = vunpack.c.l.b16 %v1551
    %v1734 = vunpack.c.h.b16 %v1551
    %v1735 = vunpack.c.l.b16 %v1552
    %v1736 = vunpack.c.h.b16 %v1552
    %v1737 = vunpack.c.l.b16 %v1553
    %v1738 = vunpack.c.h.b16 %v1553
    %v1739 = vunpack.c.l.b16 %v1554
    %v1740 = vunpack.c.h.b16 %v1554
    %v1741 = vunpack.c.l.b16 %v1555
    %v1742 = vunpack.c.h.b16 %v1555
    %v1743 = vpack.c.b16 %v1629, %v1627
    %v1744 = vpack.c.b16 %v1630, %v1628
    %v1745 = vpack.c.b16 %v1633, %v1631
    %v1746 = vpack.c.b16 %v1634, %v1632
    %v1747 = vpack.c.b16 %v1637, %v1635
    %v1748 = vpack.c.b16 %v1638, %v1636
    %v1749 = vpack.c.b16 %v1641, %v1639
    %v1750 = vpack.c.b16 %v1642, %v1640
    %v1751 = vpack.c.b16 %v1645, %v1643
    %v1752 = vpack.c.b16 %v1646, %v1644
    %v1753 = vpack.c.b16 %v1649, %v1647
    %v1754 = vpack.c.b16 %v1650, %v1648
    %v1755 = vpack.c.b16 %v1653, %v1651
    %v1756 = vpack.c.b16 %v1654, %v1652
    %v1757 = vpack.c.b16 %v1657, %v1655
    %v1758 = vpack.c.b16 %v1658, %v1656
    %v1759 = vpack.c.b16 %v1661, %v1659
    %v1760 = vpack.c.b16 %v1662, %v1660
    %v1761 = vpack.c.b16 %v1665, %v1663
    %v1762 = vpack.c.b16 %v1666, %v1664
    %v1763 = vpack.c.b16 %v1669, %v1667
    %v1764 = vpack.c.b16 %v1670, %v1668
    %v1765 = vpack.c.b16 %v1673, %v1671
    %v1766 = vpack.c.b16 %v1674, %v1672
    %v1767 = vpack.c.b16 %v1677, %v1675
    %v1768 = vpack.c.b16 %v1678, %v1676
    %v1769 = vpack.c.b16 %v1681, %v1679
    %v1770 = vpack.c.b16 %v1682, %v1680
    %v1771 = vpack.c.b16 %v1685, %v1683
    %v1772 = vpack.c.b16 %v1686, %v1684
    %v1773 = vpack.c.b16 %v1689, %v1687
    %v1774 = vpack.c.b16 %v1690, %v1688
    %v1775 = vpack.c.b16 %v1693, %v1691
    %v1776 = vpack.c.b16 %v1694, %v1692
    %v1777 = vpack.c.b16 %v1697, %v1695
    %v1778 = vpack.c.b16 %v1698, %v1696
    %v1779 = vpack.c.b16 %v1701, %v1699
    %v1780 = vpack.c.b16 %v1702, %v1700
    %v1781 = vpack.c.b16 %v1705, %v1703
    %v1782 = vpack.c.b16 %v1706, %v1704
    %v1783 = vpack.c.b16 %v1709, %v1707
    %v1784 = vpack.c.b16 %v1710, %v1708
    %v1785 = vpack.c.b16 %v1713, %v1711
    %v1786 = vpack.c.b16 %v1714, %v1712
    %v1787 = vpack.c.b16 %v1717, %v1715
    %v1788 = vpack.c.b16 %v1718, %v1716
    %v1789 = vpack.c.b16 %v1721, %v1719
    %v1790 = vpack.c.b16 %v1722, %v1720
    %v1791 = vpack.c.b16 %v1725, %v1723
    %v1792 = vpack.c.b16 %v1726, %v1724
    %v1793 = vpack.c.b16 %v1729, %v1727
    %v1794 = vpack.c.b16 %v1730, %v1728
    %v1795 = vpack.c.b16 %v1733, %v1731
    %v1796 = vpack.c.b16 %v1734, %v1732
    %v1797 = vpack.c.b16 %v1737, %v1735
    %v1798 = vpack.c.b16 %v1738, %v1736
    %v1799 = vpack.c.b16 %v1741, %v1739
    %v1800 = vpack.c.b16 %v1742, %v1740
    %v1860 = vsel %vm827, %v1565, 0
    %1862 = vmatpush.bf16.msra.mxu0 %v1757
    %1863 = vmatpush.bf16.msra.mxu0 %v1755
    %1864 = vmatpush.bf16.msra.mxu0 %v1753
    %1865 = vmatpush.bf16.msra.mxu0 %v1751
    %1866 = vmatpush.bf16.msra.mxu0 %v1749
    %1867 = vmatpush.bf16.msra.mxu0 %v1747
    %1868 = vmatpush.bf16.msra.mxu0 %v1745
    %1869 = vmatpush.bf16.msra.mxu0 %v1743
    %1870 = vmatmul.bf16.gmra.mxu0 %v1562
    %v1871 = vpop.f32.mrf.mxu0
    %v1872 = vadd.f32 0.0, %v1871
    %v1873 = vpop.f32.mrf.mxu0
    %1874 = vdwg.mxu0
    %1875 = vmatpush.bf16.msra.mxu0 %v1773
    %1876 = vmatpush.bf16.msra.mxu0 %v1771
    %1877 = vmatpush.bf16.msra.mxu0 %v1769
    %1878 = vmatpush.bf16.msra.mxu0 %v1767
    %1879 = vmatpush.bf16.msra.mxu0 %v1765
    %1880 = vmatpush.bf16.msra.mxu0 %v1763
    %1881 = vmatpush.bf16.msra.mxu0 %v1761
    %1882 = vmatpush.bf16.msra.mxu0 %v1759
    %1883 = vmatmul.bf16.gmra.mxu0 %v1563
    %v1884 = vpop.f32.mrf.mxu0
    %v1885 = vadd.f32 %v1872, %v1884
    %v1886 = vpop.f32.mrf.mxu0
    %1887 = vdwg.mxu0
    %1888 = vmatpush.bf16.msra.mxu0 %v1789
    %1889 = vmatpush.bf16.msra.mxu0 %v1787
    %1890 = vmatpush.bf16.msra.mxu0 %v1785
    %1891 = vmatpush.bf16.msra.mxu0 %v1783
    %1892 = vmatpush.bf16.msra.mxu0 %v1781
    %1893 = vmatpush.bf16.msra.mxu0 %v1779
    %1894 = vmatpush.bf16.msra.mxu0 %v1777
    %1895 = vmatpush.bf16.msra.mxu0 %v1775
    %1896 = vmatmul.bf16.gmra.mxu0 %v1564
    %v1897 = vpop.f32.mrf.mxu0
    %v1898 = vadd.f32 %v1885, %v1897
    %v1899 = vpop.f32.mrf.mxu0
    %1900 = vdwg.mxu0
    %1901 = vmatpush.bf16.msra.mxu0 0
    %1902 = vmatpush.bf16.msra.mxu0 0
    %1903 = vmatpush.bf16.msra.mxu0 0
    %1904 = vmatpush.bf16.msra.mxu0 %v1799
    %1905 = vmatpush.bf16.msra.mxu0 %v1797
    %1906 = vmatpush.bf16.msra.mxu0 %v1795
    %1907 = vmatpush.bf16.msra.mxu0 %v1793
    %1908 = vmatpush.bf16.msra.mxu0 %v1791
    %1909 = vmatmul.bf16.gmra.mxu0 %v1860
    %v1910 = vpop.f32.mrf.mxu0
    %v1911 = vadd.f32 %v1898, %v1910
    %v1912 = vpop.f32.mrf.mxu0
    %1913 = vdwg.mxu0
    %1914 = vmatpush.bf16.msra.mxu0 %v1758
    %1915 = vmatpush.bf16.msra.mxu0 %v1756
    %1916 = vmatpush.bf16.msra.mxu0 %v1754
    %1917 = vmatpush.bf16.msra.mxu0 %v1752
    %1918 = vmatpush.bf16.msra.mxu0 %v1750
    %1919 = vmatpush.bf16.msra.mxu0 %v1748
    %1920 = vmatpush.bf16.msra.mxu0 %v1746
    %1921 = vmatpush.bf16.msra.mxu0 %v1744
    %1922 = vmatmul.bf16.gmra.mxu0 %v1562
    %v1923 = vpop.f32.mrf.mxu0
    %v1924 = vadd.f32 0.0, %v1923
    %v1925 = vpop.f32.mrf.mxu0
    %1926 = vdwg.mxu0
    %1927 = vmatpush.bf16.msra.mxu0 %v1774
    %1928 = vmatpush.bf16.msra.mxu0 %v1772
    %1929 = vmatpush.bf16.msra.mxu0 %v1770
    %1930 = vmatpush.bf16.msra.mxu0 %v1768
    %1931 = vmatpush.bf16.msra.mxu0 %v1766
    %1932 = vmatpush.bf16.msra.mxu0 %v1764
    %1933 = vmatpush.bf16.msra.mxu0 %v1762
    %1934 = vmatpush.bf16.msra.mxu0 %v1760
    %1935 = vmatmul.bf16.gmra.mxu0 %v1563
    %v1936 = vpop.f32.mrf.mxu0
    %v1937 = vadd.f32 %v1924, %v1936
    %v1938 = vpop.f32.mrf.mxu0
    %1939 = vdwg.mxu0
    %1940 = vmatpush.bf16.msra.mxu0 %v1790
    %1941 = vmatpush.bf16.msra.mxu0 %v1788
    %1942 = vmatpush.bf16.msra.mxu0 %v1786
    %1943 = vmatpush.bf16.msra.mxu0 %v1784
    %1944 = vmatpush.bf16.msra.mxu0 %v1782
    %1945 = vmatpush.bf16.msra.mxu0 %v1780
    %1946 = vmatpush.bf16.msra.mxu0 %v1778
    %1947 = vmatpush.bf16.msra.mxu0 %v1776
    %1948 = vmatmul.bf16.gmra.mxu0 %v1564
    %v1949 = vpop.f32.mrf.mxu0
    %v1950 = vadd.f32 %v1937, %v1949
    %v1951 = vpop.f32.mrf.mxu0
    %1952 = vdwg.mxu0
    %1953 = vmatpush.bf16.msra.mxu0 0
    %1954 = vmatpush.bf16.msra.mxu0 0
    %1955 = vmatpush.bf16.msra.mxu0 0
    %1956 = vmatpush.bf16.msra.mxu0 %v1800
    %1957 = vmatpush.bf16.msra.mxu0 %v1798
    %1958 = vmatpush.bf16.msra.mxu0 %v1796
    %1959 = vmatpush.bf16.msra.mxu0 %v1794
    %1960 = vmatpush.bf16.msra.mxu0 %v1792
    %1961 = vmatmul.bf16.gmra.mxu0 %v1860
    %v1962 = vpop.f32.mrf.mxu0
    %v1963 = vadd.f32 %v1950, %v1962
    %v1964 = vpop.f32.mrf.mxu0
    %1965 = vdwg.mxu0
    %v1967 = vunpack.c.l.b16 %v1495
    %v1968 = vunpack.c.h.b16 %v1495
    %v1969 = vpack.c.b16 %v1967, %v1967
    %v1970 = vpack.c.b16 %v1968, %v1968
    %1971 = vrot.lane.b32.xlu0 %v1563, 16
    %v1972 = vpop.permute.xlu0 %1971
    %1973 = vrot.lane.b32.xlu0 %v1564, 16
    %v1974 = vpop.permute.xlu0 %1973
    %1975 = vrot.lane.b32.xlu0 %v1565, 16
    %v1976 = vpop.permute.xlu0 %1975
    %1977 = vrot.lane.b32.xlu0 %v1969, 16
    %v1978 = vpop.permute.xlu0 %1977
    %1979 = vrot.lane.b32.xlu0 %v1970, 16
    %v1980 = vpop.permute.xlu0 %1979
    %vm1981 = vcmask 130048
    %v1982 = vsel %vm1981, %v1972, %v1974
    %v1983 = vsel %vm1981, %v1974, %v1976
    %v1984 = vsel %vm1981, %v1976, %v1978
    %v1985 = vsel %vm1981, %v1978, %v1980
    %v1990 = vsel %vm827, %v1985, 0
    %1992 = vmatpush.bf16.msra.mxu0 %v1757
    %1993 = vmatpush.bf16.msra.mxu0 %v1755
    %1994 = vmatpush.bf16.msra.mxu0 %v1753
    %1995 = vmatpush.bf16.msra.mxu0 %v1751
    %1996 = vmatpush.bf16.msra.mxu0 %v1749
    %1997 = vmatpush.bf16.msra.mxu0 %v1747
    %1998 = vmatpush.bf16.msra.mxu0 %v1745
    %1999 = vmatpush.bf16.msra.mxu0 %v1743
    %2000 = vmatmul.bf16.gmra.mxu0 %v1982
    %v2001 = vpop.f32.mrf.mxu0
    %v2002 = vadd.f32 0.0, %v2001
    %v2003 = vpop.f32.mrf.mxu0
    %2004 = vdwg.mxu0
    %2005 = vmatpush.bf16.msra.mxu0 %v1773
    %2006 = vmatpush.bf16.msra.mxu0 %v1771
    %2007 = vmatpush.bf16.msra.mxu0 %v1769
    %2008 = vmatpush.bf16.msra.mxu0 %v1767
    %2009 = vmatpush.bf16.msra.mxu0 %v1765
    %2010 = vmatpush.bf16.msra.mxu0 %v1763
    %2011 = vmatpush.bf16.msra.mxu0 %v1761
    %2012 = vmatpush.bf16.msra.mxu0 %v1759
    %2013 = vmatmul.bf16.gmra.mxu0 %v1983
    %v2014 = vpop.f32.mrf.mxu0
    %v2015 = vadd.f32 %v2002, %v2014
    %v2016 = vpop.f32.mrf.mxu0
    %2017 = vdwg.mxu0
    %2018 = vmatpush.bf16.msra.mxu0 %v1789
    %2019 = vmatpush.bf16.msra.mxu0 %v1787
    %2020 = vmatpush.bf16.msra.mxu0 %v1785
    %2021 = vmatpush.bf16.msra.mxu0 %v1783
    %2022 = vmatpush.bf16.msra.mxu0 %v1781
    %2023 = vmatpush.bf16.msra.mxu0 %v1779
    %2024 = vmatpush.bf16.msra.mxu0 %v1777
    %2025 = vmatpush.bf16.msra.mxu0 %v1775
    %2026 = vmatmul.bf16.gmra.mxu0 %v1984
    %v2027 = vpop.f32.mrf.mxu0
    %v2028 = vadd.f32 %v2015, %v2027
    %v2029 = vpop.f32.mrf.mxu0
    %2030 = vdwg.mxu0
    %2031 = vmatpush.bf16.msra.mxu0 0
    %2032 = vmatpush.bf16.msra.mxu0 0
    %2033 = vmatpush.bf16.msra.mxu0 0
    %2034 = vmatpush.bf16.msra.mxu0 %v1799
    %2035 = vmatpush.bf16.msra.mxu0 %v1797
    %2036 = vmatpush.bf16.msra.mxu0 %v1795
    %2037 = vmatpush.bf16.msra.mxu0 %v1793
    %2038 = vmatpush.bf16.msra.mxu0 %v1791
    %2039 = vmatmul.bf16.gmra.mxu0 %v1990
    %v2040 = vpop.f32.mrf.mxu0
    %v2041 = vadd.f32 %v2028, %v2040
    %v2042 = vpop.f32.mrf.mxu0
    %2043 = vdwg.mxu0
    %2044 = vmatpush.bf16.msra.mxu0 %v1758
    %2045 = vmatpush.bf16.msra.mxu0 %v1756
    %2046 = vmatpush.bf16.msra.mxu0 %v1754
    %2047 = vmatpush.bf16.msra.mxu0 %v1752
    %2048 = vmatpush.bf16.msra.mxu0 %v1750
    %2049 = vmatpush.bf16.msra.mxu0 %v1748
    %2050 = vmatpush.bf16.msra.mxu0 %v1746
    %2051 = vmatpush.bf16.msra.mxu0 %v1744
    %2052 = vmatmul.bf16.gmra.mxu0 %v1982
    %v2053 = vpop.f32.mrf.mxu0
    %v2054 = vadd.f32 0.0, %v2053
    %v2055 = vpop.f32.mrf.mxu0
    %2056 = vdwg.mxu0
    %2057 = vmatpush.bf16.msra.mxu0 %v1774
    %2058 = vmatpush.bf16.msra.mxu0 %v1772
    %2059 = vmatpush.bf16.msra.mxu0 %v1770
    %2060 = vmatpush.bf16.msra.mxu0 %v1768
    %2061 = vmatpush.bf16.msra.mxu0 %v1766
    %2062 = vmatpush.bf16.msra.mxu0 %v1764
    %2063 = vmatpush.bf16.msra.mxu0 %v1762
    %2064 = vmatpush.bf16.msra.mxu0 %v1760
    %2065 = vmatmul.bf16.gmra.mxu0 %v1983
    %v2066 = vpop.f32.mrf.mxu0
    %v2067 = vadd.f32 %v2054, %v2066
    %v2068 = vpop.f32.mrf.mxu0
    %2069 = vdwg.mxu0
    %2070 = vmatpush.bf16.msra.mxu0 %v1790
    %2071 = vmatpush.bf16.msra.mxu0 %v1788
    %2072 = vmatpush.bf16.msra.mxu0 %v1786
    %2073 = vmatpush.bf16.msra.mxu0 %v1784
    %2074 = vmatpush.bf16.msra.mxu0 %v1782
    %2075 = vmatpush.bf16.msra.mxu0 %v1780
    %2076 = vmatpush.bf16.msra.mxu0 %v1778
    %2077 = vmatpush.bf16.msra.mxu0 %v1776
    %2078 = vmatmul.bf16.gmra.mxu0 %v1984
    %v2079 = vpop.f32.mrf.mxu0
    %v2080 = vadd.f32 %v2067, %v2079
    %v2081 = vpop.f32.mrf.mxu0
    %2082 = vdwg.mxu0
    %2083 = vmatpush.bf16.msra.mxu0 0
    %2084 = vmatpush.bf16.msra.mxu0 0
    %2085 = vmatpush.bf16.msra.mxu0 0
    %2086 = vmatpush.bf16.msra.mxu0 %v1800
    %2087 = vmatpush.bf16.msra.mxu0 %v1798
    %2088 = vmatpush.bf16.msra.mxu0 %v1796
    %2089 = vmatpush.bf16.msra.mxu0 %v1794
    %2090 = vmatpush.bf16.msra.mxu0 %v1792
    %2091 = vmatmul.bf16.gmra.mxu0 %v1990
    %v2092 = vpop.f32.mrf.mxu0
    %v2093 = vadd.f32 %v2080, %v2092
    %v2094 = vpop.f32.mrf.mxu0
    %2095 = vdwg.mxu0
    %v2097 = vunpack.c.l.b16 %v1496
    %v2098 = vunpack.c.h.b16 %v1496
    %v2099 = vpack.c.b16 %v2097, %v2097
    %v2100 = vpack.c.b16 %v2098, %v2098
    %2101 = vrot.lane.b32.xlu0 %v1565, 32
    %v2102 = vpop.permute.xlu0 %2101
    %2103 = vrot.lane.b32.xlu0 %v1969, 32
    %v2104 = vpop.permute.xlu0 %2103
    %2105 = vrot.lane.b32.xlu0 %v1970, 32
    %v2106 = vpop.permute.xlu0 %2105
    %2107 = vrot.lane.b32.xlu0 %v2099, 32
    %v2108 = vpop.permute.xlu0 %2107
    %2109 = vrot.lane.b32.xlu0 %v2100, 32
    %v2110 = vpop.permute.xlu0 %2109
    %vm2111 = vcmask 261120
    %v2112 = vsel %vm2111, %v2102, %v2104
    %v2113 = vsel %vm2111, %v2104, %v2106
    %v2114 = vsel %vm2111, %v2106, %v2108
    %v2115 = vsel %vm2111, %v2108, %v2110
    %v2120 = vsel %vm827, %v2115, 0
    %2122 = vmatpush.bf16.msra.mxu0 %v1757
    %2123 = vmatpush.bf16.msra.mxu0 %v1755
    %2124 = vmatpush.bf16.msra.mxu0 %v1753
    %2125 = vmatpush.bf16.msra.mxu0 %v1751
    %2126 = vmatpush.bf16.msra.mxu0 %v1749
    %2127 = vmatpush.bf16.msra.mxu0 %v1747
    %2128 = vmatpush.bf16.msra.mxu0 %v1745
    %2129 = vmatpush.bf16.msra.mxu0 %v1743
    %2130 = vmatmul.bf16.gmra.mxu0 %v2112
    %v2131 = vpop.f32.mrf.mxu0
    %v2132 = vadd.f32 0.0, %v2131
    %v2133 = vpop.f32.mrf.mxu0
    %2134 = vdwg.mxu0
    %2135 = vmatpush.bf16.msra.mxu0 %v1773
    %2136 = vmatpush.bf16.msra.mxu0 %v1771
    %2137 = vmatpush.bf16.msra.mxu0 %v1769
    %2138 = vmatpush.bf16.msra.mxu0 %v1767
    %2139 = vmatpush.bf16.msra.mxu0 %v1765
    %2140 = vmatpush.bf16.msra.mxu0 %v1763
    %2141 = vmatpush.bf16.msra.mxu0 %v1761
    %2142 = vmatpush.bf16.msra.mxu0 %v1759
    %2143 = vmatmul.bf16.gmra.mxu0 %v2113
    %v2144 = vpop.f32.mrf.mxu0
    %v2145 = vadd.f32 %v2132, %v2144
    %v2146 = vpop.f32.mrf.mxu0
    %2147 = vdwg.mxu0
    %2148 = vmatpush.bf16.msra.mxu0 %v1789
    %2149 = vmatpush.bf16.msra.mxu0 %v1787
    %2150 = vmatpush.bf16.msra.mxu0 %v1785
    %2151 = vmatpush.bf16.msra.mxu0 %v1783
    %2152 = vmatpush.bf16.msra.mxu0 %v1781
    %2153 = vmatpush.bf16.msra.mxu0 %v1779
    %2154 = vmatpush.bf16.msra.mxu0 %v1777
    %2155 = vmatpush.bf16.msra.mxu0 %v1775
    %2156 = vmatmul.bf16.gmra.mxu0 %v2114
    %v2157 = vpop.f32.mrf.mxu0
    %v2158 = vadd.f32 %v2145, %v2157
    %v2159 = vpop.f32.mrf.mxu0
    %2160 = vdwg.mxu0
    %2161 = vmatpush.bf16.msra.mxu0 0
    %2162 = vmatpush.bf16.msra.mxu0 0
    %2163 = vmatpush.bf16.msra.mxu0 0
    %2164 = vmatpush.bf16.msra.mxu0 %v1799
    %2165 = vmatpush.bf16.msra.mxu0 %v1797
    %2166 = vmatpush.bf16.msra.mxu0 %v1795
    %2167 = vmatpush.bf16.msra.mxu0 %v1793
    %2168 = vmatpush.bf16.msra.mxu0 %v1791
    %2169 = vmatmul.bf16.gmra.mxu0 %v2120
    %v2170 = vpop.f32.mrf.mxu0
    %v2171 = vadd.f32 %v2158, %v2170
    %v2172 = vpop.f32.mrf.mxu0
    %2173 = vdwg.mxu0
    %2174 = vmatpush.bf16.msra.mxu0 %v1758
    %2175 = vmatpush.bf16.msra.mxu0 %v1756
    %2176 = vmatpush.bf16.msra.mxu0 %v1754
    %2177 = vmatpush.bf16.msra.mxu0 %v1752
    %2178 = vmatpush.bf16.msra.mxu0 %v1750
    %2179 = vmatpush.bf16.msra.mxu0 %v1748
    %2180 = vmatpush.bf16.msra.mxu0 %v1746
    %2181 = vmatpush.bf16.msra.mxu0 %v1744
    %2182 = vmatmul.bf16.gmra.mxu0 %v2112
    %v2183 = vpop.f32.mrf.mxu0
    %v2184 = vadd.f32 0.0, %v2183
    %v2185 = vpop.f32.mrf.mxu0
    %2186 = vdwg.mxu0
    %2187 = vmatpush.bf16.msra.mxu0 %v1774
    %2188 = vmatpush.bf16.msra.mxu0 %v1772
    %2189 = vmatpush.bf16.msra.mxu0 %v1770
    %2190 = vmatpush.bf16.msra.mxu0 %v1768
    %2191 = vmatpush.bf16.msra.mxu0 %v1766
    %2192 = vmatpush.bf16.msra.mxu0 %v1764
    %2193 = vmatpush.bf16.msra.mxu0 %v1762
    %2194 = vmatpush.bf16.msra.mxu0 %v1760
    %2195 = vmatmul.bf16.gmra.mxu0 %v2113
    %v2196 = vpop.f32.mrf.mxu0
    %v2197 = vadd.f32 %v2184, %v2196
    %v2198 = vpop.f32.mrf.mxu0
    %2199 = vdwg.mxu0
    %2200 = vmatpush.bf16.msra.mxu0 %v1790
    %2201 = vmatpush.bf16.msra.mxu0 %v1788
    %2202 = vmatpush.bf16.msra.mxu0 %v1786
    %2203 = vmatpush.bf16.msra.mxu0 %v1784
    %2204 = vmatpush.bf16.msra.mxu0 %v1782
    %2205 = vmatpush.bf16.msra.mxu0 %v1780
    %2206 = vmatpush.bf16.msra.mxu0 %v1778
    %2207 = vmatpush.bf16.msra.mxu0 %v1776
    %2208 = vmatmul.bf16.gmra.mxu0 %v2114
    %v2209 = vpop.f32.mrf.mxu0
    %v2210 = vadd.f32 %v2197, %v2209
    %v2211 = vpop.f32.mrf.mxu0
    %2212 = vdwg.mxu0
    %2213 = vmatpush.bf16.msra.mxu0 0
    %2214 = vmatpush.bf16.msra.mxu0 0
    %2215 = vmatpush.bf16.msra.mxu0 0
    %2216 = vmatpush.bf16.msra.mxu0 %v1800
    %2217 = vmatpush.bf16.msra.mxu0 %v1798
    %2218 = vmatpush.bf16.msra.mxu0 %v1796
    %2219 = vmatpush.bf16.msra.mxu0 %v1794
    %2220 = vmatpush.bf16.msra.mxu0 %v1792
    %2221 = vmatmul.bf16.gmra.mxu0 %v2120
    %v2222 = vpop.f32.mrf.mxu0
    %v2223 = vadd.f32 %v2210, %v2222
    %v2224 = vpop.f32.mrf.mxu0
    %2225 = vdwg.mxu0
    %v2227 = vunpack.c.l.b16 %v1497
    %v2228 = vunpack.c.h.b16 %v1497
    %v2229 = vpack.c.b16 %v2227, %v2227
    %v2230 = vpack.c.b16 %v2228, %v2228
    %2231 = vrot.lane.b32.xlu0 %v1970, 48
    %v2232 = vpop.permute.xlu0 %2231
    %2233 = vrot.lane.b32.xlu0 %v2099, 48
    %v2234 = vpop.permute.xlu0 %2233
    %2235 = vrot.lane.b32.xlu0 %v2100, 48
    %v2236 = vpop.permute.xlu0 %2235
    %2237 = vrot.lane.b32.xlu0 %v2229, 48
    %v2238 = vpop.permute.xlu0 %2237
    %2239 = vrot.lane.b32.xlu0 %v2230, 48
    %v2240 = vpop.permute.xlu0 %2239
    %vm2241 = vcmask 392192
    %v2242 = vsel %vm2241, %v2232, %v2234
    %v2243 = vsel %vm2241, %v2234, %v2236
    %v2244 = vsel %vm2241, %v2236, %v2238
    %v2245 = vsel %vm2241, %v2238, %v2240
    %v2250 = vsel %vm827, %v2245, 0
    %2252 = vmatpush.bf16.msra.mxu0 %v1757
    %2253 = vmatpush.bf16.msra.mxu0 %v1755
    %2254 = vmatpush.bf16.msra.mxu0 %v1753
    %2255 = vmatpush.bf16.msra.mxu0 %v1751
    %2256 = vmatpush.bf16.msra.mxu0 %v1749
    %2257 = vmatpush.bf16.msra.mxu0 %v1747
    %2258 = vmatpush.bf16.msra.mxu0 %v1745
    %2259 = vmatpush.bf16.msra.mxu0 %v1743
    %2260 = vmatmul.bf16.gmra.mxu0 %v2242
    %v2261 = vpop.f32.mrf.mxu0
    %v2262 = vadd.f32 0.0, %v2261
    %v2263 = vpop.f32.mrf.mxu0
    %2264 = vdwg.mxu0
    %2265 = vmatpush.bf16.msra.mxu0 %v1773
    %2266 = vmatpush.bf16.msra.mxu0 %v1771
    %2267 = vmatpush.bf16.msra.mxu0 %v1769
    %2268 = vmatpush.bf16.msra.mxu0 %v1767
    %2269 = vmatpush.bf16.msra.mxu0 %v1765
    %2270 = vmatpush.bf16.msra.mxu0 %v1763
    %2271 = vmatpush.bf16.msra.mxu0 %v1761
    %2272 = vmatpush.bf16.msra.mxu0 %v1759
    %2273 = vmatmul.bf16.gmra.mxu0 %v2243
    %v2274 = vpop.f32.mrf.mxu0
    %v2275 = vadd.f32 %v2262, %v2274
    %v2276 = vpop.f32.mrf.mxu0
    %2277 = vdwg.mxu0
    %2278 = vmatpush.bf16.msra.mxu0 %v1789
    %2279 = vmatpush.bf16.msra.mxu0 %v1787
    %2280 = vmatpush.bf16.msra.mxu0 %v1785
    %2281 = vmatpush.bf16.msra.mxu0 %v1783
    %2282 = vmatpush.bf16.msra.mxu0 %v1781
    %2283 = vmatpush.bf16.msra.mxu0 %v1779
    %2284 = vmatpush.bf16.msra.mxu0 %v1777
    %2285 = vmatpush.bf16.msra.mxu0 %v1775
    %2286 = vmatmul.bf16.gmra.mxu0 %v2244
    %v2287 = vpop.f32.mrf.mxu0
    %v2288 = vadd.f32 %v2275, %v2287
    %v2289 = vpop.f32.mrf.mxu0
    %2290 = vdwg.mxu0
    %2291 = vmatpush.bf16.msra.mxu0 0
    %2292 = vmatpush.bf16.msra.mxu0 0
    %2293 = vmatpush.bf16.msra.mxu0 0
    %2294 = vmatpush.bf16.msra.mxu0 %v1799
    %2295 = vmatpush.bf16.msra.mxu0 %v1797
    %2296 = vmatpush.bf16.msra.mxu0 %v1795
    %2297 = vmatpush.bf16.msra.mxu0 %v1793
    %2298 = vmatpush.bf16.msra.mxu0 %v1791
    %2299 = vmatmul.bf16.gmra.mxu0 %v2250
    %v2300 = vpop.f32.mrf.mxu0
    %v2301 = vadd.f32 %v2288, %v2300
    %v2302 = vpop.f32.mrf.mxu0
    %2303 = vdwg.mxu0
    %2304 = vmatpush.bf16.msra.mxu0 %v1758
    %2305 = vmatpush.bf16.msra.mxu0 %v1756
    %2306 = vmatpush.bf16.msra.mxu0 %v1754
    %2307 = vmatpush.bf16.msra.mxu0 %v1752
    %2308 = vmatpush.bf16.msra.mxu0 %v1750
    %2309 = vmatpush.bf16.msra.mxu0 %v1748
    %2310 = vmatpush.bf16.msra.mxu0 %v1746
    %2311 = vmatpush.bf16.msra.mxu0 %v1744
    %2312 = vmatmul.bf16.gmra.mxu0 %v2242
    %v2313 = vpop.f32.mrf.mxu0
    %v2314 = vadd.f32 0.0, %v2313
    %v2315 = vpop.f32.mrf.mxu0
    %2316 = vdwg.mxu0
    %2317 = vmatpush.bf16.msra.mxu0 %v1774
    %2318 = vmatpush.bf16.msra.mxu0 %v1772
    %2319 = vmatpush.bf16.msra.mxu0 %v1770
    %2320 = vmatpush.bf16.msra.mxu0 %v1768
    %2321 = vmatpush.bf16.msra.mxu0 %v1766
    %2322 = vmatpush.bf16.msra.mxu0 %v1764
    %2323 = vmatpush.bf16.msra.mxu0 %v1762
    %2324 = vmatpush.bf16.msra.mxu0 %v1760
    %2325 = vmatmul.bf16.gmra.mxu0 %v2243
    %v2326 = vpop.f32.mrf.mxu0
    %v2327 = vadd.f32 %v2314, %v2326
    %v2328 = vpop.f32.mrf.mxu0
    %2329 = vdwg.mxu0
    %2330 = vmatpush.bf16.msra.mxu0 %v1790
    %2331 = vmatpush.bf16.msra.mxu0 %v1788
    %2332 = vmatpush.bf16.msra.mxu0 %v1786
    %2333 = vmatpush.bf16.msra.mxu0 %v1784
    %2334 = vmatpush.bf16.msra.mxu0 %v1782
    %2335 = vmatpush.bf16.msra.mxu0 %v1780
    %2336 = vmatpush.bf16.msra.mxu0 %v1778
    %2337 = vmatpush.bf16.msra.mxu0 %v1776
    %2338 = vmatmul.bf16.gmra.mxu0 %v2244
    %v2339 = vpop.f32.mrf.mxu0
    %v2340 = vadd.f32 %v2327, %v2339
    %v2341 = vpop.f32.mrf.mxu0
    %2342 = vdwg.mxu0
    %2343 = vmatpush.bf16.msra.mxu0 0
    %2344 = vmatpush.bf16.msra.mxu0 0
    %2345 = vmatpush.bf16.msra.mxu0 0
    %2346 = vmatpush.bf16.msra.mxu0 %v1800
    %2347 = vmatpush.bf16.msra.mxu0 %v1798
    %2348 = vmatpush.bf16.msra.mxu0 %v1796
    %2349 = vmatpush.bf16.msra.mxu0 %v1794
    %2350 = vmatpush.bf16.msra.mxu0 %v1792
    %2351 = vmatmul.bf16.gmra.mxu0 %v2250
    %v2352 = vpop.f32.mrf.mxu0
    %v2353 = vadd.f32 %v2340, %v2352
    %v2354 = vpop.f32.mrf.mxu0
    %2355 = vdwg.mxu0
    %2358 = vrot.lane.b32.xlu0 %v2041, 32
    %v2359 = vpop.permute.xlu0 %2358
    %2360 = vrot.lane.b32.xlu0 %v2093, 32
    %v2361 = vpop.permute.xlu0 %2360
    %v2362 = vsel %vm738, %v2359, %v2361
    %2367 = vrot.lane.b32.xlu0 %v2171, 64
    %v2368 = vpop.permute.xlu0 %2367
    %2369 = vrot.lane.b32.xlu0 %v2223, 64
    %v2370 = vpop.permute.xlu0 %2369
    %v2371 = vsel %vm838, %v2368, %v2370
    %2376 = vrot.lane.b32.xlu0 %v2301, 96
    %v2377 = vpop.permute.xlu0 %2376
    %2378 = vrot.lane.b32.xlu0 %v2353, 96
    %v2379 = vpop.permute.xlu0 %2378
    %v2380 = vsel %vm816, %v2377, %v2379
    %v2383 = vsel %vm738, %v1963, %v2359
    %v2384 = vsel %vm838, %v2362, %v2368
    %v2385 = vsel %vm816, %v2371, %v2377
    %v2386 = vsel %vm849, %v1911, 0.0
    %v2387 = vrot.slane %v2386, 4
    %v2388 = vadd.f32 %v2386, %v2387
    %v2389 = vrot.slane %v2388, 2
    %v2390 = vadd.f32 %v2388, %v2389
    %v2391 = vrot.slane %v2390, 1
    %v2392 = vadd.f32 %v2390, %v2391
    %v2393 = vsel %vm849, %v2383, 0.0
    %v2394 = vrot.slane %v2393, 4
    %v2395 = vadd.f32 %v2393, %v2394
    %v2396 = vrot.slane %v2395, 2
    %v2397 = vadd.f32 %v2395, %v2396
    %v2398 = vrot.slane %v2397, 1
    %v2399 = vadd.f32 %v2397, %v2398
    %v2400 = vsel %vm849, %v2384, 0.0
    %v2401 = vrot.slane %v2400, 4
    %v2402 = vadd.f32 %v2400, %v2401
    %v2403 = vrot.slane %v2402, 2
    %v2404 = vadd.f32 %v2402, %v2403
    %v2405 = vrot.slane %v2404, 1
    %v2406 = vadd.f32 %v2404, %v2405
    %v2407 = vsel %vm849, %v2385, 0.0
    %v2408 = vrot.slane %v2407, 4
    %v2409 = vadd.f32 %v2407, %v2408
    %v2410 = vrot.slane %v2409, 2
    %v2411 = vadd.f32 %v2409, %v2410
    %v2412 = vrot.slane %v2411, 1
    %v2413 = vadd.f32 %v2411, %v2412
    %v2414 = vsel %vm849, %v2380, 0.0
    %v2415 = vrot.slane %v2414, 4
    %v2416 = vadd.f32 %v2414, %v2415
    %v2417 = vrot.slane %v2416, 2
    %v2418 = vadd.f32 %v2416, %v2417
    %v2419 = vrot.slane %v2418, 1
    %v2420 = vadd.f32 %v2418, %v2419
    %v2421 = vmul.f32 %v1911, %v1911
    %v2422 = vmul.f32 %v2383, %v2383
    %v2423 = vmul.f32 %v2384, %v2384
    %v2424 = vmul.f32 %v2385, %v2385
    %v2425 = vmul.f32 %v2380, %v2380
    %v2426 = vsel %vm849, %v2421, 0.0
    %v2427 = vrot.slane %v2426, 4
    %v2428 = vadd.f32 %v2426, %v2427
    %v2429 = vrot.slane %v2428, 2
    %v2430 = vadd.f32 %v2428, %v2429
    %v2431 = vrot.slane %v2430, 1
    %v2432 = vadd.f32 %v2430, %v2431
    %v2433 = vsel %vm849, %v2422, 0.0
    %v2434 = vrot.slane %v2433, 4
    %v2435 = vadd.f32 %v2433, %v2434
    %v2436 = vrot.slane %v2435, 2
    %v2437 = vadd.f32 %v2435, %v2436
    %v2438 = vrot.slane %v2437, 1
    %v2439 = vadd.f32 %v2437, %v2438
    %v2440 = vsel %vm849, %v2423, 0.0
    %v2441 = vrot.slane %v2440, 4
    %v2442 = vadd.f32 %v2440, %v2441
    %v2443 = vrot.slane %v2442, 2
    %v2444 = vadd.f32 %v2442, %v2443
    %v2445 = vrot.slane %v2444, 1
    %v2446 = vadd.f32 %v2444, %v2445
    %v2447 = vsel %vm849, %v2424, 0.0
    %v2448 = vrot.slane %v2447, 4
    %v2449 = vadd.f32 %v2447, %v2448
    %v2450 = vrot.slane %v2449, 2
    %v2451 = vadd.f32 %v2449, %v2450
    %v2452 = vrot.slane %v2451, 1
    %v2453 = vadd.f32 %v2451, %v2452
    %v2454 = vsel %vm849, %v2425, 0.0
    %v2455 = vrot.slane %v2454, 4
    %v2456 = vadd.f32 %v2454, %v2455
    %v2457 = vrot.slane %v2456, 2
    %v2458 = vadd.f32 %v2456, %v2457
    %v2459 = vrot.slane %v2458, 1
    %v2460 = vadd.f32 %v2458, %v2459
    %v2461 = vsel %vm1000, %v2392, %v2432
    %v2462 = vsel %vm1000, %v2399, %v2439
    %v2463 = vsel %vm1000, %v2406, %v2446
    %v2464 = vsel %vm1000, %v2413, %v2453
    %v2465 = vsel %vm1000, %v2420, %v2460
    %2466 = vmatpush.xpose.msra.mxu0 0.0
    %2467 = vmatpush.xpose.msra.mxu0 0.0
    %2468 = vmatpush.xpose.msra.mxu0 0.0
    %2469 = vmatpush.xpose.msra.mxu0 0.0
    %2470 = vmatpush.xpose.msra.mxu0 0.0
    %2471 = vmatpush.xpose.msra.mxu0 0.0
    %2472 = vmatpush.xpose.msra.mxu0 0.0
    %2473 = vmatpush.xpose.msra.mxu0 0.0
    %2474 = vmatpush.xpose.msra.mxu0 0.0
    %2475 = vmatpush.xpose.msra.mxu0 0.0
    %2476 = vmatpush.xpose.msra.mxu0 0.0
    %2477 = vmatpush.xpose.msra.mxu0 0.0
    %2478 = vmatpush.xpose.msra.mxu0 0.0
    %2479 = vmatpush.xpose.msra.mxu0 0.0
    %2480 = vmatpush.xpose.msra.mxu0 %v307
    %2481 = vmatpush.xpose.msra.mxu0 %v302
    %2482 = vmatmul.f32.gmra.mxu0 %v2461
    %v2483 = vpop.f32.mrf.mxu0
    %v2484 = vadd.f32 0.0, %v2483
    %2485 = vdwg.mxu0
    %2486 = vmatpush.xpose.msra.mxu0 0.0
    %2487 = vmatpush.xpose.msra.mxu0 0.0
    %2488 = vmatpush.xpose.msra.mxu0 0.0
    %2489 = vmatpush.xpose.msra.mxu0 0.0
    %2490 = vmatpush.xpose.msra.mxu0 0.0
    %2491 = vmatpush.xpose.msra.mxu0 0.0
    %2492 = vmatpush.xpose.msra.mxu0 0.0
    %2493 = vmatpush.xpose.msra.mxu0 0.0
    %2494 = vmatpush.xpose.msra.mxu0 0.0
    %2495 = vmatpush.xpose.msra.mxu0 0.0
    %2496 = vmatpush.xpose.msra.mxu0 0.0
    %2497 = vmatpush.xpose.msra.mxu0 0.0
    %2498 = vmatpush.xpose.msra.mxu0 0.0
    %2499 = vmatpush.xpose.msra.mxu0 0.0
    %2500 = vmatpush.xpose.msra.mxu0 %v308
    %2501 = vmatpush.xpose.msra.mxu0 %v303
    %2502 = vmatmul.f32.gmra.mxu0 %v2462
    %v2503 = vpop.f32.mrf.mxu0
    %v2504 = vadd.f32 %v2484, %v2503
    %2505 = vdwg.mxu0
    %2506 = vmatpush.xpose.msra.mxu0 0.0
    %2507 = vmatpush.xpose.msra.mxu0 0.0
    %2508 = vmatpush.xpose.msra.mxu0 0.0
    %2509 = vmatpush.xpose.msra.mxu0 0.0
    %2510 = vmatpush.xpose.msra.mxu0 0.0
    %2511 = vmatpush.xpose.msra.mxu0 0.0
    %2512 = vmatpush.xpose.msra.mxu0 0.0
    %2513 = vmatpush.xpose.msra.mxu0 0.0
    %2514 = vmatpush.xpose.msra.mxu0 0.0
    %2515 = vmatpush.xpose.msra.mxu0 0.0
    %2516 = vmatpush.xpose.msra.mxu0 0.0
    %2517 = vmatpush.xpose.msra.mxu0 0.0
    %2518 = vmatpush.xpose.msra.mxu0 0.0
    %2519 = vmatpush.xpose.msra.mxu0 0.0
    %2520 = vmatpush.xpose.msra.mxu0 %v309
    %2521 = vmatpush.xpose.msra.mxu0 %v304
    %2522 = vmatmul.f32.gmra.mxu0 %v2463
    %v2523 = vpop.f32.mrf.mxu0
    %v2524 = vadd.f32 %v2504, %v2523
    %2525 = vdwg.mxu0
    %2526 = vmatpush.xpose.msra.mxu0 0.0
    %2527 = vmatpush.xpose.msra.mxu0 0.0
    %2528 = vmatpush.xpose.msra.mxu0 0.0
    %2529 = vmatpush.xpose.msra.mxu0 0.0
    %2530 = vmatpush.xpose.msra.mxu0 0.0
    %2531 = vmatpush.xpose.msra.mxu0 0.0
    %2532 = vmatpush.xpose.msra.mxu0 0.0
    %2533 = vmatpush.xpose.msra.mxu0 0.0
    %2534 = vmatpush.xpose.msra.mxu0 0.0
    %2535 = vmatpush.xpose.msra.mxu0 0.0
    %2536 = vmatpush.xpose.msra.mxu0 0.0
    %2537 = vmatpush.xpose.msra.mxu0 0.0
    %2538 = vmatpush.xpose.msra.mxu0 0.0
    %2539 = vmatpush.xpose.msra.mxu0 0.0
    %2540 = vmatpush.xpose.msra.mxu0 %v310
    %2541 = vmatpush.xpose.msra.mxu0 %v305
    %2542 = vmatmul.f32.gmra.mxu0 %v2464
    %v2543 = vpop.f32.mrf.mxu0
    %v2544 = vadd.f32 %v2524, %v2543
    %2545 = vdwg.mxu0
    %2546 = vmatpush.xpose.msra.mxu0 0.0
    %2547 = vmatpush.xpose.msra.mxu0 0.0
    %2548 = vmatpush.xpose.msra.mxu0 0.0
    %2549 = vmatpush.xpose.msra.mxu0 0.0
    %2550 = vmatpush.xpose.msra.mxu0 0.0
    %2551 = vmatpush.xpose.msra.mxu0 0.0
    %2552 = vmatpush.xpose.msra.mxu0 0.0
    %2553 = vmatpush.xpose.msra.mxu0 0.0
    %2554 = vmatpush.xpose.msra.mxu0 0.0
    %2555 = vmatpush.xpose.msra.mxu0 0.0
    %2556 = vmatpush.xpose.msra.mxu0 0.0
    %2557 = vmatpush.xpose.msra.mxu0 0.0
    %2558 = vmatpush.xpose.msra.mxu0 0.0
    %2559 = vmatpush.xpose.msra.mxu0 0.0
    %2560 = vmatpush.xpose.msra.mxu0 %v311
    %2561 = vmatpush.xpose.msra.mxu0 %v306
    %2562 = vmatmul.f32.gmra.mxu0 %v2465
    %v2563 = vpop.f32.mrf.mxu0
    %v2564 = vadd.f32 %v2544, %v2563
    %2565 = vdwg.mxu0
    %v2566 = vmul.f32 %v2564, 0.0125
    %v2567 = vmul.f32 %v2566, %v2566
    %v2569 = vrot.slane %v2567, 7
    %v2571 = vsub.f32 %v2566, %v2569
    %v2572 = vmax.f32 %v2571, 0.0
    %v2573 = vadd.f32 %v2572, 1e-05
    %v2574 = vrsqrt.pop %v2573
    %v2575 = vmul.f32 %v2574, %v2573
    %v2576 = vmul.f32 %v2575, %v2574
    %v2577 = vmul.f32 0.5, %v2576
    %v2578 = vsub.f32 1.5, %v2577
    %v2579 = vmul.f32 %v2574, %v2578
    %vm2580 = vweird.f32 %v2573
    %vm2581 = vweird.f32 %v2574
    %vm2582 = vmor %vm2580, %vm2581
    %v2583 = vsel %vm2582, %v2574, %v2579
    %v2585 = vrot.slane %v2583, 7
    %v2587 = vmul.f32 %v40, %v2585
    %v2589 = vrot.slane %v2587, 2
    %v2591 = vmul.f32 %v2566, %v2589
    %v2593 = vrot.slane %v2591, 5
    %v2595 = vsub.f32 %v40, %v2593
    %v2597 = vrot.slane %v2595, 2
    %v2599 = vsel %vm1000, %v2589, %v2597
    %v2601 = vsel %vm592, %v2599, 0
    %2603 = vmatpush.msra.mxu0 0.0
    %2604 = vmatpush.msra.mxu0 0.0
    %2605 = vmatpush.msra.mxu0 0.0
    %2606 = vmatpush.msra.mxu0 0.0
    %2607 = vmatpush.msra.mxu0 0.0
    %2608 = vmatpush.msra.mxu0 0.0
    %2609 = vmatpush.msra.mxu0 0.0
    %2610 = vmatpush.msra.mxu0 0.0
    %2611 = vmatpush.msra.mxu0 0.0
    %2612 = vmatpush.msra.mxu0 0.0
    %2613 = vmatpush.msra.mxu0 0.0
    %2614 = vmatpush.msra.mxu0 0.0
    %2615 = vmatpush.msra.mxu0 0.0
    %2616 = vmatpush.msra.mxu0 0.0
    %2617 = vmatpush.msra.mxu0 %v307
    %2618 = vmatpush.msra.mxu0 %v302
    %2619 = vmatmul.f32.gmra.mxu0 %v2601
    %v2620 = vpop.f32.mrf.mxu0
    %v2621 = vadd.f32 0.0, %v2620
    %2622 = vdwg.mxu0
    %2623 = vmatpush.msra.mxu0 0.0
    %2624 = vmatpush.msra.mxu0 0.0
    %2625 = vmatpush.msra.mxu0 0.0
    %2626 = vmatpush.msra.mxu0 0.0
    %2627 = vmatpush.msra.mxu0 0.0
    %2628 = vmatpush.msra.mxu0 0.0
    %2629 = vmatpush.msra.mxu0 0.0
    %2630 = vmatpush.msra.mxu0 0.0
    %2631 = vmatpush.msra.mxu0 0.0
    %2632 = vmatpush.msra.mxu0 0.0
    %2633 = vmatpush.msra.mxu0 0.0
    %2634 = vmatpush.msra.mxu0 0.0
    %2635 = vmatpush.msra.mxu0 0.0
    %2636 = vmatpush.msra.mxu0 0.0
    %2637 = vmatpush.msra.mxu0 %v308
    %2638 = vmatpush.msra.mxu0 %v303
    %2639 = vmatmul.f32.gmra.mxu0 %v2601
    %v2640 = vpop.f32.mrf.mxu0
    %v2641 = vadd.f32 0.0, %v2640
    %2642 = vdwg.mxu0
    %2643 = vmatpush.msra.mxu0 0.0
    %2644 = vmatpush.msra.mxu0 0.0
    %2645 = vmatpush.msra.mxu0 0.0
    %2646 = vmatpush.msra.mxu0 0.0
    %2647 = vmatpush.msra.mxu0 0.0
    %2648 = vmatpush.msra.mxu0 0.0
    %2649 = vmatpush.msra.mxu0 0.0
    %2650 = vmatpush.msra.mxu0 0.0
    %2651 = vmatpush.msra.mxu0 0.0
    %2652 = vmatpush.msra.mxu0 0.0
    %2653 = vmatpush.msra.mxu0 0.0
    %2654 = vmatpush.msra.mxu0 0.0
    %2655 = vmatpush.msra.mxu0 0.0
    %2656 = vmatpush.msra.mxu0 0.0
    %2657 = vmatpush.msra.mxu0 %v309
    %2658 = vmatpush.msra.mxu0 %v304
    %2659 = vmatmul.f32.gmra.mxu0 %v2601
    %v2660 = vpop.f32.mrf.mxu0
    %v2661 = vadd.f32 0.0, %v2660
    %2662 = vdwg.mxu0
    %2663 = vmatpush.msra.mxu0 0.0
    %2664 = vmatpush.msra.mxu0 0.0
    %2665 = vmatpush.msra.mxu0 0.0
    %2666 = vmatpush.msra.mxu0 0.0
    %2667 = vmatpush.msra.mxu0 0.0
    %2668 = vmatpush.msra.mxu0 0.0
    %2669 = vmatpush.msra.mxu0 0.0
    %2670 = vmatpush.msra.mxu0 0.0
    %2671 = vmatpush.msra.mxu0 0.0
    %2672 = vmatpush.msra.mxu0 0.0
    %2673 = vmatpush.msra.mxu0 0.0
    %2674 = vmatpush.msra.mxu0 0.0
    %2675 = vmatpush.msra.mxu0 0.0
    %2676 = vmatpush.msra.mxu0 0.0
    %2677 = vmatpush.msra.mxu0 %v310
    %2678 = vmatpush.msra.mxu0 %v305
    %2679 = vmatmul.f32.gmra.mxu0 %v2601
    %v2680 = vpop.f32.mrf.mxu0
    %v2681 = vadd.f32 0.0, %v2680
    %2682 = vdwg.mxu0
    %2683 = vmatpush.msra.mxu0 0.0
    %2684 = vmatpush.msra.mxu0 0.0
    %2685 = vmatpush.msra.mxu0 0.0
    %2686 = vmatpush.msra.mxu0 0.0
    %2687 = vmatpush.msra.mxu0 0.0
    %2688 = vmatpush.msra.mxu0 0.0
    %2689 = vmatpush.msra.mxu0 0.0
    %2690 = vmatpush.msra.mxu0 0.0
    %2691 = vmatpush.msra.mxu0 0.0
    %2692 = vmatpush.msra.mxu0 0.0
    %2693 = vmatpush.msra.mxu0 0.0
    %2694 = vmatpush.msra.mxu0 0.0
    %2695 = vmatpush.msra.mxu0 0.0
    %2696 = vmatpush.msra.mxu0 0.0
    %2697 = vmatpush.msra.mxu0 %v311
    %2698 = vmatpush.msra.mxu0 %v306
    %2699 = vmatmul.f32.gmra.mxu0 %v2601
    %v2700 = vpop.f32.mrf.mxu0
    %v2701 = vadd.f32 0.0, %v2700
    %2702 = vdwg.mxu0
    %v2703 = vperm.slane %v2621, 0
    %v2704 = vperm.slane %v2641, 0
    %v2705 = vperm.slane %v2661, 0
    %v2706 = vperm.slane %v2681, 0
    %v2707 = vperm.slane %v2701, 0
    %v2708 = vmul.f32 %v1911, %v2703
    %v2709 = vmul.f32 %v2383, %v2704
    %v2710 = vmul.f32 %v2384, %v2705
    %v2711 = vmul.f32 %v2385, %v2706
    %v2712 = vmul.f32 %v2380, %v2707
    %v2713 = vperm.slane %v2621, 1
    %v2714 = vperm.slane %v2641, 1
    %v2715 = vperm.slane %v2661, 1
    %v2716 = vperm.slane %v2681, 1
    %v2717 = vperm.slane %v2701, 1
    %v2718 = vadd.f32 %v2708, %v2713
    %v2719 = vadd.f32 %v2709, %v2714
    %v2720 = vadd.f32 %v2710, %v2715
    %v2721 = vadd.f32 %v2711, %v2716
    %v2722 = vadd.f32 %v2712, %v2717
    %v2723 = vmax.f32 %v2718, 0.0
    %v2724 = vmax.f32 %v2719, 0.0
    %v2725 = vmax.f32 %v2720, 0.0
    %v2726 = vmax.f32 %v2721, 0.0
    %v2727 = vmax.f32 %v2722, 0.0
    %v2728 = vpack.c.bf16 %v2723, %v2723
    %v2729 = vpack.c.bf16 %v2724, %v2724
    %v2730 = vpack.c.bf16 %v2725, %v2725
    %v2731 = vpack.c.bf16 %v2726, %v2726
    %v2732 = vpack.c.bf16 %v2727, %v2727
    %v2733 = vld [vmem:[#allocation2] sm:$0xff]
    %v2734 = vld [vmem:[#allocation2 + $0x8] sm:$0xf]
    %v2735 = vld [vmem:[#allocation2 + $0xc] sm:$0xff]
    %v2736 = vld [vmem:[#allocation2 + $0x14] sm:$0xf]
    %v2737 = vld [vmem:[#allocation2 + $0x18] sm:$0xff]
    %v2738 = vld [vmem:[#allocation2 + $0x20] sm:$0xf]
    %v2739 = vld [vmem:[#allocation2 + $0x24] sm:$0xff]
    %v2740 = vld [vmem:[#allocation2 + $0x2c] sm:$0xf]
    %v2741 = vld [vmem:[#allocation2 + $0x30] sm:$0xff]
    %v2742 = vld [vmem:[#allocation2 + $0x38] sm:$0xf]
    %v2743 = vld [vmem:[#allocation2 + $0x3c] sm:$0xff]
    %v2744 = vld [vmem:[#allocation2 + $0x44] sm:$0xf]
    %v2745 = vld [vmem:[#allocation2 + $0x48] sm:$0xff]
    %v2746 = vld [vmem:[#allocation2 + $0x50] sm:$0xf]
    %v2747 = vld [vmem:[#allocation2 + $0x54] sm:$0xff]
    %v2748 = vld [vmem:[#allocation2 + $0x5c] sm:$0xf]
    %v2749 = vld [vmem:[#allocation2 + $0x60] sm:$0xff]
    %v2750 = vld [vmem:[#allocation2 + $0x68] sm:$0xf]
    %v2751 = vld [vmem:[#allocation2 + $0x6c] sm:$0xff]
    %v2752 = vld [vmem:[#allocation2 + $0x74] sm:$0xf]
    %v2753 = vld [vmem:[#allocation2 + $0x78] sm:$0xff]
    %v2754 = vld [vmem:[#allocation2 + $0x80] sm:$0xf]
    %v2755 = vld [vmem:[#allocation2 + $0x84] sm:$0xff]
    %v2756 = vld [vmem:[#allocation2 + $0x8c] sm:$0xf]
    %v2757 = vld [vmem:[#allocation2 + $0x90] sm:$0xff]
    %v2758 = vld [vmem:[#allocation2 + $0x98] sm:$0xf]
    %v2759 = vld [vmem:[#allocation2 + $0x9c] sm:$0xff]
    %v2760 = vld [vmem:[#allocation2 + $0xa4] sm:$0xf]
    %v2761 = vld [vmem:[#allocation2 + $0xa8] sm:$0xff]
    %v2762 = vld [vmem:[#allocation2 + $0xb0] sm:$0xf]
    %v2763 = vld [vmem:[#allocation2 + $0xb4] sm:$0xff]
    %v2764 = vld [vmem:[#allocation2 + $0xbc] sm:$0xf]
    %v2765 = vld [vmem:[#allocation2 + $0xc0] sm:$0xff]
    %v2766 = vld [vmem:[#allocation2 + $0xc8] sm:$0xf]
    %v2767 = vld [vmem:[#allocation2 + $0xcc] sm:$0xff]
    %v2768 = vld [vmem:[#allocation2 + $0xd4] sm:$0xf]
    %v2769 = vld [vmem:[#allocation2 + $0xd8] sm:$0xff]
    %v2770 = vld [vmem:[#allocation2 + $0xe0] sm:$0xf]
    %v2771 = vld [vmem:[#allocation2 + $0xe4] sm:$0xff]
    %v2772 = vld [vmem:[#allocation2 + $0xec] sm:$0xf]
    %v2773 = vld [vmem:[#allocation2 + $0xf0] sm:$0xff]
    %v2774 = vld [vmem:[#allocation2 + $0xf8] sm:$0xf]
    %v2775 = vld [vmem:[#allocation2 + $0xfc] sm:$0xff]
    %v2776 = vld [vmem:[#allocation2 + $0x104] sm:$0xf]
    %v2777 = vld [vmem:[#allocation2 + $0x108] sm:$0xff]
    %v2778 = vld [vmem:[#allocation2 + $0x110] sm:$0xf]
    %v2779 = vld [vmem:[#allocation2 + $0x114] sm:$0xff]
    %v2780 = vld [vmem:[#allocation2 + $0x11c] sm:$0xf]
    %v2781 = vld [vmem:[#allocation2 + $0x120] sm:$0xff]
    %v2782 = vld [vmem:[#allocation2 + $0x128] sm:$0xf]
    %v2783 = vld [vmem:[#allocation2 + $0x12c] sm:$0xff]
    %v2784 = vld [vmem:[#allocation2 + $0x134] sm:$0xf]
    %v2785 = vld [vmem:[#allocation2 + $0x138] sm:$0xff]
    %v2786 = vld [vmem:[#allocation2 + $0x140] sm:$0xf]
    %v2787 = vld [vmem:[#allocation2 + $0x144] sm:$0xff]
    %v2788 = vld [vmem:[#allocation2 + $0x14c] sm:$0xf]
    %v2789 = vld [vmem:[#allocation2 + $0x150] sm:$0xff]
    %v2790 = vld [vmem:[#allocation2 + $0x158] sm:$0xf]
    %v2791 = vld [vmem:[#allocation2 + $0x15c] sm:$0xff]
    %v2792 = vld [vmem:[#allocation2 + $0x164] sm:$0xf]
    %v2793 = vld [vmem:[#allocation2 + $0x168] sm:$0xff]
    %v2794 = vld [vmem:[#allocation2 + $0x170] sm:$0xf]
    %v2795 = vld [vmem:[#allocation2 + $0x174] sm:$0xff]
    %v2796 = vld [vmem:[#allocation2 + $0x17c] sm:$0xf]
    %v2797 = vld [vmem:[#allocation2 + $0x180] sm:$0xff]
    %v2798 = vld [vmem:[#allocation2 + $0x188] sm:$0xf]
    %v2799 = vld [vmem:[#allocation2 + $0x18c] sm:$0xff]
    %v2800 = vld [vmem:[#allocation2 + $0x194] sm:$0xf]
    %v2801 = vld [vmem:[#allocation2 + $0x198] sm:$0xff]
    %v2802 = vld [vmem:[#allocation2 + $0x1a0] sm:$0xf]
    %v2803 = vld [vmem:[#allocation2 + $0x1a4] sm:$0xff]
    %v2804 = vld [vmem:[#allocation2 + $0x1ac] sm:$0xf]
    %v2805 = vld [vmem:[#allocation2 + $0x1b0] sm:$0xff]
    %v2806 = vld [vmem:[#allocation2 + $0x1b8] sm:$0xf]
    %v2807 = vld [vmem:[#allocation2 + $0x1bc] sm:$0xff]
    %v2808 = vld [vmem:[#allocation2 + $0x1c4] sm:$0xf]
    %v2809 = vld [vmem:[#allocation2 + $0x1c8] sm:$0xff]
    %v2810 = vld [vmem:[#allocation2 + $0x1d0] sm:$0xf]
    %v2811 = vld [vmem:[#allocation2 + $0x1d4] sm:$0xff]
    %v2812 = vld [vmem:[#allocation2 + $0x1dc] sm:$0xf]
    %v2813 = vld [vmem:[#allocation2 + $0x1e0] sm:$0xff]
    %v2814 = vld [vmem:[#allocation2 + $0x1e8] sm:$0xf]
    %v2815 = vld [vmem:[#allocation2 + $0x1ec] sm:$0xff]
    %v2816 = vld [vmem:[#allocation2 + $0x1f4] sm:$0xf]
    %v2817 = vld [vmem:[#allocation2 + $0x1f8] sm:$0xff]
    %v2818 = vld [vmem:[#allocation2 + $0x200] sm:$0xf]
    %v2819 = vld [vmem:[#allocation2 + $0x204] sm:$0xff]
    %v2820 = vld [vmem:[#allocation2 + $0x20c] sm:$0xf]
    %v2821 = vld [vmem:[#allocation2 + $0x210] sm:$0xff]
    %v2822 = vld [vmem:[#allocation2 + $0x218] sm:$0xf]
    %v2823 = vld [vmem:[#allocation2 + $0x21c] sm:$0xff]
    %v2824 = vld [vmem:[#allocation2 + $0x224] sm:$0xf]
    %v2825 = vld [vmem:[#allocation2 + $0x228] sm:$0xff]
    %v2826 = vld [vmem:[#allocation2 + $0x230] sm:$0xf]
    %v2827 = vld [vmem:[#allocation2 + $0x234] sm:$0xff]
    %v2828 = vld [vmem:[#allocation2 + $0x23c] sm:$0xf]
    %v2829 = vld [vmem:[#allocation2 + $0x240] sm:$0xff]
    %v2830 = vld [vmem:[#allocation2 + $0x248] sm:$0xf]
    %v2831 = vld [vmem:[#allocation2 + $0x24c] sm:$0xff]
    %v2832 = vld [vmem:[#allocation2 + $0x254] sm:$0xf]
    %v2833 = vld [vmem:[#allocation2 + $0x258] sm:$0xff]
    %v2834 = vld [vmem:[#allocation2 + $0x260] sm:$0xf]
    %v2835 = vld [vmem:[#allocation2 + $0x264] sm:$0xff]
    %v2836 = vld [vmem:[#allocation2 + $0x26c] sm:$0xf]
    %v2837 = vld [vmem:[#allocation2 + $0x270] sm:$0xff]
    %v2838 = vld [vmem:[#allocation2 + $0x278] sm:$0xf]
    %v2839 = vld [vmem:[#allocation2 + $0x27c] sm:$0xff]
    %v2840 = vld [vmem:[#allocation2 + $0x284] sm:$0xf]
    %v2841 = vld [vmem:[#allocation2 + $0x288] sm:$0xff]
    %v2842 = vld [vmem:[#allocation2 + $0x290] sm:$0xf]
    %v2843 = vld [vmem:[#allocation2 + $0x294] sm:$0xff]
    %v2844 = vld [vmem:[#allocation2 + $0x29c] sm:$0xf]
    %v2845 = vld [vmem:[#allocation2 + $0x2a0] sm:$0xff]
    %v2846 = vld [vmem:[#allocation2 + $0x2a8] sm:$0xf]
    %v2847 = vld [vmem:[#allocation2 + $0x2ac] sm:$0xff]
    %v2848 = vld [vmem:[#allocation2 + $0x2b4] sm:$0xf]
    %v2849 = vld [vmem:[#allocation2 + $0x2b8] sm:$0xff]
    %v2850 = vld [vmem:[#allocation2 + $0x2c0] sm:$0xf]
    %v2851 = vld [vmem:[#allocation2 + $0x2c4] sm:$0xff]
    %v2852 = vld [vmem:[#allocation2 + $0x2cc] sm:$0xf]
    %v2853 = vld [vmem:[#allocation2 + $0x2d0] sm:$0xff]
    %v2854 = vld [vmem:[#allocation2 + $0x2d8] sm:$0xf]
    %v2855 = vld [vmem:[#allocation2 + $0x2dc] sm:$0xff]
    %v2856 = vld [vmem:[#allocation2 + $0x2e4] sm:$0xf]
    %v2857 = vld [vmem:[#allocation2 + $0x2e8] sm:$0xff]
    %v2858 = vld [vmem:[#allocation2 + $0x2f0] sm:$0xf]
    %v2859 = vld [vmem:[#allocation2 + $0x2f4] sm:$0xff]
    %v2860 = vld [vmem:[#allocation2 + $0x2fc] sm:$0xf]
    %v2861 = vld [vmem:[#allocation2 + $0x300] sm:$0xff]
    %v2862 = vld [vmem:[#allocation2 + $0x308] sm:$0xf]
    %v2863 = vld [vmem:[#allocation2 + $0x30c] sm:$0xff]
    %v2864 = vld [vmem:[#allocation2 + $0x314] sm:$0xf]
    %v2865 = vld [vmem:[#allocation2 + $0x318] sm:$0xff]
    %v2866 = vld [vmem:[#allocation2 + $0x320] sm:$0xf]
    %v2867 = vld [vmem:[#allocation2 + $0x324] sm:$0xff]
    %v2868 = vld [vmem:[#allocation2 + $0x32c] sm:$0xf]
    %v2869 = vld [vmem:[#allocation2 + $0x330] sm:$0xff]
    %v2870 = vld [vmem:[#allocation2 + $0x338] sm:$0xf]
    %v2871 = vld [vmem:[#allocation2 + $0x33c] sm:$0xff]
    %v2872 = vld [vmem:[#allocation2 + $0x344] sm:$0xf]
    %v2873 = vld [vmem:[#allocation2 + $0x348] sm:$0xff]
    %v2874 = vld [vmem:[#allocation2 + $0x350] sm:$0xf]
    %v2875 = vld [vmem:[#allocation2 + $0x354] sm:$0xff]
    %v2876 = vld [vmem:[#allocation2 + $0x35c] sm:$0xf]
    %v2877 = vld [vmem:[#allocation2 + $0x360] sm:$0xff]
    %v2878 = vld [vmem:[#allocation2 + $0x368] sm:$0xf]
    %v2879 = vld [vmem:[#allocation2 + $0x36c] sm:$0xff]
    %v2880 = vld [vmem:[#allocation2 + $0x374] sm:$0xf]
    %v2881 = vld [vmem:[#allocation2 + $0x378] sm:$0xff]
    %v2882 = vld [vmem:[#allocation2 + $0x380] sm:$0xf]
    %v2883 = vld [vmem:[#allocation2 + $0x384] sm:$0xff]
    %v2884 = vld [vmem:[#allocation2 + $0x38c] sm:$0xf]
    %v2885 = vld [vmem:[#allocation2 + $0x390] sm:$0xff]
    %v2886 = vld [vmem:[#allocation2 + $0x398] sm:$0xf]
    %v2887 = vld [vmem:[#allocation2 + $0x39c] sm:$0xff]
    %v2888 = vld [vmem:[#allocation2 + $0x3a4] sm:$0xf]
    %v2889 = vld [vmem:[#allocation2 + $0x3a8] sm:$0xff]
    %v2890 = vld [vmem:[#allocation2 + $0x3b0] sm:$0xf]
    %v2891 = vld [vmem:[#allocation2 + $0x3b4] sm:$0xff]
    %v2892 = vld [vmem:[#allocation2 + $0x3bc] sm:$0xf]
    %v2893 = vperm.slane %v40, 4
    %v2894 = vperm.slane %v41, 4
    %v2895 = vperm.slane %v42, 4
    %v3056 = vunpack.c.l.b16 %v2733
    %v3057 = vunpack.c.h.b16 %v2733
    %v3058 = vunpack.c.l.b16 %v2734
    %v3059 = vunpack.c.l.b16 %v2735
    %v3060 = vunpack.c.h.b16 %v2735
    %v3061 = vunpack.c.l.b16 %v2736
    %v3062 = vunpack.c.l.b16 %v2737
    %v3063 = vunpack.c.h.b16 %v2737
    %v3064 = vunpack.c.l.b16 %v2738
    %v3065 = vunpack.c.l.b16 %v2739
    %v3066 = vunpack.c.h.b16 %v2739
    %v3067 = vunpack.c.l.b16 %v2740
    %v3068 = vunpack.c.l.b16 %v2741
    %v3069 = vunpack.c.h.b16 %v2741
    %v3070 = vunpack.c.l.b16 %v2742
    %v3071 = vunpack.c.l.b16 %v2743
    %v3072 = vunpack.c.h.b16 %v2743
    %v3073 = vunpack.c.l.b16 %v2744
    %v3074 = vunpack.c.l.b16 %v2745
    %v3075 = vunpack.c.h.b16 %v2745
    %v3076 = vunpack.c.l.b16 %v2746
    %v3077 = vunpack.c.l.b16 %v2747
    %v3078 = vunpack.c.h.b16 %v2747
    %v3079 = vunpack.c.l.b16 %v2748
    %v3080 = vunpack.c.l.b16 %v2749
    %v3081 = vunpack.c.h.b16 %v2749
    %v3082 = vunpack.c.l.b16 %v2750
    %v3083 = vunpack.c.l.b16 %v2751
    %v3084 = vunpack.c.h.b16 %v2751
    %v3085 = vunpack.c.l.b16 %v2752
    %v3086 = vunpack.c.l.b16 %v2753
    %v3087 = vunpack.c.h.b16 %v2753
    %v3088 = vunpack.c.l.b16 %v2754
    %v3089 = vunpack.c.l.b16 %v2755
    %v3090 = vunpack.c.h.b16 %v2755
    %v3091 = vunpack.c.l.b16 %v2756
    %v3092 = vunpack.c.l.b16 %v2757
    %v3093 = vunpack.c.h.b16 %v2757
    %v3094 = vunpack.c.l.b16 %v2758
    %v3095 = vunpack.c.l.b16 %v2759
    %v3096 = vunpack.c.h.b16 %v2759
    %v3097 = vunpack.c.l.b16 %v2760
    %v3098 = vunpack.c.l.b16 %v2761
    %v3099 = vunpack.c.h.b16 %v2761
    %v3100 = vunpack.c.l.b16 %v2762
    %v3101 = vunpack.c.l.b16 %v2763
    %v3102 = vunpack.c.h.b16 %v2763
    %v3103 = vunpack.c.l.b16 %v2764
    %v3104 = vunpack.c.l.b16 %v2765
    %v3105 = vunpack.c.h.b16 %v2765
    %v3106 = vunpack.c.l.b16 %v2766
    %v3107 = vunpack.c.l.b16 %v2767
    %v3108 = vunpack.c.h.b16 %v2767
    %v3109 = vunpack.c.l.b16 %v2768
    %v3110 = vunpack.c.l.b16 %v2769
    %v3111 = vunpack.c.h.b16 %v2769
    %v3112 = vunpack.c.l.b16 %v2770
    %v3113 = vunpack.c.l.b16 %v2771
    %v3114 = vunpack.c.h.b16 %v2771
    %v3115 = vunpack.c.l.b16 %v2772
    %v3116 = vunpack.c.l.b16 %v2773
    %v3117 = vunpack.c.h.b16 %v2773
    %v3118 = vunpack.c.l.b16 %v2774
    %v3119 = vunpack.c.l.b16 %v2775
    %v3120 = vunpack.c.h.b16 %v2775
    %v3121 = vunpack.c.l.b16 %v2776
    %v3122 = vunpack.c.l.b16 %v2777
    %v3123 = vunpack.c.h.b16 %v2777
    %v3124 = vunpack.c.l.b16 %v2778
    %v3125 = vunpack.c.l.b16 %v2779
    %v3126 = vunpack.c.h.b16 %v2779
    %v3127 = vunpack.c.l.b16 %v2780
    %v3128 = vunpack.c.l.b16 %v2781
    %v3129 = vunpack.c.h.b16 %v2781
    %v3130 = vunpack.c.l.b16 %v2782
    %v3131 = vunpack.c.l.b16 %v2783
    %v3132 = vunpack.c.h.b16 %v2783
    %v3133 = vunpack.c.l.b16 %v2784
    %v3134 = vunpack.c.l.b16 %v2785
    %v3135 = vunpack.c.h.b16 %v2785
    %v3136 = vunpack.c.l.b16 %v2786
    %v3137 = vunpack.c.l.b16 %v2787
    %v3138 = vunpack.c.h.b16 %v2787
    %v3139 = vunpack.c.l.b16 %v2788
    %v3140 = vunpack.c.l.b16 %v2789
    %v3141 = vunpack.c.h.b16 %v2789
    %v3142 = vunpack.c.l.b16 %v2790
    %v3143 = vunpack.c.l.b16 %v2791
    %v3144 = vunpack.c.h.b16 %v2791
    %v3145 = vunpack.c.l.b16 %v2792
    %v3146 = vunpack.c.l.b16 %v2793
    %v3147 = vunpack.c.h.b16 %v2793
    %v3148 = vunpack.c.l.b16 %v2794
    %v3149 = vunpack.c.l.b16 %v2795
    %v3150 = vunpack.c.h.b16 %v2795
    %v3151 = vunpack.c.l.b16 %v2796
    %v3152 = vunpack.c.l.b16 %v2797
    %v3153 = vunpack.c.h.b16 %v2797
    %v3154 = vunpack.c.l.b16 %v2798
    %v3155 = vunpack.c.l.b16 %v2799
    %v3156 = vunpack.c.h.b16 %v2799
    %v3157 = vunpack.c.l.b16 %v2800
    %v3158 = vunpack.c.l.b16 %v2801
    %v3159 = vunpack.c.h.b16 %v2801
    %v3160 = vunpack.c.l.b16 %v2802
    %v3161 = vunpack.c.l.b16 %v2803
    %v3162 = vunpack.c.h.b16 %v2803
    %v3163 = vunpack.c.l.b16 %v2804
    %v3164 = vunpack.c.l.b16 %v2805
    %v3165 = vunpack.c.h.b16 %v2805
    %v3166 = vunpack.c.l.b16 %v2806
    %v3167 = vunpack.c.l.b16 %v2807
    %v3168 = vunpack.c.h.b16 %v2807
    %v3169 = vunpack.c.l.b16 %v2808
    %v3170 = vunpack.c.l.b16 %v2809
    %v3171 = vunpack.c.h.b16 %v2809
    %v3172 = vunpack.c.l.b16 %v2810
    %v3173 = vunpack.c.l.b16 %v2811
    %v3174 = vunpack.c.h.b16 %v2811
    %v3175 = vunpack.c.l.b16 %v2812
    %v3176 = vunpack.c.l.b16 %v2813
    %v3177 = vunpack.c.h.b16 %v2813
    %v3178 = vunpack.c.l.b16 %v2814
    %v3179 = vunpack.c.l.b16 %v2815
    %v3180 = vunpack.c.h.b16 %v2815
    %v3181 = vunpack.c.l.b16 %v2816
    %v3182 = vunpack.c.l.b16 %v2817
    %v3183 = vunpack.c.h.b16 %v2817
    %v3184 = vunpack.c.l.b16 %v2818
    %v3185 = vunpack.c.l.b16 %v2819
    %v3186 = vunpack.c.h.b16 %v2819
    %v3187 = vunpack.c.l.b16 %v2820
    %v3188 = vunpack.c.l.b16 %v2821
    %v3189 = vunpack.c.h.b16 %v2821
    %v3190 = vunpack.c.l.b16 %v2822
    %v3191 = vunpack.c.l.b16 %v2823
    %v3192 = vunpack.c.h.b16 %v2823
    %v3193 = vunpack.c.l.b16 %v2824
    %v3194 = vunpack.c.l.b16 %v2825
    %v3195 = vunpack.c.h.b16 %v2825
    %v3196 = vunpack.c.l.b16 %v2826
    %v3197 = vunpack.c.l.b16 %v2827
    %v3198 = vunpack.c.h.b16 %v2827
    %v3199 = vunpack.c.l.b16 %v2828
    %v3200 = vunpack.c.l.b16 %v2829
    %v3201 = vunpack.c.h.b16 %v2829
    %v3202 = vunpack.c.l.b16 %v2830
    %v3203 = vunpack.c.l.b16 %v2831
    %v3204 = vunpack.c.h.b16 %v2831
    %v3205 = vunpack.c.l.b16 %v2832
    %v3206 = vunpack.c.l.b16 %v2833
    %v3207 = vunpack.c.h.b16 %v2833
    %v3208 = vunpack.c.l.b16 %v2834
    %v3209 = vunpack.c.l.b16 %v2835
    %v3210 = vunpack.c.h.b16 %v2835
    %v3211 = vunpack.c.l.b16 %v2836
    %v3212 = vunpack.c.l.b16 %v2837
    %v3213 = vunpack.c.h.b16 %v2837
    %v3214 = vunpack.c.l.b16 %v2838
    %v3215 = vunpack.c.l.b16 %v2839
    %v3216 = vunpack.c.h.b16 %v2839
    %v3217 = vunpack.c.l.b16 %v2840
    %v3218 = vunpack.c.l.b16 %v2841
    %v3219 = vunpack.c.h.b16 %v2841
    %v3220 = vunpack.c.l.b16 %v2842
    %v3221 = vunpack.c.l.b16 %v2843
    %v3222 = vunpack.c.h.b16 %v2843
    %v3223 = vunpack.c.l.b16 %v2844
    %v3224 = vunpack.c.l.b16 %v2845
    %v3225 = vunpack.c.h.b16 %v2845
    %v3226 = vunpack.c.l.b16 %v2846
    %v3227 = vunpack.c.l.b16 %v2847
    %v3228 = vunpack.c.h.b16 %v2847
    %v3229 = vunpack.c.l.b16 %v2848
    %v3230 = vunpack.c.l.b16 %v2849
    %v3231 = vunpack.c.h.b16 %v2849
    %v3232 = vunpack.c.l.b16 %v2850
    %v3233 = vunpack.c.l.b16 %v2851
    %v3234 = vunpack.c.h.b16 %v2851
    %v3235 = vunpack.c.l.b16 %v2852
    %v3236 = vunpack.c.l.b16 %v2853
    %v3237 = vunpack.c.h.b16 %v2853
    %v3238 = vunpack.c.l.b16 %v2854
    %v3239 = vunpack.c.l.b16 %v2855
    %v3240 = vunpack.c.h.b16 %v2855
    %v3241 = vunpack.c.l.b16 %v2856
    %v3242 = vunpack.c.l.b16 %v2857
    %v3243 = vunpack.c.h.b16 %v2857
    %v3244 = vunpack.c.l.b16 %v2858
    %v3245 = vunpack.c.l.b16 %v2859
    %v3246 = vunpack.c.h.b16 %v2859
    %v3247 = vunpack.c.l.b16 %v2860
    %v3248 = vunpack.c.l.b16 %v2861
    %v3249 = vunpack.c.h.b16 %v2861
    %v3250 = vunpack.c.l.b16 %v2862
    %v3251 = vunpack.c.l.b16 %v2863
    %v3252 = vunpack.c.h.b16 %v2863
    %v3253 = vunpack.c.l.b16 %v2864
    %v3254 = vunpack.c.l.b16 %v2865
    %v3255 = vunpack.c.h.b16 %v2865
    %v3256 = vunpack.c.l.b16 %v2866
    %v3257 = vunpack.c.l.b16 %v2867
    %v3258 = vunpack.c.h.b16 %v2867
    %v3259 = vunpack.c.l.b16 %v2868
    %v3260 = vunpack.c.l.b16 %v2869
    %v3261 = vunpack.c.h.b16 %v2869
    %v3262 = vunpack.c.l.b16 %v2870
    %v3263 = vunpack.c.l.b16 %v2871
    %v3264 = vunpack.c.h.b16 %v2871
    %v3265 = vunpack.c.l.b16 %v2872
    %v3266 = vunpack.c.l.b16 %v2873
    %v3267 = vunpack.c.h.b16 %v2873
    %v3268 = vunpack.c.l.b16 %v2874
    %v3269 = vunpack.c.l.b16 %v2875
    %v3270 = vunpack.c.h.b16 %v2875
    %v3271 = vunpack.c.l.b16 %v2876
    %v3272 = vunpack.c.l.b16 %v2877
    %v3273 = vunpack.c.h.b16 %v2877
    %v3274 = vunpack.c.l.b16 %v2878
    %v3275 = vunpack.c.l.b16 %v2879
    %v3276 = vunpack.c.h.b16 %v2879
    %v3277 = vunpack.c.l.b16 %v2880
    %v3278 = vunpack.c.l.b16 %v2881
    %v3279 = vunpack.c.h.b16 %v2881
    %v3280 = vunpack.c.l.b16 %v2882
    %v3281 = vunpack.c.l.b16 %v2883
    %v3282 = vunpack.c.h.b16 %v2883
    %v3283 = vunpack.c.l.b16 %v2884
    %v3284 = vunpack.c.l.b16 %v2885
    %v3285 = vunpack.c.h.b16 %v2885
    %v3286 = vunpack.c.l.b16 %v2886
    %v3287 = vunpack.c.l.b16 %v2887
    %v3288 = vunpack.c.h.b16 %v2887
    %v3289 = vunpack.c.l.b16 %v2888
    %v3290 = vunpack.c.l.b16 %v2889
    %v3291 = vunpack.c.h.b16 %v2889
    %v3292 = vunpack.c.l.b16 %v2890
    %v3293 = vunpack.c.l.b16 %v2891
    %v3294 = vunpack.c.h.b16 %v2891
    %v3295 = vunpack.c.l.b16 %v2892
    %v3296 = vpack.c.b16 %v3059, %v3056
    %v3297 = vpack.c.b16 %v3060, %v3057
    %v3298 = vpack.c.b16 %v3061, %v3058
    %v3299 = vpack.c.b16 %v3065, %v3062
    %v3300 = vpack.c.b16 %v3066, %v3063
    %v3301 = vpack.c.b16 %v3067, %v3064
    %v3302 = vpack.c.b16 %v3071, %v3068
    %v3303 = vpack.c.b16 %v3072, %v3069
    %v3304 = vpack.c.b16 %v3073, %v3070
    %v3305 = vpack.c.b16 %v3077, %v3074
    %v3306 = vpack.c.b16 %v3078, %v3075
    %v3307 = vpack.c.b16 %v3079, %v3076
    %v3308 = vpack.c.b16 %v3083, %v3080
    %v3309 = vpack.c.b16 %v3084, %v3081
    %v3310 = vpack.c.b16 %v3085, %v3082
    %v3311 = vpack.c.b16 %v3089, %v3086
    %v3312 = vpack.c.b16 %v3090, %v3087
    %v3313 = vpack.c.b16 %v3091, %v3088
    %v3314 = vpack.c.b16 %v3095, %v3092
    %v3315 = vpack.c.b16 %v3096, %v3093
    %v3316 = vpack.c.b16 %v3097, %v3094
    %v3317 = vpack.c.b16 %v3101, %v3098
    %v3318 = vpack.c.b16 %v3102, %v3099
    %v3319 = vpack.c.b16 %v3103, %v3100
    %v3320 = vpack.c.b16 %v3107, %v3104
    %v3321 = vpack.c.b16 %v3108, %v3105
    %v3322 = vpack.c.b16 %v3109, %v3106
    %v3323 = vpack.c.b16 %v3113, %v3110
    %v3324 = vpack.c.b16 %v3114, %v3111
    %v3325 = vpack.c.b16 %v3115, %v3112
    %v3326 = vpack.c.b16 %v3119, %v3116
    %v3327 = vpack.c.b16 %v3120, %v3117
    %v3328 = vpack.c.b16 %v3121, %v3118
    %v3329 = vpack.c.b16 %v3125, %v3122
    %v3330 = vpack.c.b16 %v3126, %v3123
    %v3331 = vpack.c.b16 %v3127, %v3124
    %v3332 = vpack.c.b16 %v3131, %v3128
    %v3333 = vpack.c.b16 %v3132, %v3129
    %v3334 = vpack.c.b16 %v3133, %v3130
    %v3335 = vpack.c.b16 %v3137, %v3134
    %v3336 = vpack.c.b16 %v3138, %v3135
    %v3337 = vpack.c.b16 %v3139, %v3136
    %v3338 = vpack.c.b16 %v3143, %v3140
    %v3339 = vpack.c.b16 %v3144, %v3141
    %v3340 = vpack.c.b16 %v3145, %v3142
    %v3341 = vpack.c.b16 %v3149, %v3146
    %v3342 = vpack.c.b16 %v3150, %v3147
    %v3343 = vpack.c.b16 %v3151, %v3148
    %v3344 = vpack.c.b16 %v3155, %v3152
    %v3345 = vpack.c.b16 %v3156, %v3153
    %v3346 = vpack.c.b16 %v3157, %v3154
    %v3347 = vpack.c.b16 %v3161, %v3158
    %v3348 = vpack.c.b16 %v3162, %v3159
    %v3349 = vpack.c.b16 %v3163, %v3160
    %v3350 = vpack.c.b16 %v3167, %v3164
    %v3351 = vpack.c.b16 %v3168, %v3165
    %v3352 = vpack.c.b16 %v3169, %v3166
    %v3353 = vpack.c.b16 %v3173, %v3170
    %v3354 = vpack.c.b16 %v3174, %v3171
    %v3355 = vpack.c.b16 %v3175, %v3172
    %v3356 = vpack.c.b16 %v3179, %v3176
    %v3357 = vpack.c.b16 %v3180, %v3177
    %v3358 = vpack.c.b16 %v3181, %v3178
    %v3359 = vpack.c.b16 %v3185, %v3182
    %v3360 = vpack.c.b16 %v3186, %v3183
    %v3361 = vpack.c.b16 %v3187, %v3184
    %v3362 = vpack.c.b16 %v3191, %v3188
    %v3363 = vpack.c.b16 %v3192, %v3189
    %v3364 = vpack.c.b16 %v3193, %v3190
    %v3365 = vpack.c.b16 %v3197, %v3194
    %v3366 = vpack.c.b16 %v3198, %v3195
    %v3367 = vpack.c.b16 %v3199, %v3196
    %v3368 = vpack.c.b16 %v3203, %v3200
    %v3369 = vpack.c.b16 %v3204, %v3201
    %v3370 = vpack.c.b16 %v3205, %v3202
    %v3371 = vpack.c.b16 %v3209, %v3206
    %v3372 = vpack.c.b16 %v3210, %v3207
    %v3373 = vpack.c.b16 %v3211, %v3208
    %v3374 = vpack.c.b16 %v3215, %v3212
    %v3375 = vpack.c.b16 %v3216, %v3213
    %v3376 = vpack.c.b16 %v3217, %v3214
    %v3377 = vpack.c.b16 %v3221, %v3218
    %v3378 = vpack.c.b16 %v3222, %v3219
    %v3379 = vpack.c.b16 %v3223, %v3220
    %v3380 = vpack.c.b16 %v3227, %v3224
    %v3381 = vpack.c.b16 %v3228, %v3225
    %v3382 = vpack.c.b16 %v3229, %v3226
    %v3383 = vpack.c.b16 %v3233, %v3230
    %v3384 = vpack.c.b16 %v3234, %v3231
    %v3385 = vpack.c.b16 %v3235, %v3232
    %v3386 = vpack.c.b16 %v3239, %v3236
    %v3387 = vpack.c.b16 %v3240, %v3237
    %v3388 = vpack.c.b16 %v3241, %v3238
    %v3389 = vpack.c.b16 %v3245, %v3242
    %v3390 = vpack.c.b16 %v3246, %v3243
    %v3391 = vpack.c.b16 %v3247, %v3244
    %v3392 = vpack.c.b16 %v3251, %v3248
    %v3393 = vpack.c.b16 %v3252, %v3249
    %v3394 = vpack.c.b16 %v3253, %v3250
    %v3395 = vpack.c.b16 %v3257, %v3254
    %v3396 = vpack.c.b16 %v3258, %v3255
    %v3397 = vpack.c.b16 %v3259, %v3256
    %v3398 = vpack.c.b16 %v3263, %v3260
    %v3399 = vpack.c.b16 %v3264, %v3261
    %v3400 = vpack.c.b16 %v3265, %v3262
    %v3401 = vpack.c.b16 %v3269, %v3266
    %v3402 = vpack.c.b16 %v3270, %v3267
    %v3403 = vpack.c.b16 %v3271, %v3268
    %v3404 = vpack.c.b16 %v3275, %v3272
    %v3405 = vpack.c.b16 %v3276, %v3273
    %v3406 = vpack.c.b16 %v3277, %v3274
    %v3407 = vpack.c.b16 %v3281, %v3278
    %v3408 = vpack.c.b16 %v3282, %v3279
    %v3409 = vpack.c.b16 %v3283, %v3280
    %v3410 = vpack.c.b16 %v3287, %v3284
    %v3411 = vpack.c.b16 %v3288, %v3285
    %v3412 = vpack.c.b16 %v3289, %v3286
    %v3413 = vpack.c.b16 %v3293, %v3290
    %v3414 = vpack.c.b16 %v3294, %v3291
    %v3415 = vpack.c.b16 %v3295, %v3292
    %3536 = vmatpush.bf16.msra.mxu0 %v3317
    %3537 = vmatpush.bf16.msra.mxu0 %v3314
    %3538 = vmatpush.bf16.msra.mxu0 %v3311
    %3539 = vmatpush.bf16.msra.mxu0 %v3308
    %3540 = vmatpush.bf16.msra.mxu0 %v3305
    %3541 = vmatpush.bf16.msra.mxu0 %v3302
    %3542 = vmatpush.bf16.msra.mxu0 %v3299
    %3543 = vmatpush.bf16.msra.mxu0 %v3296
    %3544 = vmatmul.bf16.gmra.mxu0 %v2728
    %v3545 = vpop.f32.mrf.mxu0
    %v3546 = vadd.f32 %v2893, %v3545
    %v3547 = vpop.f32.mrf.mxu0
    %3548 = vdwg.mxu0
    %3549 = vmatpush.bf16.msra.mxu0 %v3341
    %3550 = vmatpush.bf16.msra.mxu0 %v3338
    %3551 = vmatpush.bf16.msra.mxu0 %v3335
    %3552 = vmatpush.bf16.msra.mxu0 %v3332
    %3553 = vmatpush.bf16.msra.mxu0 %v3329
    %3554 = vmatpush.bf16.msra.mxu0 %v3326
    %3555 = vmatpush.bf16.msra.mxu0 %v3323
    %3556 = vmatpush.bf16.msra.mxu0 %v3320
    %3557 = vmatmul.bf16.gmra.mxu0 %v2729
    %v3558 = vpop.f32.mrf.mxu0
    %v3559 = vadd.f32 %v3546, %v3558
    %v3560 = vpop.f32.mrf.mxu0
    %3561 = vdwg.mxu0
    %3562 = vmatpush.bf16.msra.mxu0 %v3365
    %3563 = vmatpush.bf16.msra.mxu0 %v3362
    %3564 = vmatpush.bf16.msra.mxu0 %v3359
    %3565 = vmatpush.bf16.msra.mxu0 %v3356
    %3566 = vmatpush.bf16.msra.mxu0 %v3353
    %3567 = vmatpush.bf16.msra.mxu0 %v3350
    %3568 = vmatpush.bf16.msra.mxu0 %v3347
    %3569 = vmatpush.bf16.msra.mxu0 %v3344
    %3570 = vmatmul.bf16.gmra.mxu0 %v2730
    %v3571 = vpop.f32.mrf.mxu0
    %v3572 = vadd.f32 %v3559, %v3571
    %v3573 = vpop.f32.mrf.mxu0
    %3574 = vdwg.mxu0
    %3575 = vmatpush.bf16.msra.mxu0 %v3389
    %3576 = vmatpush.bf16.msra.mxu0 %v3386
    %3577 = vmatpush.bf16.msra.mxu0 %v3383
    %3578 = vmatpush.bf16.msra.mxu0 %v3380
    %3579 = vmatpush.bf16.msra.mxu0 %v3377
    %3580 = vmatpush.bf16.msra.mxu0 %v3374
    %3581 = vmatpush.bf16.msra.mxu0 %v3371
    %3582 = vmatpush.bf16.msra.mxu0 %v3368
    %3583 = vmatmul.bf16.gmra.mxu0 %v2731
    %v3584 = vpop.f32.mrf.mxu0
    %v3585 = vadd.f32 %v3572, %v3584
    %v3586 = vpop.f32.mrf.mxu0
    %3587 = vdwg.mxu0
    %3588 = vmatpush.bf16.msra.mxu0 %v3413
    %3589 = vmatpush.bf16.msra.mxu0 %v3410
    %3590 = vmatpush.bf16.msra.mxu0 %v3407
    %3591 = vmatpush.bf16.msra.mxu0 %v3404
    %3592 = vmatpush.bf16.msra.mxu0 %v3401
    %3593 = vmatpush.bf16.msra.mxu0 %v3398
    %3594 = vmatpush.bf16.msra.mxu0 %v3395
    %3595 = vmatpush.bf16.msra.mxu0 %v3392
    %3596 = vmatmul.bf16.gmra.mxu0 %v2732
    %v3597 = vpop.f32.mrf.mxu0
    %v3598 = vadd.f32 %v3585, %v3597
    %v3599 = vpop.f32.mrf.mxu0
    %3600 = vdwg.mxu0
    %3601 = vmatpush.bf16.msra.mxu0 %v3318
    %3602 = vmatpush.bf16.msra.mxu0 %v3315
    %3603 = vmatpush.bf16.msra.mxu0 %v3312
    %3604 = vmatpush.bf16.msra.mxu0 %v3309
    %3605 = vmatpush.bf16.msra.mxu0 %v3306
    %3606 = vmatpush.bf16.msra.mxu0 %v3303
    %3607 = vmatpush.bf16.msra.mxu0 %v3300
    %3608 = vmatpush.bf16.msra.mxu0 %v3297
    %3609 = vmatmul.bf16.gmra.mxu0 %v2728
    %v3610 = vpop.f32.mrf.mxu0
    %v3611 = vadd.f32 %v2894, %v3610
    %v3612 = vpop.f32.mrf.mxu0
    %3613 = vdwg.mxu0
    %3614 = vmatpush.bf16.msra.mxu0 %v3342
    %3615 = vmatpush.bf16.msra.mxu0 %v3339
    %3616 = vmatpush.bf16.msra.mxu0 %v3336
    %3617 = vmatpush.bf16.msra.mxu0 %v3333
    %3618 = vmatpush.bf16.msra.mxu0 %v3330
    %3619 = vmatpush.bf16.msra.mxu0 %v3327
    %3620 = vmatpush.bf16.msra.mxu0 %v3324
    %3621 = vmatpush.bf16.msra.mxu0 %v3321
    %3622 = vmatmul.bf16.gmra.mxu0 %v2729
    %v3623 = vpop.f32.mrf.mxu0
    %v3624 = vadd.f32 %v3611, %v3623
    %v3625 = vpop.f32.mrf.mxu0
    %3626 = vdwg.mxu0
    %3627 = vmatpush.bf16.msra.mxu0 %v3366
    %3628 = vmatpush.bf16.msra.mxu0 %v3363
    %3629 = vmatpush.bf16.msra.mxu0 %v3360
    %3630 = vmatpush.bf16.msra.mxu0 %v3357
    %3631 = vmatpush.bf16.msra.mxu0 %v3354
    %3632 = vmatpush.bf16.msra.mxu0 %v3351
    %3633 = vmatpush.bf16.msra.mxu0 %v3348
    %3634 = vmatpush.bf16.msra.mxu0 %v3345
    %3635 = vmatmul.bf16.gmra.mxu0 %v2730
    %v3636 = vpop.f32.mrf.mxu0
    %v3637 = vadd.f32 %v3624, %v3636
    %v3638 = vpop.f32.mrf.mxu0
    %3639 = vdwg.mxu0
    %3640 = vmatpush.bf16.msra.mxu0 %v3390
    %3641 = vmatpush.bf16.msra.mxu0 %v3387
    %3642 = vmatpush.bf16.msra.mxu0 %v3384
    %3643 = vmatpush.bf16.msra.mxu0 %v3381
    %3644 = vmatpush.bf16.msra.mxu0 %v3378
    %3645 = vmatpush.bf16.msra.mxu0 %v3375
    %3646 = vmatpush.bf16.msra.mxu0 %v3372
    %3647 = vmatpush.bf16.msra.mxu0 %v3369
    %3648 = vmatmul.bf16.gmra.mxu0 %v2731
    %v3649 = vpop.f32.mrf.mxu0
    %v3650 = vadd.f32 %v3637, %v3649
    %v3651 = vpop.f32.mrf.mxu0
    %3652 = vdwg.mxu0
    %3653 = vmatpush.bf16.msra.mxu0 %v3414
    %3654 = vmatpush.bf16.msra.mxu0 %v3411
    %3655 = vmatpush.bf16.msra.mxu0 %v3408
    %3656 = vmatpush.bf16.msra.mxu0 %v3405
    %3657 = vmatpush.bf16.msra.mxu0 %v3402
    %3658 = vmatpush.bf16.msra.mxu0 %v3399
    %3659 = vmatpush.bf16.msra.mxu0 %v3396
    %3660 = vmatpush.bf16.msra.mxu0 %v3393
    %3661 = vmatmul.bf16.gmra.mxu0 %v2732
    %v3662 = vpop.f32.mrf.mxu0
    %v3663 = vadd.f32 %v3650, %v3662
    %v3664 = vpop.f32.mrf.mxu0
    %3665 = vdwg.mxu0
    %3666 = vmatpush.bf16.msra.mxu0 %v3319
    %3667 = vmatpush.bf16.msra.mxu0 %v3316
    %3668 = vmatpush.bf16.msra.mxu0 %v3313
    %3669 = vmatpush.bf16.msra.mxu0 %v3310
    %3670 = vmatpush.bf16.msra.mxu0 %v3307
    %3671 = vmatpush.bf16.msra.mxu0 %v3304
    %3672 = vmatpush.bf16.msra.mxu0 %v3301
    %3673 = vmatpush.bf16.msra.mxu0 %v3298
    %3674 = vmatmul.bf16.gmra.mxu0 %v2728
    %v3675 = vpop.f32.mrf.mxu0
    %v3676 = vadd.f32 %v2895, %v3675
    %v3677 = vpop.f32.mrf.mxu0
    %3678 = vdwg.mxu0
    %3679 = vmatpush.bf16.msra.mxu0 %v3343
    %3680 = vmatpush.bf16.msra.mxu0 %v3340
    %3681 = vmatpush.bf16.msra.mxu0 %v3337
    %3682 = vmatpush.bf16.msra.mxu0 %v3334
    %3683 = vmatpush.bf16.msra.mxu0 %v3331
    %3684 = vmatpush.bf16.msra.mxu0 %v3328
    %3685 = vmatpush.bf16.msra.mxu0 %v3325
    %3686 = vmatpush.bf16.msra.mxu0 %v3322
    %3687 = vmatmul.bf16.gmra.mxu0 %v2729
    %v3688 = vpop.f32.mrf.mxu0
    %v3689 = vadd.f32 %v3676, %v3688
    %v3690 = vpop.f32.mrf.mxu0
    %3691 = vdwg.mxu0
    %3692 = vmatpush.bf16.msra.mxu0 %v3367
    %3693 = vmatpush.bf16.msra.mxu0 %v3364
    %3694 = vmatpush.bf16.msra.mxu0 %v3361
    %3695 = vmatpush.bf16.msra.mxu0 %v3358
    %3696 = vmatpush.bf16.msra.mxu0 %v3355
    %3697 = vmatpush.bf16.msra.mxu0 %v3352
    %3698 = vmatpush.bf16.msra.mxu0 %v3349
    %3699 = vmatpush.bf16.msra.mxu0 %v3346
    %3700 = vmatmul.bf16.gmra.mxu0 %v2730
    %v3701 = vpop.f32.mrf.mxu0
    %v3702 = vadd.f32 %v3689, %v3701
    %v3703 = vpop.f32.mrf.mxu0
    %3704 = vdwg.mxu0
    %3705 = vmatpush.bf16.msra.mxu0 %v3391
    %3706 = vmatpush.bf16.msra.mxu0 %v3388
    %3707 = vmatpush.bf16.msra.mxu0 %v3385
    %3708 = vmatpush.bf16.msra.mxu0 %v3382
    %3709 = vmatpush.bf16.msra.mxu0 %v3379
    %3710 = vmatpush.bf16.msra.mxu0 %v3376
    %3711 = vmatpush.bf16.msra.mxu0 %v3373
    %3712 = vmatpush.bf16.msra.mxu0 %v3370
    %3713 = vmatmul.bf16.gmra.mxu0 %v2731
    %v3714 = vpop.f32.mrf.mxu0
    %v3715 = vadd.f32 %v3702, %v3714
    %v3716 = vpop.f32.mrf.mxu0
    %3717 = vdwg.mxu0
    %3718 = vmatpush.bf16.msra.mxu0 %v3415
    %3719 = vmatpush.bf16.msra.mxu0 %v3412
    %3720 = vmatpush.bf16.msra.mxu0 %v3409
    %3721 = vmatpush.bf16.msra.mxu0 %v3406
    %3722 = vmatpush.bf16.msra.mxu0 %v3403
    %3723 = vmatpush.bf16.msra.mxu0 %v3400
    %3724 = vmatpush.bf16.msra.mxu0 %v3397
    %3725 = vmatpush.bf16.msra.mxu0 %v3394
    %3726 = vmatmul.bf16.gmra.mxu0 %v2732
    %v3727 = vpop.f32.mrf.mxu0
    %v3728 = vadd.f32 %v3715, %v3727
    %v3729 = vpop.f32.mrf.mxu0
    %3730 = vdwg.mxu0
    %v3731 = vtanh.pop %v3598
    %v3732 = vtanh.pop %v3663
    %v3733 = vtanh.pop %v3728
    %v3737 = vrot.slane %v3732, 6
    %v3738 = vrot.slane %v3733, 4
    %v3739 = vsel %vm849, %v3731, %v3737
    %vm3740 = vcmask 1043456
    %v3741 = vsel %vm3740, %v3739, %v3738
    %3743 = vst [vmem:[#allocation5] sm:$0x3f] %v3741
    // Predicated region
    $region26: #{kikitori_encoder_forward.1} parent=1 // pred_check
      _
    $region27: #{kikitori_encoder_forward.1} parent=1 // pred_check_branch
      %3745 = sbr.rel (0) target = $region29
    $region28: #{kikitori_encoder_forward.1} parent=1 // pred_region
      %3747 = vsyncadd [#allocation4], 0
      %s3749 = sshll.u32 [#allocation5], 4
      %s3750 = int_to_ptr.vmem [resolvable:$true] %s3749
      %s3751 = sshll.u32 %s5, 4
      %s3752 = int_to_ptr.hbm [resolvable:$true] %s3751
      %3754 = dma.vmem_to_hbm [thread:$0]  %s3750, 96, %s3752, [#allocation4]
    $region29: #{kikitori_encoder_forward.1} parent=1 // pred_fallthru
      _
    // Predicated region
    $region30: #{kikitori_encoder_forward.1} parent=1 // pred_check
      _
    $region31: #{kikitori_encoder_forward.1} parent=1 // pred_check_branch
      %3756 = sbr.rel (0) target = $region33
    $region32: #{kikitori_encoder_forward.1} parent=1 // pred_region
      %3758 = dma.done [#allocation4], 96
    $region33: #{kikitori_encoder_forward.1} parent=1 // pred_fallthru
      _
    %3759 = vsyncpa [#allocation3], 1
    %3760 = vsyncpa [#allocation4], 1

</llo_original>
